<compile_context>
chip_gen: v7x
topology: tpu7x:2x2x1
jax: 0.10.0
libtpu: 0.0.40
codegen_flags: <defaults>
</compile_context>

<pallas_src>
import functools

import jax
import jax.numpy as jnp
from jax.experimental import pallas as pl
from jax.experimental.pallas import tpu as pltpu


# --------------------------------- helpers ----------------------------------
def _round_up(x, m):
    return (x + m - 1) // m * m


def _vmem_limit_bytes():
    """Per-generation VMEM budget: ~3/4 of physical, capped at 96 MiB.

    v5e / v6e (128 MiB physical) -> 96 MiB ; v7x (64 MiB per TC) -> 48 MiB.
    """
    cap = 128 * 1024 * 1024
    try:
        cap = int(getattr(pltpu.get_tpu_info(), 'vmem_capacity_bytes', cap))
    except Exception:    # not on a real TPU (e.g. interpret mode) -> safe default
        pass
    return int(min(cap * 3 // 4, 96 * 1024 * 1024))


def _tile_candidates(n_pad):
    """Divisors of n_pad that are sublane-friendly multiples of 8 (ascending)."""
    return [d for d in range(8, n_pad + 1, 8) if n_pad % d == 0]


def _pick_tile(n_pad, cap):
    """Largest 8-multiple divisor of n_pad <= cap, preferring >=2 grid steps (v7x)."""
    cands = [d for d in _tile_candidates(n_pad) if d <= max(cap, 8)] or [8]
    two_step = [d for d in cands if n_pad // d >= 2]
    return max(two_step) if two_step else max(cands)


def _im2col_3x3_same(x_nchw):
    """NCHW image -> (N, H*W, 9*C) patch rows in (kh, kw, c) order."""
    n, c, h, w = x_nchw.shape
    xh = jnp.transpose(x_nchw, (0, 2, 3, 1))                    # NHWC
    xp = jnp.pad(xh, ((0, 0), (1, 1), (1, 1), (0, 0)))
    cols = [xp[:, di:di + h, dj:dj + w, :] for di in range(3) for dj in range(3)]
    patches = jnp.stack(cols, axis=3)                           # (N, H, W, 9, C)
    return patches.reshape(n, h * w, 9 * c)


# ------------ encoder kernel: conv(3x3) + ReLU + GAP + fused non-BN heads ------------
def _make_encoder_kernel(*, ts, hw, f_pad, inv_hw, need_p, feat_mode):
    """One grid step = `ts` whole samples: conv-as-matmul + ReLU + global average
    pool, plus the fused cls head (test/train/p_f) and/or F.normalize (encoder)."""

    def kernel(*refs):
        it = iter(refs)
        patches_ref = next(it)          # (ts*HW, 9C)      bf16, streamed
        wf_ref = next(it)               # (9C, F_pad)      bf16, VMEM-resident
        bf_ref = next(it)               # (1, F_pad)       f32
        wc_ref = bc_ref = None
        if need_p:
            wc_ref = next(it)           # (F_pad, OUT_pad) bf16, resident
            bc_ref = next(it)           # (1, OUT_pad)     f32
        outs = list(it)

        # conv(3x3, SAME) as a single MXU matmul over the (kh, kw, c) contraction.
        y = jnp.dot(patches_ref[...], wf_ref[...],
                    preferred_element_type=jnp.float32)          # (ts*HW, F_pad)
        y = jnp.maximum(y + bf_ref[...], 0.0)

        # global average pool over each sample's HW pixels.
        feat = y.reshape(ts, hw, f_pad).sum(axis=1) * inv_hw      # (ts, F_pad) f32

        oi = 0
        if need_p:                       # cls_head_src fused into the encoder
            p = jnp.dot(feat.astype(jnp.bfloat16), wc_ref[...],
                        preferred_element_type=jnp.float32) + bc_ref[...]
            outs[oi][...] = p
            oi += 1
        if feat_mode == 'raw':
            outs[oi][...] = feat
        elif feat_mode == 'norm':        # F.normalize fused (encoder mode)
            ss = jnp.sum(feat * feat, axis=1, keepdims=True)
            outs[oi][...] = feat * jax.lax.rsqrt(jnp.maximum(ss, 1e-24))

    return kernel


# ---------------- batch-tiled Linear / BN / ReLU blocks for the pro_head -------------
def _make_head_block_kernel(*, bn_first, emit_stats, l2norm_out):
    """y = [relu(x*scale + shift)] @ w  (bf16 MXU operands, f32 accumulation),
    optionally l2-normalized, optionally emitting masked per-tile (sum, sum-of-squares)
    partials used by the two-pass BatchNorm."""

    def kernel(*refs):
        it = iter(refs)
        x_ref = next(it)
        sc_ref = sh_ref = None
        if bn_first:
            sc_ref = next(it)
            sh_ref = next(it)
        m_ref = next(it) if emit_stats else None
        w_ref = next(it)
        y_ref = next(it)
        st_ref = next(it) if emit_stats else None

        if bn_first:                     # apply previous-layer folded BN + ReLU
            xb = jnp.maximum(x_ref[...] * sc_ref[...] + sh_ref[...],
                             0.0).astype(jnp.bfloat16)
        else:
            xb = x_ref[...].astype(jnp.bfloat16)

        y = jnp.dot(xb, w_ref[...], preferred_element_type=jnp.float32)
        if l2norm_out:                   # F.normalize of the projection output
            ss = jnp.sum(y * y, axis=1, keepdims=True)
            y = y * jax.lax.rsqrt(jnp.maximum(ss, 1e-24))
        y_ref[...] = y

        if emit_stats:                   # masked partial BN stats for this batch tile
            ym = y * m_ref[...]
            s1 = jnp.sum(ym, axis=0, keepdims=True)            # (1, N)
            s2 = jnp.sum(ym * ym, axis=0, keepdims=True)       # (1, N)
            row = jax.lax.broadcasted_iota(jnp.int32, (8, y.shape[1]), 0)
            stats = jnp.where(row == 0, s1, jnp.where(row == 1, s2, 0.0))
            st_ref[...] = stats.reshape(1, 8, y.shape[1])

    return kernel


def _head_block_call(x, w, *, tb, vmem_limit, scale=None, shift=None, mask=None,
                     emit_stats=False, l2norm_out=False):
    n_pad, k_pad = x.shape
    n_out = w.shape[1]
    n_tiles = n_pad // tb
    bn_first = scale is not None

    inputs = [x]
    in_specs = [pl.BlockSpec((tb, k_pad), lambda i: (i, 0))]
    if bn_first:
        inputs += [scale, shift]
        in_specs += [pl.BlockSpec((1, k_pad), lambda i: (0, 0)),
                     pl.BlockSpec((1, k_pad), lambda i: (0, 0))]
    if emit_stats:
        inputs.append(mask)
        in_specs.append(pl.BlockSpec((tb, 1), lambda i: (i, 0)))
    inputs.append(w)
    in_specs.append(pl.BlockSpec((k_pad, n_out), lambda i: (0, 0)))   # resident weight

    out_shapes = [jax.ShapeDtypeStruct((n_pad, n_out), jnp.float32)]
    out_specs = [pl.BlockSpec((tb, n_out), lambda i: (i, 0))]
    if emit_stats:
        out_shapes.append(jax.ShapeDtypeStruct((n_tiles, 8, n_out), jnp.float32))
        out_specs.append(pl.BlockSpec((1, 8, n_out), lambda i: (i, 0, 0)))

    outs = pl.pallas_call(
        _make_head_block_kernel(bn_first=bn_first, emit_stats=emit_stats,
                                l2norm_out=l2norm_out),
        out_shape=tuple(out_shapes),
        grid=(n_tiles,),
        in_specs=in_specs,
        out_specs=tuple(out_specs),
        compiler_params=pltpu.CompilerParams(
            dimension_semantics=("parallel",),
            vmem_limit_bytes=vmem_limit),
    )(*inputs)
    if not isinstance(outs, (tuple, list)):
        outs = (outs,)
    return (outs[0], outs[1]) if emit_stats else outs[0]


def _bn_fold(stats, gamma_pad, beta_pad, n_true, eps=1e-5):
    """Fold BatchNorm batch statistics (from per-tile partial sums) into per-column
    scale/shift so that  y*scale + shift == (y - mu)/sqrt(var + eps)*gamma + beta."""
    inv_n = 1.0 / float(n_true)
    mu = stats[:, 0, :].sum(axis=0) * inv_n
    var = jnp.maximum(stats[:, 1, :].sum(axis=0) * inv_n - mu * mu, 0.0)
    scale = gamma_pad * jax.lax.rsqrt(var + eps)
    shift = beta_pad - mu * scale
    return scale.reshape(1, -1), shift.reshape(1, -1)


# ------------------------------------ params ----------------------------------------
def init_params(key, imdim, n_features, projection_dim, output_dim):
    ks = jax.random.split(key, 6)

    def rnd(k, shape, fan_in):
        return jax.random.normal(k, shape, jnp.float32) / jnp.sqrt(jnp.float32(fan_in))

    f = n_features
    return {
        # synthetic encoder (stand-in for the injected ResNet with fc=Identity)
        'conv_w': rnd(ks[0], (f, imdim, 3, 3), 9 * imdim),
        'conv_b': jnp.zeros((f,), jnp.float32),
        # cls_head_src = nn.Linear(n_features, output_dim)
        'cls_w': rnd(ks[1], (output_dim, f), f),
        'cls_b': rnd(ks[2], (output_dim,), f),
        # pro_head: Linear(no bias) -> BN -> ReLU -> Linear(no bias) -> BN -> ReLU -> Linear
        'w1': rnd(ks[3], (2 * f, f), f),
        'g1': jnp.ones((2 * f,), jnp.float32),
        'b1': jnp.zeros((2 * f,), jnp.float32),
        'w2': rnd(ks[4], (2 * f, 2 * f), 2 * f),
        'g2': jnp.ones((2 * f,), jnp.float32),
        'b2': jnp.zeros((2 * f,), jnp.float32),
        'w3': rnd(ks[5], (projection_dim, 2 * f), 2 * f),
    }


# ------------------------------------ forward ---------------------------------------
@functools.partial(jax.jit, static_argnames=('mode',))
def convnet_forward(x, params, mode='test'):
    if mode not in ('test', 'train', 'p_f', 'encoder'):
        raise ValueError(f"unknown mode {mode!r}")

    n, c, h, w = x.shape
    hw = h * w
    kdim = 9 * c
    f = params['conv_w'].shape[0]
    out_dim = params['cls_w'].shape[0]
    proj = params['w3'].shape[0]
    h1dim = params['w1'].shape[0]

    # lane/sublane-dense padded sizes
    f_pad = _round_up(f, 128)
    out_pad = _round_up(out_dim, 128)
    proj_pad = _round_up(proj, 128)
    h1_pad = _round_up(h1dim, 128)
    n_pad = _round_up(n, 8)

    vmem_limit = _vmem_limit_bytes()
    budget = vmem_limit // 2             # headroom for double buffering / scratch

    need_p = mode in ('test', 'train', 'p_f')
    feat_mode = {'test': 'none', 'train': 'raw', 'p_f': 'raw', 'encoder': 'norm'}[mode]

    # ----- encoder tile: whole samples per block, as many as fit the VMEM budget -----
    per_sample = hw * (kdim * 2 * 2 + f_pad * 4)       # patches (bf16, 2 bufs) + f32 acts
    resident = (kdim * f_pad + f_pad * out_pad) * 2 * 2 + (f_pad + out_pad) * 4 * 2
    ts = _pick_tile(n_pad, min(256, max(budget - resident, per_sample) // per_sample))

    patches = _im2col_3x3_same(x)
    patches = jnp.pad(patches, ((0, n_pad - n), (0, 0), (0, 0)))
    patches2d = patches.reshape(n_pad * hw, kdim).astype(jnp.bfloat16)

    wf = jnp.transpose(params['conv_w'], (2, 3, 1, 0)).reshape(kdim, f)
    wf = jnp.pad(wf, ((0, 0), (0, f_pad - f))).astype(jnp.bfloat16)
    bf = jnp.pad(params['conv_b'], (0, f_pad - f)).reshape(1, f_pad)

    enc_inputs = [patches2d, wf, bf]
    enc_in_specs = [
        pl.BlockSpec((ts * hw, kdim), lambda i: (i, 0)),      # streamed patch rows
        pl.BlockSpec((kdim, f_pad), lambda i: (0, 0)),        # resident conv weight
        pl.BlockSpec((1, f_pad), lambda i: (0, 0)),           # resident conv bias
    ]
    enc_out_shapes, enc_out_specs = [], []
    if need_p:
        wc = jnp.pad(params['cls_w'].T,
                     ((0, f_pad - f), (0, out_pad - out_dim))).astype(jnp.bfloat16)
        bc = jnp.pad(params['cls_b'], (0, out_pad - out_dim)).reshape(1, out_pad)
        enc_inputs += [wc, bc]
        enc_in_specs += [pl.BlockSpec((f_pad, out_pad), lambda i: (0, 0)),
                         pl.BlockSpec((1, out_pad), lambda i: (0, 0))]
        enc_out_shapes.append(jax.ShapeDtypeStruct((n_pad, out_pad), jnp.float32))
        enc_out_specs.append(pl.BlockSpec((ts, out_pad), lambda i: (i, 0)))
    if feat_mode != 'none':
        enc_out_shapes.append(jax.ShapeDtypeStruct((n_pad, f_pad), jnp.float32))
        enc_out_specs.append(pl.BlockSpec((ts, f_pad), lambda i: (i, 0)))

    enc_outs = pl.pallas_call(
        _make_encoder_kernel(ts=ts, hw=hw, f_pad=f_pad, inv_hw=1.0 / float(hw),
                             need_p=need_p, feat_mode=feat_mode),
        out_shape=tuple(enc_out_shapes),
        grid=(n_pad // ts,),
        in_specs=enc_in_specs,
        out_specs=tuple(enc_out_specs),
        compiler_params=pltpu.CompilerParams(
            dimension_semantics=("parallel",),
            vmem_limit_bytes=vmem_limit),
    )(*enc_inputs)
    if not isinstance(enc_outs, (tuple, list)):
        enc_outs = (enc_outs,)

    if mode == 'test':
        return enc_outs[0][:n, :out_dim]
    if mode == 'encoder':
        return enc_outs[0][:n, :f]
    if mode == 'p_f':
        return enc_outs[0][:n, :out_dim], enc_outs[1][:n, :f]

    # ------------------- mode == 'train': batch-tiled pro_head ----------------------
    p_pad, feat = enc_outs

    # batch-tile size for the head matmuls (largest weight stays VMEM-resident).
    w_res = h1_pad * h1_pad * 2 * 2
    row_bytes = 2 * h1_pad * 4 * 2
    tb = _pick_tile(n_pad, min(512, max(budget - w_res, 8 * row_bytes) // row_bytes))

    # mask of real (un-padded) batch rows: padded rows carry relu(conv_b) features
    # through the matmuls but are excluded from BN statistics and sliced off at the end.
    mask = (jnp.arange(n_pad) < n).astype(jnp.float32).reshape(n_pad, 1)

    w1 = jnp.pad(params['w1'].T, ((0, f_pad - f), (0, h1_pad - h1dim))).astype(jnp.bfloat16)
    g1 = jnp.pad(params['g1'], (0, h1_pad - h1dim))
    b1 = jnp.pad(params['b1'], (0, h1_pad - h1dim))
    w2 = jnp.pad(params['w2'].T, ((0, h1_pad - h1dim), (0, h1_pad - h1dim))).astype(jnp.bfloat16)
    g2 = jnp.pad(params['g2'], (0, h1_pad - h1dim))
    b2 = jnp.pad(params['b2'], (0, h1_pad - h1dim))
    w3 = jnp.pad(params['w3'].T, ((0, h1_pad - h1dim), (0, proj_pad - proj))).astype(jnp.bfloat16)

    # Linear1 (+ BN1 partial stats) -> fold -> BN1+ReLU+Linear2 (+ BN2 partial stats)
    # -> fold -> BN2+ReLU+Linear3 + F.normalize.   Two-pass BN, batch-tiled/pipelined.
    h1_pre, stats1 = _head_block_call(feat, w1, tb=tb, vmem_limit=vmem_limit,
                                      mask=mask, emit_stats=True)
    s1, t1 = _bn_fold(stats1, g1, b1, n)
    h2_pre, stats2 = _head_block_call(h1_pre, w2, tb=tb, vmem_limit=vmem_limit,
                                      scale=s1, shift=t1, mask=mask, emit_stats=True)
    s2, t2 = _bn_fold(stats2, g2, b2, n)
    z = _head_block_call(h2_pre, w3, tb=tb, vmem_limit=vmem_limit,
                         scale=s2, shift=t2, l2norm_out=True)

    return p_pad[:n, :out_dim], z[:n, :proj]


# ------------------------------ pure-JAX reference ----------------------------------
def convnet_reference(x, params, bf16_operands=True):
    """Reference forward.  With bf16_operands=True the matmul operands are rounded to
    bfloat16 (f32 accumulation), mirroring the MXU numerics of the kernel."""
    hp = jax.lax.Precision.HIGHEST
    n, c, h, w = x.shape
    f = params['conv_w'].shape[0]
    hw = h * w

    def cast(a):
        return a.astype(jnp.bfloat16).astype(jnp.float32) if bf16_operands else a

    patches = _im2col_3x3_same(x).reshape(n * hw, 9 * c)
    wf = jnp.transpose(params['conv_w'], (2, 3, 1, 0)).reshape(9 * c, f)
    y = jnp.maximum(jnp.dot(cast(patches), cast(wf), precision=hp)
                    + params['conv_b'][None, :], 0.0)
    feat = y.reshape(n, hw, f).mean(axis=1)

    p = jnp.dot(cast(feat), cast(params['cls_w'].T), precision=hp) + params['cls_b'][None, :]

    def bn(hh, g, b):
        mu = hh.mean(0, keepdims=True)
        var = ((hh - mu) ** 2).mean(0, keepdims=True)
        return (hh - mu) / jnp.sqrt(var + 1e-5) * g[None, :] + b[None, :]

    h1 = jnp.maximum(bn(jnp.dot(cast(feat), cast(params['w1'].T), precision=hp),
                        params['g1'], params['b1']), 0.0)
    h2 = jnp.maximum(bn(jnp.dot(cast(h1), cast(params['w2'].T), precision=hp),
                        params['g2'], params['b2']), 0.0)
    z = jnp.dot(cast(h2), cast(params['w3'].T), precision=hp)
    z = z / jnp.maximum(jnp.linalg.norm(z, axis=1, keepdims=True), 1e-12)
    feat_n = feat / jnp.maximum(jnp.linalg.norm(feat, axis=1, keepdims=True), 1e-12)
    return p, z, feat, feat_n


if __name__ == "__main__":
    key = jax.random.PRNGKey(0)
    kx, kp = jax.random.split(key)

    N, C, H, W = 2, 3, 16, 16
    n_features, projection_dim, output_dim = 32, 16, 10

    x = jax.random.normal(kx, (N, C, H, W), jnp.float32)
    params = init_params(kp, C, n_features, projection_dim, output_dim)

    # mode='train' exercises encoder + fused cls head + batch-tiled pro_head.
    p, z = convnet_forward(x, params, mode='train')
    jax.block_until_ready((p, z))

    # Tight check against a reference that mirrors the kernel's bf16-operand numerics.
    p_ref, z_ref, feat_ref, featn_ref = convnet_reference(x, params, bf16_operands=True)
    assert p.shape == (N, output_dim) and z.shape == (N, projection_dim)
    assert bool(jnp.all(jnp.isfinite(p))) and bool(jnp.all(jnp.isfinite(z)))
    assert bool(jnp.allclose(p, p_ref, atol=2e-3, rtol=2e-3)), "cls head mismatch"
    assert bool(jnp.allclose(z, z_ref, atol=5e-3, rtol=5e-3)), "pro head mismatch"

    # f32 sanity check on the classifier head and features (not BN-amplified).
    # The projection head z is intentionally NOT compared to the full-f32 reference:
    # batch-statistic BatchNorm at batch=2 legitimately amplifies bf16 operand rounding
    # (a property of the math, not a kernel bug); z is validated against the
    # bf16-mirroring reference above instead.
    p32, _, feat32, _ = convnet_reference(x, params, bf16_operands=False)
    assert bool(jnp.allclose(p, p32, atol=5e-2, rtol=5e-2)), "cls head f32 sanity mismatch"

    # Exercise the remaining mode-specialized kernels.
    p_test = convnet_forward(x, params, mode='test')
    p_pf, feat = convnet_forward(x, params, mode='p_f')
    feat_n = convnet_forward(x, params, mode='encoder')
    jax.block_until_ready((p_test, p_pf, feat, feat_n))
    assert feat.shape == (N, n_features) and feat_n.shape == (N, n_features)
    assert bool(jnp.allclose(p_test, p_ref, atol=2e-3, rtol=2e-3)), "test-mode p mismatch"
    assert bool(jnp.allclose(p_pf, p_ref, atol=2e-3, rtol=2e-3)), "p_f-mode p mismatch"
    assert bool(jnp.allclose(feat, feat_ref, atol=2e-3, rtol=2e-3)), "encoder feat mismatch"
    assert bool(jnp.allclose(feat_n, featn_ref, atol=2e-3, rtol=2e-3)), "normalized feat mismatch"
    assert bool(jnp.allclose(feat, feat32, atol=5e-2, rtol=5e-2)), "feat f32 sanity mismatch"

    print("KERNEL_OK")
</pallas_src>

<mosaic_0001>
module attributes {stable_mosaic.version = 11 : i64} {
  func.func @kernel(%arg0: i32, %arg1: memref<8x128xf32, #tpu.memory_space<vmem>>, %arg2: memref<8x1xf32, #tpu.memory_space<vmem>>, %arg3: memref<128x128xbf16, #tpu.memory_space<vmem>>, %arg4: memref<8x128xf32, #tpu.memory_space<vmem>>, %arg5: memref<1x8x128xf32, #tpu.memory_space<vmem>>) attributes {dimension_semantics = [#tpu.dimension_semantics<parallel>], iteration_bounds = array<i64: 1>, scalar_prefetch = 0 : i64, scratch_operands = 0 : i64, tpu.core_type = #tpu.core_type<tc>, window_params = [{transform_indices = @transform_0, window_bounds = array<i64: 8, 128>}, {transform_indices = @transform_1, window_bounds = array<i64: 8, 1>}, {pipeline_mode = #tpu.pipeline_mode<synchronous>, transform_indices = @transform_2, window_bounds = array<i64: 128, 128>}, {transform_indices = @transform_3, window_bounds = array<i64: 8, 128>}, {transform_indices = @transform_4, window_bounds = array<i64: 1, 8, 128>}]} {
    %c0 = arith.constant 0 : index
    %c0_0 = arith.constant 0 : index
    %0 = vector.load %arg1[%c0, %c0_0] : memref<8x128xf32, #tpu.memory_space<vmem>>, vector<8x128xf32>
    %1 = arith.truncf %0 : vector<8x128xf32> to vector<8x128xbf16>
    %c0_1 = arith.constant 0 : index
    %c0_2 = arith.constant 0 : index
    %2 = vector.load %arg3[%c0_1, %c0_2] : memref<128x128xbf16, #tpu.memory_space<vmem>>, vector<128x128xbf16>
    %cst = arith.constant dense<0.000000e+00> : vector<8x128xf32>
    %3 = tpu.matmul %1, %2, %cst {dimension_numbers = #tpu.dot_dimension_numbers<[1], [0], [0], [1], [0, 0, 1, 1], [], []>} : vector<8x128xbf16>, vector<128x128xbf16>, vector<8x128xf32> -> vector<8x128xf32>
    %c0_3 = arith.constant 0 : index
    %c0_4 = arith.constant 0 : index
    %4 = vector.load %arg4[%c0_3, %c0_4] : memref<8x128xf32, #tpu.memory_space<vmem>>, vector<8x128xf32>
    tpu.vector_store %arg4[%c0_3, %c0_4], %3 {strides = array<i32>} : memref<8x128xf32, #tpu.memory_space<vmem>>, vector<8x128xf32>,
    %c0_5 = arith.constant 0 : index
    %c0_6 = arith.constant 0 : index
    %5 = vector.load %arg2[%c0_5, %c0_6] : memref<8x1xf32, #tpu.memory_space<vmem>>, vector<8x1xf32>
    %6 = vector.broadcast %5 : vector<8x1xf32> to vector<8x128xf32>
    %7 = arith.mulf %3, %6 : vector<8x128xf32>
    %cst_7 = arith.constant dense<0.000000e+00> : vector<128xf32>
    %8 = vector.multi_reduction <add>, %7, %cst_7 [0] : vector<8x128xf32> to vector<128xf32>
    %9 = vector.shape_cast %8 : vector<128xf32> to vector<1x128xf32>
    %10 = arith.mulf %7, %7 : vector<8x128xf32>
    %cst_8 = arith.constant dense<0.000000e+00> : vector<128xf32>
    %11 = vector.multi_reduction <add>, %10, %cst_8 [0] : vector<8x128xf32> to vector<128xf32>
    %12 = vector.shape_cast %11 : vector<128xf32> to vector<1x128xf32>
    %13 = tpu.iota {dimensions = array<i32: 0>} : vector<8x128xi32>
    %c0_i32 = arith.constant 0 : i32
    %14 = vector.broadcast %c0_i32 : i32 to vector<8x128xi32>
    %15 = arith.cmpi eq, %13, %14 : vector<8x128xi32>
    %c1_i32 = arith.constant 1 : i32
    %16 = vector.broadcast %c1_i32 : i32 to vector<8x128xi32>
    %17 = arith.cmpi eq, %13, %16 : vector<8x128xi32>
    %cst_9 = arith.constant 0.000000e+00 : f32
    %18 = vector.shape_cast %12 : vector<1x128xf32> to vector<1x128xf32>
    %19 = vector.broadcast %18 : vector<1x128xf32> to vector<8x128xf32>
    %20 = vector.broadcast %cst_9 : f32 to vector<8x128xf32>
    %21 = arith.select %17, %19, %20 : vector<8x128xi1>, vector<8x128xf32>
    %22 = vector.shape_cast %9 : vector<1x128xf32> to vector<1x128xf32>
    %23 = vector.broadcast %22 : vector<1x128xf32> to vector<8x128xf32>
    %24 = arith.select %15, %23, %21 : vector<8x128xi1>, vector<8x128xf32>
    %25 = vector.shape_cast %24 : vector<8x128xf32> to vector<1x8x128xf32>
    %c0_10 = arith.constant 0 : index
    %c0_11 = arith.constant 0 : index
    %c0_12 = arith.constant 0 : index
    %26 = vector.load %arg5[%c0_10, %c0_11, %c0_12] : memref<1x8x128xf32, #tpu.memory_space<vmem>>, vector<1x8x128xf32>
    tpu.vector_store %arg5[%c0_10, %c0_11, %c0_12], %25 {strides = array<i32>} : memref<1x8x128xf32, #tpu.memory_space<vmem>>, vector<1x8x128xf32>,
    return
  }
  func.func @transform_0(%arg0: i32) -> (i32, i32) {
    %c0_i32 = arith.constant 0 : i32
    %c0_i32_0 = arith.constant 0 : i32
    return %arg0, %c0_i32 : i32, i32
  }
  func.func @transform_1(%arg0: i32) -> (i32, i32) {
    %c0_i32 = arith.constant 0 : i32
    %c0_i32_0 = arith.constant 0 : i32
    return %arg0, %c0_i32 : i32, i32
  }
  func.func @transform_2(%arg0: i32) -> (i32, i32) {
    %c0_i32 = arith.constant 0 : i32
    %c0_i32_0 = arith.constant 0 : i32
    %c0_i32_1 = arith.constant 0 : i32
    return %c0_i32, %c0_i32_0 : i32, i32
  }
  func.func @transform_3(%arg0: i32) -> (i32, i32) {
    %c0_i32 = arith.constant 0 : i32
    %c0_i32_0 = arith.constant 0 : i32
    return %arg0, %c0_i32 : i32, i32
  }
  func.func @transform_4(%arg0: i32) -> (i32, i32, i32) {
    %c0_i32 = arith.constant 0 : i32
    %c0_i32_0 = arith.constant 0 : i32
    %c0_i32_1 = arith.constant 0 : i32
    return %arg0, %c0_i32, %c0_i32_0 : i32, i32, i32
  }
}

module attributes {stable_mosaic.version = 11 : i64} {
  func.func @kernel(%arg0: i32, %arg1: memref<2048x27xbf16, #tpu.memory_space<vmem>>, %arg2: memref<27x128xbf16, #tpu.memory_space<vmem>>, %arg3: memref<1x128xf32, #tpu.memory_space<vmem>>, %arg4: memref<128x128xbf16, #tpu.memory_space<vmem>>, %arg5: memref<1x128xf32, #tpu.memory_space<vmem>>, %arg6: memref<8x128xf32, #tpu.memory_space<vmem>>, %arg7: memref<8x128xf32, #tpu.memory_space<vmem>>) attributes {dimension_semantics = [#tpu.dimension_semantics<parallel>], iteration_bounds = array<i64: 1>, scalar_prefetch = 0 : i64, scratch_operands = 0 : i64, tpu.core_type = #tpu.core_type<tc>, window_params = [{transform_indices = @transform_0, window_bounds = array<i64: 2048, 27>}, {pipeline_mode = #tpu.pipeline_mode<synchronous>, transform_indices = @transform_1, window_bounds = array<i64: 27, 128>}, {pipeline_mode = #tpu.pipeline_mode<synchronous>, transform_indices = @transform_2, window_bounds = array<i64: 1, 128>}, {pipeline_mode = #tpu.pipeline_mode<synchronous>, transform_indices = @transform_3, window_bounds = array<i64: 128, 128>}, {pipeline_mode = #tpu.pipeline_mode<synchronous>, transform_indices = @transform_4, window_bounds = array<i64: 1, 128>}, {transform_indices = @transform_5, window_bounds = array<i64: 8, 128>}, {transform_indices = @transform_6, window_bounds = array<i64: 8, 128>}]} {
    %c0 = arith.constant 0 : index
    %c0_0 = arith.constant 0 : index
    %0 = vector.load %arg1[%c0, %c0_0] : memref<2048x27xbf16, #tpu.memory_space<vmem>>, vector<2048x27xbf16>
    %c0_1 = arith.constant 0 : index
    %c0_2 = arith.constant 0 : index
    %1 = vector.load %arg2[%c0_1, %c0_2] : memref<27x128xbf16, #tpu.memory_space<vmem>>, vector<27x128xbf16>
    %cst = arith.constant dense<0.000000e+00> : vector<2048x128xf32>
    %2 = tpu.matmul %0, %1, %cst {dimension_numbers = #tpu.dot_dimension_numbers<[1], [0], [0], [1], [0, 0, 1, 1], [], []>} : vector<2048x27xbf16>, vector<27x128xbf16>, vector<2048x128xf32> -> vector<2048x128xf32>
    %c0_3 = arith.constant 0 : index
    %c0_4 = arith.constant 0 : index
    %3 = vector.load %arg3[%c0_3, %c0_4] : memref<1x128xf32, #tpu.memory_space<vmem>>, vector<1x128xf32>
    %4 = vector.broadcast %3 : vector<1x128xf32> to vector<2048x128xf32>
    %5 = arith.addf %2, %4 : vector<2048x128xf32>
    %cst_5 = arith.constant 0.000000e+00 : f32
    %6 = vector.broadcast %cst_5 : f32 to vector<2048x128xf32>
    %7 = arith.maximumf %5, %6 : vector<2048x128xf32>
    %8 = vector.shape_cast %7 : vector<2048x128xf32> to vector<8x256x128xf32>
    %cst_6 = arith.constant dense<0.000000e+00> : vector<8x128xf32>
    %9 = vector.multi_reduction <add>, %8, %cst_6 [1] : vector<8x256x128xf32> to vector<8x128xf32>
    %cst_7 = arith.constant 3.906250e-03 : f32
    %10 = vector.broadcast %cst_7 : f32 to vector<8x128xf32>
    %11 = arith.mulf %9, %10 : vector<8x128xf32>
    %12 = arith.truncf %11 : vector<8x128xf32> to vector<8x128xbf16>
    %c0_8 = arith.constant 0 : index
    %c0_9 = arith.constant 0 : index
    %13 = vector.load %arg4[%c0_8, %c0_9] : memref<128x128xbf16, #tpu.memory_space<vmem>>, vector<128x128xbf16>
    %cst_10 = arith.constant dense<0.000000e+00> : vector<8x128xf32>
    %14 = tpu.matmul %12, %13, %cst_10 {dimension_numbers = #tpu.dot_dimension_numbers<[1], [0], [0], [1], [0, 0, 1, 1], [], []>} : vector<8x128xbf16>, vector<128x128xbf16>, vector<8x128xf32> -> vector<8x128xf32>
    %c0_11 = arith.constant 0 : index
    %c0_12 = arith.constant 0 : index
    %15 = vector.load %arg5[%c0_11, %c0_12] : memref<1x128xf32, #tpu.memory_space<vmem>>, vector<1x128xf32>
    %16 = vector.broadcast %15 : vector<1x128xf32> to vector<8x128xf32>
    %17 = arith.addf %14, %16 : vector<8x128xf32>
    %c0_13 = arith.constant 0 : index
    %c0_14 = arith.constant 0 : index
    %18 = vector.load %arg6[%c0_13, %c0_14] : memref<8x128xf32, #tpu.memory_space<vmem>>, vector<8x128xf32>
    tpu.vector_store %arg6[%c0_13, %c0_14], %17 {strides = array<i32>} : memref<8x128xf32, #tpu.memory_space<vmem>>, vector<8x128xf32>,
    %c0_15 = arith.constant 0 : index
    %c0_16 = arith.constant 0 : index
    %19 = vector.load %arg7[%c0_15, %c0_16] : memref<8x128xf32, #tpu.memory_space<vmem>>, vector<8x128xf32>
    tpu.vector_store %arg7[%c0_15, %c0_16], %11 {strides = array<i32>} : memref<8x128xf32, #tpu.memory_space<vmem>>, vector<8x128xf32>,
    return
  }
  func.func @transform_0(%arg0: i32) -> (i32, i32) {
    %c0_i32 = arith.constant 0 : i32
    %c0_i32_0 = arith.constant 0 : i32
    return %arg0, %c0_i32 : i32, i32
  }
  func.func @transform_1(%arg0: i32) -> (i32, i32) {
    %c0_i32 = arith.constant 0 : i32
    %c0_i32_0 = arith.constant 0 : i32
    %c0_i32_1 = arith.constant 0 : i32
    return %c0_i32, %c0_i32_0 : i32, i32
  }
  func.func @transform_2(%arg0: i32) -> (i32, i32) {
    %c0_i32 = arith.constant 0 : i32
    %c0_i32_0 = arith.constant 0 : i32
    %c0_i32_1 = arith.constant 0 : i32
    return %c0_i32, %c0_i32_0 : i32, i32
  }
  func.func @transform_3(%arg0: i32) -> (i32, i32) {
    %c0_i32 = arith.constant 0 : i32
    %c0_i32_0 = arith.constant 0 : i32
    %c0_i32_1 = arith.constant 0 : i32
    return %c0_i32, %c0_i32_0 : i32, i32
  }
  func.func @transform_4(%arg0: i32) -> (i32, i32) {
    %c0_i32 = arith.constant 0 : i32
    %c0_i32_0 = arith.constant 0 : i32
    %c0_i32_1 = arith.constant 0 : i32
    return %c0_i32, %c0_i32_0 : i32, i32
  }
  func.func @transform_5(%arg0: i32) -> (i32, i32) {
    %c0_i32 = arith.constant 0 : i32
    %c0_i32_0 = arith.constant 0 : i32
    return %arg0, %c0_i32 : i32, i32
  }
  func.func @transform_6(%arg0: i32) -> (i32, i32) {
    %c0_i32 = arith.constant 0 : i32
    %c0_i32_0 = arith.constant 0 : i32
    return %arg0, %c0_i32 : i32, i32
  }
}

module attributes {stable_mosaic.version = 11 : i64} {
  func.func @kernel(%arg0: i32, %arg1: memref<8x128xf32, #tpu.memory_space<vmem>>, %arg2: memref<1x128xf32, #tpu.memory_space<vmem>>, %arg3: memref<1x128xf32, #tpu.memory_space<vmem>>, %arg4: memref<8x1xf32, #tpu.memory_space<vmem>>, %arg5: memref<128x128xbf16, #tpu.memory_space<vmem>>, %arg6: memref<8x128xf32, #tpu.memory_space<vmem>>, %arg7: memref<1x8x128xf32, #tpu.memory_space<vmem>>) attributes {dimension_semantics = [#tpu.dimension_semantics<parallel>], iteration_bounds = array<i64: 1>, scalar_prefetch = 0 : i64, scratch_operands = 0 : i64, tpu.core_type = #tpu.core_type<tc>, window_params = [{transform_indices = @transform_0, window_bounds = array<i64: 8, 128>}, {pipeline_mode = #tpu.pipeline_mode<synchronous>, transform_indices = @transform_1, window_bounds = array<i64: 1, 128>}, {pipeline_mode = #tpu.pipeline_mode<synchronous>, transform_indices = @transform_2, window_bounds = array<i64: 1, 128>}, {transform_indices = @transform_3, window_bounds = array<i64: 8, 1>}, {pipeline_mode = #tpu.pipeline_mode<synchronous>, transform_indices = @transform_4, window_bounds = array<i64: 128, 128>}, {transform_indices = @transform_5, window_bounds = array<i64: 8, 128>}, {transform_indices = @transform_6, window_bounds = array<i64: 1, 8, 128>}]} {
    %c0 = arith.constant 0 : index
    %c0_0 = arith.constant 0 : index
    %0 = vector.load %arg1[%c0, %c0_0] : memref<8x128xf32, #tpu.memory_space<vmem>>, vector<8x128xf32>
    %c0_1 = arith.constant 0 : index
    %c0_2 = arith.constant 0 : index
    %1 = vector.load %arg2[%c0_1, %c0_2] : memref<1x128xf32, #tpu.memory_space<vmem>>, vector<1x128xf32>
    %2 = vector.broadcast %1 : vector<1x128xf32> to vector<8x128xf32>
    %3 = arith.mulf %0, %2 : vector<8x128xf32>
    %c0_3 = arith.constant 0 : index
    %c0_4 = arith.constant 0 : index
    %4 = vector.load %arg3[%c0_3, %c0_4] : memref<1x128xf32, #tpu.memory_space<vmem>>, vector<1x128xf32>
    %5 = vector.broadcast %4 : vector<1x128xf32> to vector<8x128xf32>
    %6 = arith.addf %3, %5 : vector<8x128xf32>
    %cst = arith.constant 0.000000e+00 : f32
    %7 = vector.broadcast %cst : f32 to vector<8x128xf32>
    %8 = arith.maximumf %6, %7 : vector<8x128xf32>
    %9 = arith.truncf %8 : vector<8x128xf32> to vector<8x128xbf16>
    %c0_5 = arith.constant 0 : index
    %c0_6 = arith.constant 0 : index
    %10 = vector.load %arg5[%c0_5, %c0_6] : memref<128x128xbf16, #tpu.memory_space<vmem>>, vector<128x128xbf16>
    %cst_7 = arith.constant dense<0.000000e+00> : vector<8x128xf32>
    %11 = tpu.matmul %9, %10, %cst_7 {dimension_numbers = #tpu.dot_dimension_numbers<[1], [0], [0], [1], [0, 0, 1, 1], [], []>} : vector<8x128xbf16>, vector<128x128xbf16>, vector<8x128xf32> -> vector<8x128xf32>
    %c0_8 = arith.constant 0 : index
    %c0_9 = arith.constant 0 : index
    %12 = vector.load %arg6[%c0_8, %c0_9] : memref<8x128xf32, #tpu.memory_space<vmem>>, vector<8x128xf32>
    tpu.vector_store %arg6[%c0_8, %c0_9], %11 {strides = array<i32>} : memref<8x128xf32, #tpu.memory_space<vmem>>, vector<8x128xf32>,
    %c0_10 = arith.constant 0 : index
    %c0_11 = arith.constant 0 : index
    %13 = vector.load %arg4[%c0_10, %c0_11] : memref<8x1xf32, #tpu.memory_space<vmem>>, vector<8x1xf32>
    %14 = vector.broadcast %13 : vector<8x1xf32> to vector<8x128xf32>
    %15 = arith.mulf %11, %14 : vector<8x128xf32>
    %cst_12 = arith.constant dense<0.000000e+00> : vector<128xf32>
    %16 = vector.multi_reduction <add>, %15, %cst_12 [0] : vector<8x128xf32> to vector<128xf32>
    %17 = vector.shape_cast %16 : vector<128xf32> to vector<1x128xf32>
    %18 = arith.mulf %15, %15 : vector<8x128xf32>
    %cst_13 = arith.constant dense<0.000000e+00> : vector<128xf32>
    %19 = vector.multi_reduction <add>, %18, %cst_13 [0] : vector<8x128xf32> to vector<128xf32>
    %20 = vector.shape_cast %19 : vector<128xf32> to vector<1x128xf32>
    %21 = tpu.iota {dimensions = array<i32: 0>} : vector<8x128xi32>
    %c0_i32 = arith.constant 0 : i32
    %22 = vector.broadcast %c0_i32 : i32 to vector<8x128xi32>
    %23 = arith.cmpi eq, %21, %22 : vector<8x128xi32>
    %c1_i32 = arith.constant 1 : i32
    %24 = vector.broadcast %c1_i32 : i32 to vector<8x128xi32>
    %25 = arith.cmpi eq, %21, %24 : vector<8x128xi32>
    %cst_14 = arith.constant 0.000000e+00 : f32
    %26 = vector.shape_cast %20 : vector<1x128xf32> to vector<1x128xf32>
    %27 = vector.broadcast %26 : vector<1x128xf32> to vector<8x128xf32>
    %28 = vector.broadcast %cst_14 : f32 to vector<8x128xf32>
    %29 = arith.select %25, %27, %28 : vector<8x128xi1>, vector<8x128xf32>
    %30 = vector.shape_cast %17 : vector<1x128xf32> to vector<1x128xf32>
    %31 = vector.broadcast %30 : vector<1x128xf32> to vector<8x128xf32>
    %32 = arith.select %23, %31, %29 : vector<8x128xi1>, vector<8x128xf32>
    %33 = vector.shape_cast %32 : vector<8x128xf32> to vector<1x8x128xf32>
    %c0_15 = arith.constant 0 : index
    %c0_16 = arith.constant 0 : index
    %c0_17 = arith.constant 0 : index
    %34 = vector.load %arg7[%c0_15, %c0_16, %c0_17] : memref<1x8x128xf32, #tpu.memory_space<vmem>>, vector<1x8x128xf32>
    tpu.vector_store %arg7[%c0_15, %c0_16, %c0_17], %33 {strides = array<i32>} : memref<1x8x128xf32, #tpu.memory_space<vmem>>, vector<1x8x128xf32>,
    return
  }
  func.func @transform_0(%arg0: i32) -> (i32, i32) {
    %c0_i32 = arith.constant 0 : i32
    %c0_i32_0 = arith.constant 0 : i32
    return %arg0, %c0_i32 : i32, i32
  }
  func.func @transform_1(%arg0: i32) -> (i32, i32) {
    %c0_i32 = arith.constant 0 : i32
    %c0_i32_0 = arith.constant 0 : i32
    %c0_i32_1 = arith.constant 0 : i32
    return %c0_i32, %c0_i32_0 : i32, i32
  }
  func.func @transform_2(%arg0: i32) -> (i32, i32) {
    %c0_i32 = arith.constant 0 : i32
    %c0_i32_0 = arith.constant 0 : i32
    %c0_i32_1 = arith.constant 0 : i32
    return %c0_i32, %c0_i32_0 : i32, i32
  }
  func.func @transform_3(%arg0: i32) -> (i32, i32) {
    %c0_i32 = arith.constant 0 : i32
    %c0_i32_0 = arith.constant 0 : i32
    return %arg0, %c0_i32 : i32, i32
  }
  func.func @transform_4(%arg0: i32) -> (i32, i32) {
    %c0_i32 = arith.constant 0 : i32
    %c0_i32_0 = arith.constant 0 : i32
    %c0_i32_1 = arith.constant 0 : i32
    return %c0_i32, %c0_i32_0 : i32, i32
  }
  func.func @transform_5(%arg0: i32) -> (i32, i32) {
    %c0_i32 = arith.constant 0 : i32
    %c0_i32_0 = arith.constant 0 : i32
    return %arg0, %c0_i32 : i32, i32
  }
  func.func @transform_6(%arg0: i32) -> (i32, i32, i32) {
    %c0_i32 = arith.constant 0 : i32
    %c0_i32_0 = arith.constant 0 : i32
    %c0_i32_1 = arith.constant 0 : i32
    return %arg0, %c0_i32, %c0_i32_0 : i32, i32, i32
  }
}

module attributes {stable_mosaic.version = 11 : i64} {
  func.func @kernel(%arg0: i32, %arg1: memref<8x128xf32, #tpu.memory_space<vmem>>, %arg2: memref<1x128xf32, #tpu.memory_space<vmem>>, %arg3: memref<1x128xf32, #tpu.memory_space<vmem>>, %arg4: memref<128x128xbf16, #tpu.memory_space<vmem>>, %arg5: memref<8x128xf32, #tpu.memory_space<vmem>>) attributes {dimension_semantics = [#tpu.dimension_semantics<parallel>], iteration_bounds = array<i64: 1>, scalar_prefetch = 0 : i64, scratch_operands = 0 : i64, tpu.core_type = #tpu.core_type<tc>, window_params = [{transform_indices = @transform_0, window_bounds = array<i64: 8, 128>}, {pipeline_mode = #tpu.pipeline_mode<synchronous>, transform_indices = @transform_1, window_bounds = array<i64: 1, 128>}, {pipeline_mode = #tpu.pipeline_mode<synchronous>, transform_indices = @transform_2, window_bounds = array<i64: 1, 128>}, {pipeline_mode = #tpu.pipeline_mode<synchronous>, transform_indices = @transform_3, window_bounds = array<i64: 128, 128>}, {transform_indices = @transform_4, window_bounds = array<i64: 8, 128>}]} {
    %c0 = arith.constant 0 : index
    %c0_0 = arith.constant 0 : index
    %0 = vector.load %arg1[%c0, %c0_0] : memref<8x128xf32, #tpu.memory_space<vmem>>, vector<8x128xf32>
    %c0_1 = arith.constant 0 : index
    %c0_2 = arith.constant 0 : index
    %1 = vector.load %arg2[%c0_1, %c0_2] : memref<1x128xf32, #tpu.memory_space<vmem>>, vector<1x128xf32>
    %2 = vector.broadcast %1 : vector<1x128xf32> to vector<8x128xf32>
    %3 = arith.mulf %0, %2 : vector<8x128xf32>
    %c0_3 = arith.constant 0 : index
    %c0_4 = arith.constant 0 : index
    %4 = vector.load %arg3[%c0_3, %c0_4] : memref<1x128xf32, #tpu.memory_space<vmem>>, vector<1x128xf32>
    %5 = vector.broadcast %4 : vector<1x128xf32> to vector<8x128xf32>
    %6 = arith.addf %3, %5 : vector<8x128xf32>
    %cst = arith.constant 0.000000e+00 : f32
    %7 = vector.broadcast %cst : f32 to vector<8x128xf32>
    %8 = arith.maximumf %6, %7 : vector<8x128xf32>
    %9 = arith.truncf %8 : vector<8x128xf32> to vector<8x128xbf16>
    %c0_5 = arith.constant 0 : index
    %c0_6 = arith.constant 0 : index
    %10 = vector.load %arg4[%c0_5, %c0_6] : memref<128x128xbf16, #tpu.memory_space<vmem>>, vector<128x128xbf16>
    %cst_7 = arith.constant dense<0.000000e+00> : vector<8x128xf32>
    %11 = tpu.matmul %9, %10, %cst_7 {dimension_numbers = #tpu.dot_dimension_numbers<[1], [0], [0], [1], [0, 0, 1, 1], [], []>} : vector<8x128xbf16>, vector<128x128xbf16>, vector<8x128xf32> -> vector<8x128xf32>
    %12 = arith.mulf %11, %11 : vector<8x128xf32>
    %cst_8 = arith.constant dense<0.000000e+00> : vector<8xf32>
    %13 = vector.multi_reduction <add>, %12, %cst_8 [1] : vector<8x128xf32> to vector<8xf32>
    %14 = vector.shape_cast %13 : vector<8xf32> to vector<8x1xf32>
    %cst_9 = arith.constant 1.000000e-24 : f32
    %15 = vector.broadcast %cst_9 : f32 to vector<8x1xf32>
    %16 = arith.maximumf %14, %15 : vector<8x1xf32>
    %17 = math.rsqrt %16 : vector<8x1xf32>
    %18 = vector.broadcast %17 : vector<8x1xf32> to vector<8x128xf32>
    %19 = arith.mulf %11, %18 : vector<8x128xf32>
    %c0_10 = arith.constant 0 : index
    %c0_11 = arith.constant 0 : index
    %20 = vector.load %arg5[%c0_10, %c0_11] : memref<8x128xf32, #tpu.memory_space<vmem>>, vector<8x128xf32>
    tpu.vector_store %arg5[%c0_10, %c0_11], %19 {strides = array<i32>} : memref<8x128xf32, #tpu.memory_space<vmem>>, vector<8x128xf32>,
    return
  }
  func.func @transform_0(%arg0: i32) -> (i32, i32) {
    %c0_i32 = arith.constant 0 : i32
    %c0_i32_0 = arith.constant 0 : i32
    return %arg0, %c0_i32 : i32, i32
  }
  func.func @transform_1(%arg0: i32) -> (i32, i32) {
    %c0_i32 = arith.constant 0 : i32
    %c0_i32_0 = arith.constant 0 : i32
    %c0_i32_1 = arith.constant 0 : i32
    return %c0_i32, %c0_i32_0 : i32, i32
  }
  func.func @transform_2(%arg0: i32) -> (i32, i32) {
    %c0_i32 = arith.constant 0 : i32
    %c0_i32_0 = arith.constant 0 : i32
    %c0_i32_1 = arith.constant 0 : i32
    return %c0_i32, %c0_i32_0 : i32, i32
  }
  func.func @transform_3(%arg0: i32) -> (i32, i32) {
    %c0_i32 = arith.constant 0 : i32
    %c0_i32_0 = arith.constant 0 : i32
    %c0_i32_1 = arith.constant 0 : i32
    return %c0_i32, %c0_i32_0 : i32, i32
  }
  func.func @transform_4(%arg0: i32) -> (i32, i32) {
    %c0_i32 = arith.constant 0 : i32
    %c0_i32_0 = arith.constant 0 : i32
    return %arg0, %c0_i32 : i32, i32
  }
}

</mosaic_0001>

<llo_original>
// kernel: convnet_forward.5
$region0: #{convnet_forward.5}
  #allocation0 [shape = 'u32[]', space=smem, size = 0x4, offset = 0x4, fixed_abs, tag = 'smem constant byte address 0x4 - core index']
  #allocation1 [shape = 'u32[144,128]{1,0:T(1,128)}', space=vmem, size = 0x12000, scoped, tag = 'internal scratch']
  %s0 = inlined_call_operand.hbm [shape: f32[8,128], index: 0, kind: input, shape index: {}]
  %s1 = inlined_call_operand.hbm [shape: f32[8,1], index: 1, kind: input, shape index: {}]
  %s2 = inlined_call_operand.hbm [shape: bf16[128,128], index: 2, kind: input, shape index: {}]
  %s3 = inlined_call_operand.hbm [shape: f32[8,128], index: 3, kind: output, shape index: {0}]
  %s4 = inlined_call_operand.hbm [shape: f32[1,8,128], index: 4, kind: output, shape index: {1}]
  %5 = xla_tuple %s3, %s4
  %s6 = sld [smem:[#allocation0]]
  $region42: #{convnet_forward.5} parent=0
    _
  %s8 = ssub.s32 1, %s6
  %s9 = scalar_select 0, %s8, %s6
  $region1: #{convnet_forward.5} parent=0
    #allocation2 [shape = 'u8[4096]{0}', space=vmem, size = 0x1000, scoped, tag = 'input window, operand 0, single buffered']
    #allocation3 [shape = 's32[1]{0}', space=sflag, size = 0x4, scoped, tag = 'scoped memory for convnet_forward.5']
    #allocation4 [shape = 's32[1]{0}', space=sflag, size = 0x4, scoped, tag = 'scoped memory for convnet_forward.5']
    #allocation5 [shape = 'u8[4096]{0}', space=vmem, size = 0x1000, scoped, tag = 'input window, operand 1, single buffered']
    #allocation6 [shape = 's32[1]{0}', space=sflag, size = 0x4, scoped, tag = 'scoped memory for convnet_forward.5']
    #allocation7 [shape = 'u8[32768]{0}', space=vmem, size = 0x8000, scoped, tag = 'input window, operand 2, single buffered']
    #allocation8 [shape = 'u8[4096]{0}', space=vmem, size = 0x1000, scoped, tag = 'output window, operand 0, single buffered']
    #allocation9 [shape = 'u8[4096]{0}', space=vmem, size = 0x1000, scoped, tag = 'output window, operand 1, single buffered']
    #allocation10 [shape = 's32[1]{0}', space=sflag, size = 0x4, scoped, tag = 'scoped memory for convnet_forward.5']
    %10 = vsyncpa [#allocation3], 0
    %11 = vsyncpa [#allocation6], 0
    %12 = vsyncpa [#allocation4], 0
    %13 = vsyncpa [#allocation10], 0
    // Predicated region
    $region2: #{convnet_forward.5} parent=1 // pred_check
      _
    $region3: #{convnet_forward.5} parent=1 // pred_check_branch
      %15 = sbr.rel (0) target = $region5
    $region4: #{convnet_forward.5} parent=1 // pred_region
      %s17 = ssub.s32 128, 128
      %18 = vsyncadd [#allocation3], %s17
      %s20 = sshll.u32 [#allocation2], 4
      %s21 = int_to_ptr.vmem [resolvable:$true] %s20
      %23 = dma.hbm_to_vmem [thread:$0]  %s0, 128, %s21, [#allocation3]
    $region5: #{convnet_forward.5} parent=1 // pred_fallthru
      _
    // Predicated region
    $region6: #{convnet_forward.5} parent=1 // pred_check
      _
    $region7: #{convnet_forward.5} parent=1 // pred_check_branch
      %25 = sbr.rel (0) target = $region9
    $region8: #{convnet_forward.5} parent=1 // pred_region
      %s27 = ssub.s32 128, 128
      %28 = vsyncadd [#allocation6], %s27
      %s30 = sshll.u32 [#allocation5], 4
      %s31 = int_to_ptr.vmem [resolvable:$true] %s30
      %33 = dma.hbm_to_vmem [thread:$0]  %s1, 128, %s31, [#allocation6]
    $region9: #{convnet_forward.5} parent=1 // pred_fallthru
      _
    // Predicated region
    $region10: #{convnet_forward.5} parent=1 // pred_check
      _
    $region11: #{convnet_forward.5} parent=1 // pred_check_branch
      %35 = sbr.rel (0) target = $region13
    $region12: #{convnet_forward.5} parent=1 // pred_region
      %s37 = ssub.s32 1024, 1024
      %38 = vsyncadd [#allocation6], %s37
      %s39 = sshll.u32 [#allocation7], 4
      %s40 = int_to_ptr.vmem [resolvable:$true] %s39
      %45 = dma.hbm_to_vmem [thread:$0]  %s2, 1024, %s40, [#allocation6], 64, 64, 4
    $region13: #{convnet_forward.5} parent=1 // pred_fallthru
      _
    // Predicated region
    $region14: #{convnet_forward.5} parent=1 // pred_check
      _
    $region15: #{convnet_forward.5} parent=1 // pred_check_branch
      %47 = sbr.rel (0) target = $region17
    $region16: #{convnet_forward.5} parent=1 // pred_region
      %48 = dma.done [#allocation3], 128
    $region17: #{convnet_forward.5} parent=1 // pred_fallthru
      _
    // Predicated region
    $region18: #{convnet_forward.5} parent=1 // pred_check
      _
    $region19: #{convnet_forward.5} parent=1 // pred_check_branch
      %50 = sbr.rel (0) target = $region21
    $region20: #{convnet_forward.5} parent=1 // pred_region
      %51 = dma.done [#allocation6], 128
    $region21: #{convnet_forward.5} parent=1 // pred_fallthru
      _
    // Predicated region
    $region22: #{convnet_forward.5} parent=1 // pred_check
      _
    $region23: #{convnet_forward.5} parent=1 // pred_check_branch
      %53 = sbr.rel (0) target = $region25
    $region24: #{convnet_forward.5} parent=1 // pred_region
      %54 = dma.done [#allocation6], 1024
    $region25: #{convnet_forward.5} parent=1 // pred_fallthru
      _
    %v56 = vld [vmem:[#allocation2] sm:$0xff]
    %v57 = vpack.c.bf16 %v56, %v56
    %v58 = vld [vmem:[#allocation7] sm:$0xf]
    %v59 = vld [vmem:[#allocation7 + $0x4] sm:$0xf]
    %v60 = vld [vmem:[#allocation7 + $0x8] sm:$0xf]
    %v61 = vld [vmem:[#allocation7 + $0xc] sm:$0xf]
    %v62 = vld [vmem:[#allocation7 + $0x10] sm:$0xf]
    %v63 = vld [vmem:[#allocation7 + $0x14] sm:$0xf]
    %v64 = vld [vmem:[#allocation7 + $0x18] sm:$0xf]
    %v65 = vld [vmem:[#allocation7 + $0x1c] sm:$0xf]
    %v66 = vld [vmem:[#allocation7 + $0x20] sm:$0xf]
    %v67 = vld [vmem:[#allocation7 + $0x24] sm:$0xf]
    %v68 = vld [vmem:[#allocation7 + $0x28] sm:$0xf]
    %v69 = vld [vmem:[#allocation7 + $0x2c] sm:$0xf]
    %v70 = vld [vmem:[#allocation7 + $0x30] sm:$0xf]
    %v71 = vld [vmem:[#allocation7 + $0x34] sm:$0xf]
    %v72 = vld [vmem:[#allocation7 + $0x38] sm:$0xf]
    %v73 = vld [vmem:[#allocation7 + $0x3c] sm:$0xf]
    %v90 = vunpack.c.l.b16 %v58
    %v91 = vunpack.c.l.b16 %v59
    %v92 = vunpack.c.l.b16 %v60
    %v93 = vunpack.c.l.b16 %v61
    %v94 = vunpack.c.l.b16 %v62
    %v95 = vunpack.c.l.b16 %v63
    %v96 = vunpack.c.l.b16 %v64
    %v97 = vunpack.c.l.b16 %v65
    %v98 = vunpack.c.l.b16 %v66
    %v99 = vunpack.c.l.b16 %v67
    %v100 = vunpack.c.l.b16 %v68
    %v101 = vunpack.c.l.b16 %v69
    %v102 = vunpack.c.l.b16 %v70
    %v103 = vunpack.c.l.b16 %v71
    %v104 = vunpack.c.l.b16 %v72
    %v105 = vunpack.c.l.b16 %v73
    %v106 = vpack.c.b16 %v91, %v90
    %v107 = vpack.c.b16 %v93, %v92
    %v108 = vpack.c.b16 %v95, %v94
    %v109 = vpack.c.b16 %v97, %v96
    %v110 = vpack.c.b16 %v99, %v98
    %v111 = vpack.c.b16 %v101, %v100
    %v112 = vpack.c.b16 %v103, %v102
    %v113 = vpack.c.b16 %v105, %v104
    %122 = vmatprep.subr.bf16.mxu0 0
    %123 = vmatpush1.bf16.msra.mxu0 %v106
    %124 = vmatprep.subr.bf16.mxu0 0
    %125 = vmatpush1.bf16.msra.mxu0 %v107
    %126 = vmatprep.subr.bf16.mxu0 0
    %127 = vmatpush1.bf16.msra.mxu0 %v108
    %128 = vmatprep.subr.bf16.mxu0 0
    %129 = vmatpush1.bf16.msra.mxu0 %v109
    %130 = vmatprep.subr.bf16.mxu0 0
    %131 = vmatpush1.bf16.msra.mxu0 %v110
    %132 = vmatprep.subr.bf16.mxu0 0
    %133 = vmatpush1.bf16.msra.mxu0 %v111
    %134 = vmatprep.subr.bf16.mxu0 0
    %135 = vmatpush1.bf16.msra.mxu0 %v112
    %136 = vmatprep.subr.bf16.mxu0 0
    %137 = vmatpush1.bf16.msra.mxu0 %v113
    %138 = vmatprep.subr.bf16.mxu0 0
    %139 = vmatpush1.bf16.msra.mxu0 0
    %140 = vmatprep.subr.bf16.mxu0 0
    %141 = vmatpush1.bf16.msra.mxu0 0
    %142 = vmatprep.subr.bf16.mxu0 0
    %143 = vmatpush1.bf16.msra.mxu0 0
    %144 = vmatprep.subr.bf16.mxu0 0
    %145 = vmatpush1.bf16.msra.mxu0 0
    %146 = vmatprep.subr.bf16.mxu0 0
    %147 = vmatpush1.bf16.msra.mxu0 0
    %148 = vmatprep.subr.bf16.mxu0 0
    %149 = vmatpush1.bf16.msra.mxu0 0
    %150 = vmatprep.subr.bf16.mxu0 0
    %151 = vmatpush1.bf16.msra.mxu0 0
    %152 = vmatprep.subr.bf16.mxu0 0
    %153 = vmatpush1.bf16.msra.mxu0 0
    %154 = vmatprep.mubr.bf16.mxu0 0
    %155 = vmatmul.mubr.bf16.gmra.mrb[0].mxu0 %v57
    %v156 = vpop.f32.mrb[0].mxu0
    %v157 = vadd.f32 0.0, %v156
    %v158 = vpop.f32.mrb[0].mxu0
    %v159 = vpop.f32.mrb[0].mxu0
    %v160 = vpop.f32.mrb[0].mxu0
    %161 = vdwg.mxu0
    %162 = vst [vmem:[#allocation8] sm:$0xff] %v157
    %v163 = vld [vmem:[#allocation5] sm:$0xff]
    %165 = vset.pattern.permute.xlu0 0
    %166 = vperm.xlu0 %165, %v163
    %v167 = vpop.permute.xlu0 %166
    %v169 = vmul.f32 %v157, %v167
    %v170 = vrot.slane %v169, 4
    %v171 = vadd.f32 %v169, %v170
    %v172 = vrot.slane %v171, 2
    %v173 = vadd.f32 %v171, %v172
    %v174 = vrot.slane %v173, 1
    %v175 = vadd.f32 %v173, %v174
    %v176 = vmul.f32 %v169, %v169
    %v177 = vrot.slane %v176, 4
    %v178 = vadd.f32 %v176, %v177
    %v179 = vrot.slane %v178, 2
    %v180 = vadd.f32 %v178, %v179
    %v181 = vrot.slane %v180, 1
    %v182 = vadd.f32 %v180, %v181
    %v183 = vlaneseq
    %v184 = vshrl.u32 %v183, 7
    %vm185 = vcmp.eq.s32.totalorder %v184, 0
    %vm186 = vcmp.eq.s32.totalorder %v184, 1
    %v187 = vsel %vm186, %v182, 0.0
    %v188 = vsel %vm185, %v175, %v187
    %189 = vst [vmem:[#allocation9] sm:$0xff] %v188
    // Predicated region
    $region26: #{convnet_forward.5} parent=1 // pred_check
      _
    $region27: #{convnet_forward.5} parent=1 // pred_check_branch
      %191 = sbr.rel (0) target = $region29
    $region28: #{convnet_forward.5} parent=1 // pred_region
      %s193 = ssub.s32 128, 128
      %194 = vsyncadd [#allocation4], %s193
      %s196 = sshll.u32 [#allocation8], 4
      %s197 = int_to_ptr.vmem [resolvable:$true] %s196
      %199 = dma.vmem_to_hbm [thread:$0]  %s197, 128, %s3, [#allocation4]
    $region29: #{convnet_forward.5} parent=1 // pred_fallthru
      _
    // Predicated region
    $region30: #{convnet_forward.5} parent=1 // pred_check
      _
    $region31: #{convnet_forward.5} parent=1 // pred_check_branch
      %201 = sbr.rel (0) target = $region33
    $region32: #{convnet_forward.5} parent=1 // pred_region
      %s203 = ssub.s32 128, 128
      %204 = vsyncadd [#allocation10], %s203
      %s206 = sshll.u32 [#allocation9], 4
      %s207 = int_to_ptr.vmem [resolvable:$true] %s206
      %209 = dma.vmem_to_hbm [thread:$0]  %s207, 128, %s4, [#allocation10]
    $region33: #{convnet_forward.5} parent=1 // pred_fallthru
      _
    // Predicated region
    $region34: #{convnet_forward.5} parent=1 // pred_check
      _
    $region35: #{convnet_forward.5} parent=1 // pred_check_branch
      %211 = sbr.rel (0) target = $region37
    $region36: #{convnet_forward.5} parent=1 // pred_region
      %212 = dma.done [#allocation4], 128
    $region37: #{convnet_forward.5} parent=1 // pred_fallthru
      _
    // Predicated region
    $region38: #{convnet_forward.5} parent=1 // pred_check
      _
    $region39: #{convnet_forward.5} parent=1 // pred_check_branch
      %214 = sbr.rel (0) target = $region41
    $region40: #{convnet_forward.5} parent=1 // pred_region
      %215 = dma.done [#allocation10], 128
    $region41: #{convnet_forward.5} parent=1 // pred_fallthru
      _
    %216 = vsyncpa [#allocation3], 1
    %217 = vsyncpa [#allocation6], 1
    %218 = vsyncpa [#allocation4], 1
    %219 = vsyncpa [#allocation10], 1

// kernel: convnet_forward.6
$region0: #{convnet_forward.6}
  #allocation0 [shape = 'u32[]', space=smem, size = 0x4, offset = 0x4, fixed_abs, tag = 'smem constant byte address 0x4 - core index']
  #allocation1 [shape = 'u32[144,128]{1,0:T(1,128)}', space=vmem, size = 0x12000, scoped, tag = 'internal scratch']
  %s0 = inlined_call_operand.hbm [shape: f32[8,128], index: 0, kind: input, shape index: {}]
  %s1 = inlined_call_operand.hbm [shape: f32[1,128], index: 1, kind: input, shape index: {}]
  %s2 = inlined_call_operand.hbm [shape: f32[1,128], index: 2, kind: input, shape index: {}]
  %s3 = inlined_call_operand.hbm [shape: f32[8,1], index: 3, kind: input, shape index: {}]
  %s4 = inlined_call_operand.hbm [shape: bf16[128,128], index: 4, kind: input, shape index: {}]
  %s5 = inlined_call_operand.hbm [shape: f32[8,128], index: 5, kind: output, shape index: {0}]
  %s6 = inlined_call_operand.hbm [shape: f32[1,8,128], index: 6, kind: output, shape index: {1}]
  %7 = xla_tuple %s5, %s6
  %s8 = sld [smem:[#allocation0]]
  $region58: #{convnet_forward.6} parent=0
    _
  %s10 = ssub.s32 1, %s8
  %s11 = scalar_select 0, %s10, %s8
  $region1: #{convnet_forward.6} parent=0
    #allocation2 [shape = 'u8[4096]{0}', space=vmem, size = 0x1000, scoped, tag = 'input window, operand 0, single buffered']
    #allocation3 [shape = 's32[1]{0}', space=sflag, size = 0x4, scoped, tag = 'scoped memory for convnet_forward.6']
    #allocation4 [shape = 's32[1]{0}', space=sflag, size = 0x4, scoped, tag = 'scoped memory for convnet_forward.6']
    #allocation5 [shape = 'u8[512]{0}', space=vmem, size = 0x400, scoped, tag = 'input window, operand 1, single buffered']
    #allocation6 [shape = 's32[1]{0}', space=sflag, size = 0x4, scoped, tag = 'scoped memory for convnet_forward.6']
    #allocation7 [shape = 'u8[512]{0}', space=vmem, size = 0x400, scoped, tag = 'input window, operand 2, single buffered']
    #allocation8 [shape = 'u8[4096]{0}', space=vmem, size = 0x1000, scoped, tag = 'input window, operand 3, single buffered']
    #allocation9 [shape = 's32[1]{0}', space=sflag, size = 0x4, scoped, tag = 'scoped memory for convnet_forward.6']
    #allocation10 [shape = 'u8[32768]{0}', space=vmem, size = 0x8000, scoped, tag = 'input window, operand 4, single buffered']
    #allocation11 [shape = 'u8[4096]{0}', space=vmem, size = 0x1000, scoped, tag = 'output window, operand 0, single buffered']
    #allocation12 [shape = 'u8[4096]{0}', space=vmem, size = 0x1000, scoped, tag = 'output window, operand 1, single buffered']
    #allocation13 [shape = 's32[1]{0}', space=sflag, size = 0x4, scoped, tag = 'scoped memory for convnet_forward.6']
    %12 = vsyncpa [#allocation3], 0
    %13 = vsyncpa [#allocation6], 0
    %14 = vsyncpa [#allocation9], 0
    %15 = vsyncpa [#allocation4], 0
    %16 = vsyncpa [#allocation13], 0
    // Predicated region
    $region2: #{convnet_forward.6} parent=1 // pred_check
      _
    $region3: #{convnet_forward.6} parent=1 // pred_check_branch
      %18 = sbr.rel (0) target = $region5
    $region4: #{convnet_forward.6} parent=1 // pred_region
      %s20 = ssub.s32 128, 128
      %21 = vsyncadd [#allocation3], %s20
      %s23 = sshll.u32 [#allocation2], 4
      %s24 = int_to_ptr.vmem [resolvable:$true] %s23
      %26 = dma.hbm_to_vmem [thread:$0]  %s0, 128, %s24, [#allocation3]
    $region5: #{convnet_forward.6} parent=1 // pred_fallthru
      _
    // Predicated region
    $region6: #{convnet_forward.6} parent=1 // pred_check
      _
    $region7: #{convnet_forward.6} parent=1 // pred_check_branch
      %28 = sbr.rel (0) target = $region9
    $region8: #{convnet_forward.6} parent=1 // pred_region
      %s30 = ssub.s32 16, 16
      %31 = vsyncadd [#allocation6], %s30
      %s33 = sshll.u32 [#allocation5], 4
      %s34 = int_to_ptr.vmem [resolvable:$true] %s33
      %36 = dma.hbm_to_vmem [thread:$0]  %s1, 16, %s34, [#allocation6]
    $region9: #{convnet_forward.6} parent=1 // pred_fallthru
      _
    // Predicated region
    $region10: #{convnet_forward.6} parent=1 // pred_check
      _
    $region11: #{convnet_forward.6} parent=1 // pred_check_branch
      %38 = sbr.rel (0) target = $region13
    $region12: #{convnet_forward.6} parent=1 // pred_region
      %s40 = ssub.s32 16, 16
      %41 = vsyncadd [#allocation6], %s40
      %s43 = sshll.u32 [#allocation7], 4
      %s44 = int_to_ptr.vmem [resolvable:$true] %s43
      %46 = dma.hbm_to_vmem [thread:$0]  %s2, 16, %s44, [#allocation6]
    $region13: #{convnet_forward.6} parent=1 // pred_fallthru
      _
    // Predicated region
    $region14: #{convnet_forward.6} parent=1 // pred_check
      _
    $region15: #{convnet_forward.6} parent=1 // pred_check_branch
      %48 = sbr.rel (0) target = $region17
    $region16: #{convnet_forward.6} parent=1 // pred_region
      %s50 = ssub.s32 128, 128
      %51 = vsyncadd [#allocation9], %s50
      %s53 = sshll.u32 [#allocation8], 4
      %s54 = int_to_ptr.vmem [resolvable:$true] %s53
      %56 = dma.hbm_to_vmem [thread:$0]  %s3, 128, %s54, [#allocation9]
    $region17: #{convnet_forward.6} parent=1 // pred_fallthru
      _
    // Predicated region
    $region18: #{convnet_forward.6} parent=1 // pred_check
      _
    $region19: #{convnet_forward.6} parent=1 // pred_check_branch
      %58 = sbr.rel (0) target = $region21
    $region20: #{convnet_forward.6} parent=1 // pred_region
      %s60 = ssub.s32 1024, 1024
      %61 = vsyncadd [#allocation9], %s60
      %s62 = sshll.u32 [#allocation10], 4
      %s63 = int_to_ptr.vmem [resolvable:$true] %s62
      %68 = dma.hbm_to_vmem [thread:$0]  %s4, 1024, %s63, [#allocation9], 64, 64, 4
    $region21: #{convnet_forward.6} parent=1 // pred_fallthru
      _
    // Predicated region
    $region22: #{convnet_forward.6} parent=1 // pred_check
      _
    $region23: #{convnet_forward.6} parent=1 // pred_check_branch
      %70 = sbr.rel (0) target = $region25
    $region24: #{convnet_forward.6} parent=1 // pred_region
      %71 = dma.done [#allocation3], 128
    $region25: #{convnet_forward.6} parent=1 // pred_fallthru
      _
    // Predicated region
    $region26: #{convnet_forward.6} parent=1 // pred_check
      _
    $region27: #{convnet_forward.6} parent=1 // pred_check_branch
      %73 = sbr.rel (0) target = $region29
    $region28: #{convnet_forward.6} parent=1 // pred_region
      %74 = dma.done [#allocation6], 16
    $region29: #{convnet_forward.6} parent=1 // pred_fallthru
      _
    // Predicated region
    $region30: #{convnet_forward.6} parent=1 // pred_check
      _
    $region31: #{convnet_forward.6} parent=1 // pred_check_branch
      %76 = sbr.rel (0) target = $region33
    $region32: #{convnet_forward.6} parent=1 // pred_region
      %77 = dma.done [#allocation6], 16
    $region33: #{convnet_forward.6} parent=1 // pred_fallthru
      _
    // Predicated region
    $region34: #{convnet_forward.6} parent=1 // pred_check
      _
    $region35: #{convnet_forward.6} parent=1 // pred_check_branch
      %79 = sbr.rel (0) target = $region37
    $region36: #{convnet_forward.6} parent=1 // pred_region
      %80 = dma.done [#allocation9], 128
    $region37: #{convnet_forward.6} parent=1 // pred_fallthru
      _
    // Predicated region
    $region38: #{convnet_forward.6} parent=1 // pred_check
      _
    $region39: #{convnet_forward.6} parent=1 // pred_check_branch
      %82 = sbr.rel (0) target = $region41
    $region40: #{convnet_forward.6} parent=1 // pred_region
      %83 = dma.done [#allocation9], 1024
    $region41: #{convnet_forward.6} parent=1 // pred_fallthru
      _
    %v85 = vld [vmem:[#allocation2] sm:$0xff]
    %v86 = vld [vmem:[#allocation5] sm:$0x1]
    %v88 = vlaneseq
    %v89 = vshrl.u32 %v88, 7
    %v90 = vsub.s32 0, %v89
    %v91 = vrot.slane %v86, %v90
    %v93 = vmul.f32 %v85, %v91
    %v94 = vld [vmem:[#allocation7] sm:$0x1]
    %v96 = vlaneseq
    %v97 = vshrl.u32 %v96, 7
    %v98 = vsub.s32 0, %v97
    %v99 = vrot.slane %v94, %v98
    %v101 = vadd.f32 %v93, %v99
    %v102 = vmax.f32 %v101, 0.0
    %v103 = vpack.c.bf16 %v102, %v102
    %v104 = vld [vmem:[#allocation10] sm:$0xf]
    %v105 = vld [vmem:[#allocation10 + $0x4] sm:$0xf]
    %v106 = vld [vmem:[#allocation10 + $0x8] sm:$0xf]
    %v107 = vld [vmem:[#allocation10 + $0xc] sm:$0xf]
    %v108 = vld [vmem:[#allocation10 + $0x10] sm:$0xf]
    %v109 = vld [vmem:[#allocation10 + $0x14] sm:$0xf]
    %v110 = vld [vmem:[#allocation10 + $0x18] sm:$0xf]
    %v111 = vld [vmem:[#allocation10 + $0x1c] sm:$0xf]
    %v112 = vld [vmem:[#allocation10 + $0x20] sm:$0xf]
    %v113 = vld [vmem:[#allocation10 + $0x24] sm:$0xf]
    %v114 = vld [vmem:[#allocation10 + $0x28] sm:$0xf]
    %v115 = vld [vmem:[#allocation10 + $0x2c] sm:$0xf]
    %v116 = vld [vmem:[#allocation10 + $0x30] sm:$0xf]
    %v117 = vld [vmem:[#allocation10 + $0x34] sm:$0xf]
    %v118 = vld [vmem:[#allocation10 + $0x38] sm:$0xf]
    %v119 = vld [vmem:[#allocation10 + $0x3c] sm:$0xf]
    %v136 = vunpack.c.l.b16 %v104
    %v137 = vunpack.c.l.b16 %v105
    %v138 = vunpack.c.l.b16 %v106
    %v139 = vunpack.c.l.b16 %v107
    %v140 = vunpack.c.l.b16 %v108
    %v141 = vunpack.c.l.b16 %v109
    %v142 = vunpack.c.l.b16 %v110
    %v143 = vunpack.c.l.b16 %v111
    %v144 = vunpack.c.l.b16 %v112
    %v145 = vunpack.c.l.b16 %v113
    %v146 = vunpack.c.l.b16 %v114
    %v147 = vunpack.c.l.b16 %v115
    %v148 = vunpack.c.l.b16 %v116
    %v149 = vunpack.c.l.b16 %v117
    %v150 = vunpack.c.l.b16 %v118
    %v151 = vunpack.c.l.b16 %v119
    %v152 = vpack.c.b16 %v137, %v136
    %v153 = vpack.c.b16 %v139, %v138
    %v154 = vpack.c.b16 %v141, %v140
    %v155 = vpack.c.b16 %v143, %v142
    %v156 = vpack.c.b16 %v145, %v144
    %v157 = vpack.c.b16 %v147, %v146
    %v158 = vpack.c.b16 %v149, %v148
    %v159 = vpack.c.b16 %v151, %v150
    %168 = vmatprep.subr.bf16.mxu0 0
    %169 = vmatpush1.bf16.msra.mxu0 %v152
    %170 = vmatprep.subr.bf16.mxu0 0
    %171 = vmatpush1.bf16.msra.mxu0 %v153
    %172 = vmatprep.subr.bf16.mxu0 0
    %173 = vmatpush1.bf16.msra.mxu0 %v154
    %174 = vmatprep.subr.bf16.mxu0 0
    %175 = vmatpush1.bf16.msra.mxu0 %v155
    %176 = vmatprep.subr.bf16.mxu0 0
    %177 = vmatpush1.bf16.msra.mxu0 %v156
    %178 = vmatprep.subr.bf16.mxu0 0
    %179 = vmatpush1.bf16.msra.mxu0 %v157
    %180 = vmatprep.subr.bf16.mxu0 0
    %181 = vmatpush1.bf16.msra.mxu0 %v158
    %182 = vmatprep.subr.bf16.mxu0 0
    %183 = vmatpush1.bf16.msra.mxu0 %v159
    %184 = vmatprep.subr.bf16.mxu0 0
    %185 = vmatpush1.bf16.msra.mxu0 0
    %186 = vmatprep.subr.bf16.mxu0 0
    %187 = vmatpush1.bf16.msra.mxu0 0
    %188 = vmatprep.subr.bf16.mxu0 0
    %189 = vmatpush1.bf16.msra.mxu0 0
    %190 = vmatprep.subr.bf16.mxu0 0
    %191 = vmatpush1.bf16.msra.mxu0 0
    %192 = vmatprep.subr.bf16.mxu0 0
    %193 = vmatpush1.bf16.msra.mxu0 0
    %194 = vmatprep.subr.bf16.mxu0 0
    %195 = vmatpush1.bf16.msra.mxu0 0
    %196 = vmatprep.subr.bf16.mxu0 0
    %197 = vmatpush1.bf16.msra.mxu0 0
    %198 = vmatprep.subr.bf16.mxu0 0
    %199 = vmatpush1.bf16.msra.mxu0 0
    %200 = vmatprep.mubr.bf16.mxu0 0
    %201 = vmatmul.mubr.bf16.gmra.mrb[0].mxu0 %v103
    %v202 = vpop.f32.mrb[0].mxu0
    %v203 = vadd.f32 0.0, %v202
    %v204 = vpop.f32.mrb[0].mxu0
    %v205 = vpop.f32.mrb[0].mxu0
    %v206 = vpop.f32.mrb[0].mxu0
    %207 = vdwg.mxu0
    %208 = vst [vmem:[#allocation11] sm:$0xff] %v203
    %v209 = vld [vmem:[#allocation8] sm:$0xff]
    %211 = vset.pattern.permute.xlu0 0
    %212 = vperm.xlu0 %211, %v209
    %v213 = vpop.permute.xlu0 %212
    %v215 = vmul.f32 %v203, %v213
    %v216 = vrot.slane %v215, 4
    %v217 = vadd.f32 %v215, %v216
    %v218 = vrot.slane %v217, 2
    %v219 = vadd.f32 %v217, %v218
    %v220 = vrot.slane %v219, 1
    %v221 = vadd.f32 %v219, %v220
    %v222 = vmul.f32 %v215, %v215
    %v223 = vrot.slane %v222, 4
    %v224 = vadd.f32 %v222, %v223
    %v225 = vrot.slane %v224, 2
    %v226 = vadd.f32 %v224, %v225
    %v227 = vrot.slane %v226, 1
    %v228 = vadd.f32 %v226, %v227
    %v229 = vlaneseq
    %v230 = vshrl.u32 %v229, 7
    %vm231 = vcmp.eq.s32.totalorder %v230, 0
    %vm232 = vcmp.eq.s32.totalorder %v230, 1
    %v233 = vsel %vm232, %v228, 0.0
    %v234 = vsel %vm231, %v221, %v233
    %235 = vst [vmem:[#allocation12] sm:$0xff] %v234
    // Predicated region
    $region42: #{convnet_forward.6} parent=1 // pred_check
      _
    $region43: #{convnet_forward.6} parent=1 // pred_check_branch
      %237 = sbr.rel (0) target = $region45
    $region44: #{convnet_forward.6} parent=1 // pred_region
      %s239 = ssub.s32 128, 128
      %240 = vsyncadd [#allocation4], %s239
      %s242 = sshll.u32 [#allocation11], 4
      %s243 = int_to_ptr.vmem [resolvable:$true] %s242
      %245 = dma.vmem_to_hbm [thread:$0]  %s243, 128, %s5, [#allocation4]
    $region45: #{convnet_forward.6} parent=1 // pred_fallthru
      _
    // Predicated region
    $region46: #{convnet_forward.6} parent=1 // pred_check
      _
    $region47: #{convnet_forward.6} parent=1 // pred_check_branch
      %247 = sbr.rel (0) target = $region49
    $region48: #{convnet_forward.6} parent=1 // pred_region
      %s249 = ssub.s32 128, 128
      %250 = vsyncadd [#allocation13], %s249
      %s252 = sshll.u32 [#allocation12], 4
      %s253 = int_to_ptr.vmem [resolvable:$true] %s252
      %255 = dma.vmem_to_hbm [thread:$0]  %s253, 128, %s6, [#allocation13]
    $region49: #{convnet_forward.6} parent=1 // pred_fallthru
      _
    // Predicated region
    $region50: #{convnet_forward.6} parent=1 // pred_check
      _
    $region51: #{convnet_forward.6} parent=1 // pred_check_branch
      %257 = sbr.rel (0) target = $region53
    $region52: #{convnet_forward.6} parent=1 // pred_region
      %258 = dma.done [#allocation4], 128
    $region53: #{convnet_forward.6} parent=1 // pred_fallthru
      _
    // Predicated region
    $region54: #{convnet_forward.6} parent=1 // pred_check
      _
    $region55: #{convnet_forward.6} parent=1 // pred_check_branch
      %260 = sbr.rel (0) target = $region57
    $region56: #{convnet_forward.6} parent=1 // pred_region
      %261 = dma.done [#allocation13], 128
    $region57: #{convnet_forward.6} parent=1 // pred_fallthru
      _
    %262 = vsyncpa [#allocation3], 1
    %263 = vsyncpa [#allocation6], 1
    %264 = vsyncpa [#allocation9], 1
    %265 = vsyncpa [#allocation4], 1
    %266 = vsyncpa [#allocation13], 1

// kernel: convnet_forward.7
$region0: #{convnet_forward.7}
  #allocation0 [shape = 'u32[]', space=smem, size = 0x4, offset = 0x4, fixed_abs, tag = 'smem constant byte address 0x4 - core index']
  #allocation1 [shape = 'u32[144,128]{1,0:T(1,128)}', space=vmem, size = 0x12000, scoped, tag = 'internal scratch']
  %s0 = inlined_call_operand.hbm [shape: f32[8,128], index: 0, kind: input, shape index: {}]
  %s1 = inlined_call_operand.hbm [shape: f32[1,128], index: 1, kind: input, shape index: {}]
  %s2 = inlined_call_operand.hbm [shape: f32[1,128], index: 2, kind: input, shape index: {}]
  %s3 = inlined_call_operand.hbm [shape: bf16[128,128], index: 3, kind: input, shape index: {}]
  %s4 = inlined_call_operand.hbm [shape: f32[8,128], index: 4, kind: output, shape index: {}]
  %s5 = sld [smem:[#allocation0]]
  $region42: #{convnet_forward.7} parent=0
    _
  %s7 = ssub.s32 1, %s5
  %s8 = scalar_select 0, %s7, %s5
  $region1: #{convnet_forward.7} parent=0
    #allocation2 [shape = 'u8[4096]{0}', space=vmem, size = 0x1000, scoped, tag = 'input window, operand 0, single buffered']
    #allocation3 [shape = 's32[1]{0}', space=sflag, size = 0x4, scoped, tag = 'scoped memory for convnet_forward.7']
    #allocation4 [shape = 's32[1]{0}', space=sflag, size = 0x4, scoped, tag = 'scoped memory for convnet_forward.7']
    #allocation5 [shape = 'u8[512]{0}', space=vmem, size = 0x400, scoped, tag = 'input window, operand 1, single buffered']
    #allocation6 [shape = 's32[1]{0}', space=sflag, size = 0x4, scoped, tag = 'scoped memory for convnet_forward.7']
    #allocation7 [shape = 'u8[512]{0}', space=vmem, size = 0x400, scoped, tag = 'input window, operand 2, single buffered']
    #allocation8 [shape = 'u8[32768]{0}', space=vmem, size = 0x8000, scoped, tag = 'input window, operand 3, single buffered']
    #allocation9 [shape = 's32[1]{0}', space=sflag, size = 0x4, scoped, tag = 'scoped memory for convnet_forward.7']
    #allocation10 [shape = 'u8[4096]{0}', space=vmem, size = 0x1000, scoped, tag = 'output window, operand 0, single buffered']
    %9 = vsyncpa [#allocation3], 0
    %10 = vsyncpa [#allocation6], 0
    %11 = vsyncpa [#allocation9], 0
    %12 = vsyncpa [#allocation4], 0
    // Predicated region
    $region2: #{convnet_forward.7} parent=1 // pred_check
      _
    $region3: #{convnet_forward.7} parent=1 // pred_check_branch
      %14 = sbr.rel (0) target = $region5
    $region4: #{convnet_forward.7} parent=1 // pred_region
      %s16 = ssub.s32 128, 128
      %17 = vsyncadd [#allocation3], %s16
      %s19 = sshll.u32 [#allocation2], 4
      %s20 = int_to_ptr.vmem [resolvable:$true] %s19
      %22 = dma.hbm_to_vmem [thread:$0]  %s0, 128, %s20, [#allocation3]
    $region5: #{convnet_forward.7} parent=1 // pred_fallthru
      _
    // Predicated region
    $region6: #{convnet_forward.7} parent=1 // pred_check
      _
    $region7: #{convnet_forward.7} parent=1 // pred_check_branch
      %24 = sbr.rel (0) target = $region9
    $region8: #{convnet_forward.7} parent=1 // pred_region
      %s26 = ssub.s32 16, 16
      %27 = vsyncadd [#allocation6], %s26
      %s29 = sshll.u32 [#allocation5], 4
      %s30 = int_to_ptr.vmem [resolvable:$true] %s29
      %32 = dma.hbm_to_vmem [thread:$0]  %s1, 16, %s30, [#allocation6]
    $region9: #{convnet_forward.7} parent=1 // pred_fallthru
      _
    // Predicated region
    $region10: #{convnet_forward.7} parent=1 // pred_check
      _
    $region11: #{convnet_forward.7} parent=1 // pred_check_branch
      %34 = sbr.rel (0) target = $region13
    $region12: #{convnet_forward.7} parent=1 // pred_region
      %s36 = ssub.s32 16, 16
      %37 = vsyncadd [#allocation6], %s36
      %s39 = sshll.u32 [#allocation7], 4
      %s40 = int_to_ptr.vmem [resolvable:$true] %s39
      %42 = dma.hbm_to_vmem [thread:$0]  %s2, 16, %s40, [#allocation6]
    $region13: #{convnet_forward.7} parent=1 // pred_fallthru
      _
    // Predicated region
    $region14: #{convnet_forward.7} parent=1 // pred_check
      _
    $region15: #{convnet_forward.7} parent=1 // pred_check_branch
      %44 = sbr.rel (0) target = $region17
    $region16: #{convnet_forward.7} parent=1 // pred_region
      %s46 = ssub.s32 1024, 1024
      %47 = vsyncadd [#allocation9], %s46
      %s48 = sshll.u32 [#allocation8], 4
      %s49 = int_to_ptr.vmem [resolvable:$true] %s48
      %54 = dma.hbm_to_vmem [thread:$0]  %s3, 1024, %s49, [#allocation9], 64, 64, 4
    $region17: #{convnet_forward.7} parent=1 // pred_fallthru
      _
    // Predicated region
    $region18: #{convnet_forward.7} parent=1 // pred_check
      _
    $region19: #{convnet_forward.7} parent=1 // pred_check_branch
      %56 = sbr.rel (0) target = $region21
    $region20: #{convnet_forward.7} parent=1 // pred_region
      %57 = dma.done [#allocation3], 128
    $region21: #{convnet_forward.7} parent=1 // pred_fallthru
      _
    // Predicated region
    $region22: #{convnet_forward.7} parent=1 // pred_check
      _
    $region23: #{convnet_forward.7} parent=1 // pred_check_branch
      %59 = sbr.rel (0) target = $region25
    $region24: #{convnet_forward.7} parent=1 // pred_region
      %60 = dma.done [#allocation6], 16
    $region25: #{convnet_forward.7} parent=1 // pred_fallthru
      _
    // Predicated region
    $region26: #{convnet_forward.7} parent=1 // pred_check
      _
    $region27: #{convnet_forward.7} parent=1 // pred_check_branch
      %62 = sbr.rel (0) target = $region29
    $region28: #{convnet_forward.7} parent=1 // pred_region
      %63 = dma.done [#allocation6], 16
    $region29: #{convnet_forward.7} parent=1 // pred_fallthru
      _
    // Predicated region
    $region30: #{convnet_forward.7} parent=1 // pred_check
      _
    $region31: #{convnet_forward.7} parent=1 // pred_check_branch
      %65 = sbr.rel (0) target = $region33
    $region32: #{convnet_forward.7} parent=1 // pred_region
      %66 = dma.done [#allocation9], 1024
    $region33: #{convnet_forward.7} parent=1 // pred_fallthru
      _
    %v68 = vld [vmem:[#allocation2] sm:$0xff]
    %v69 = vld [vmem:[#allocation5] sm:$0x1]
    %v71 = vlaneseq
    %v72 = vshrl.u32 %v71, 7
    %v73 = vsub.s32 0, %v72
    %v74 = vrot.slane %v69, %v73
    %v76 = vmul.f32 %v68, %v74
    %v77 = vld [vmem:[#allocation7] sm:$0x1]
    %v79 = vlaneseq
    %v80 = vshrl.u32 %v79, 7
    %v81 = vsub.s32 0, %v80
    %v82 = vrot.slane %v77, %v81
    %v84 = vadd.f32 %v76, %v82
    %v85 = vmax.f32 %v84, 0.0
    %v86 = vpack.c.bf16 %v85, %v85
    %v87 = vld [vmem:[#allocation8] sm:$0xf]
    %v88 = vld [vmem:[#allocation8 + $0x4] sm:$0xf]
    %v89 = vld [vmem:[#allocation8 + $0x8] sm:$0xf]
    %v90 = vld [vmem:[#allocation8 + $0xc] sm:$0xf]
    %v91 = vld [vmem:[#allocation8 + $0x10] sm:$0xf]
    %v92 = vld [vmem:[#allocation8 + $0x14] sm:$0xf]
    %v93 = vld [vmem:[#allocation8 + $0x18] sm:$0xf]
    %v94 = vld [vmem:[#allocation8 + $0x1c] sm:$0xf]
    %v95 = vld [vmem:[#allocation8 + $0x20] sm:$0xf]
    %v96 = vld [vmem:[#allocation8 + $0x24] sm:$0xf]
    %v97 = vld [vmem:[#allocation8 + $0x28] sm:$0xf]
    %v98 = vld [vmem:[#allocation8 + $0x2c] sm:$0xf]
    %v99 = vld [vmem:[#allocation8 + $0x30] sm:$0xf]
    %v100 = vld [vmem:[#allocation8 + $0x34] sm:$0xf]
    %v101 = vld [vmem:[#allocation8 + $0x38] sm:$0xf]
    %v102 = vld [vmem:[#allocation8 + $0x3c] sm:$0xf]
    %v119 = vunpack.c.l.b16 %v87
    %v120 = vunpack.c.l.b16 %v88
    %v121 = vunpack.c.l.b16 %v89
    %v122 = vunpack.c.l.b16 %v90
    %v123 = vunpack.c.l.b16 %v91
    %v124 = vunpack.c.l.b16 %v92
    %v125 = vunpack.c.l.b16 %v93
    %v126 = vunpack.c.l.b16 %v94
    %v127 = vunpack.c.l.b16 %v95
    %v128 = vunpack.c.l.b16 %v96
    %v129 = vunpack.c.l.b16 %v97
    %v130 = vunpack.c.l.b16 %v98
    %v131 = vunpack.c.l.b16 %v99
    %v132 = vunpack.c.l.b16 %v100
    %v133 = vunpack.c.l.b16 %v101
    %v134 = vunpack.c.l.b16 %v102
    %v135 = vpack.c.b16 %v120, %v119
    %v136 = vpack.c.b16 %v122, %v121
    %v137 = vpack.c.b16 %v124, %v123
    %v138 = vpack.c.b16 %v126, %v125
    %v139 = vpack.c.b16 %v128, %v127
    %v140 = vpack.c.b16 %v130, %v129
    %v141 = vpack.c.b16 %v132, %v131
    %v142 = vpack.c.b16 %v134, %v133
    %151 = vmatprep.subr.bf16.mxu0 0
    %152 = vmatpush1.bf16.msra.mxu0 %v135
    %153 = vmatprep.subr.bf16.mxu0 0
    %154 = vmatpush1.bf16.msra.mxu0 %v136
    %155 = vmatprep.subr.bf16.mxu0 0
    %156 = vmatpush1.bf16.msra.mxu0 %v137
    %157 = vmatprep.subr.bf16.mxu0 0
    %158 = vmatpush1.bf16.msra.mxu0 %v138
    %159 = vmatprep.subr.bf16.mxu0 0
    %160 = vmatpush1.bf16.msra.mxu0 %v139
    %161 = vmatprep.subr.bf16.mxu0 0
    %162 = vmatpush1.bf16.msra.mxu0 %v140
    %163 = vmatprep.subr.bf16.mxu0 0
    %164 = vmatpush1.bf16.msra.mxu0 %v141
    %165 = vmatprep.subr.bf16.mxu0 0
    %166 = vmatpush1.bf16.msra.mxu0 %v142
    %167 = vmatprep.subr.bf16.mxu0 0
    %168 = vmatpush1.bf16.msra.mxu0 0
    %169 = vmatprep.subr.bf16.mxu0 0
    %170 = vmatpush1.bf16.msra.mxu0 0
    %171 = vmatprep.subr.bf16.mxu0 0
    %172 = vmatpush1.bf16.msra.mxu0 0
    %173 = vmatprep.subr.bf16.mxu0 0
    %174 = vmatpush1.bf16.msra.mxu0 0
    %175 = vmatprep.subr.bf16.mxu0 0
    %176 = vmatpush1.bf16.msra.mxu0 0
    %177 = vmatprep.subr.bf16.mxu0 0
    %178 = vmatpush1.bf16.msra.mxu0 0
    %179 = vmatprep.subr.bf16.mxu0 0
    %180 = vmatpush1.bf16.msra.mxu0 0
    %181 = vmatprep.subr.bf16.mxu0 0
    %182 = vmatpush1.bf16.msra.mxu0 0
    %183 = vmatprep.mubr.bf16.mxu0 0
    %184 = vmatmul.mubr.bf16.gmra.mrb[0].mxu0 %v86
    %v185 = vpop.f32.mrb[0].mxu0
    %v186 = vadd.f32 0.0, %v185
    %v187 = vpop.f32.mrb[0].mxu0
    %v188 = vpop.f32.mrb[0].mxu0
    %v189 = vpop.f32.mrb[0].mxu0
    %190 = vdwg.mxu0
    %v191 = vmul.f32 %v186, %v186
    %192 = vadd.xlane.f32.xlu0 %v191
    %v193 = vpop.xlane.xlu0 %192
    %v194 = vmax.f32 %v193, 1e-24
    %v195 = vrsqrt.pop %v194
    %v196 = vmul.f32 %v186, %v195
    %197 = vst [vmem:[#allocation10] sm:$0xff] %v196
    // Predicated region
    $region34: #{convnet_forward.7} parent=1 // pred_check
      _
    $region35: #{convnet_forward.7} parent=1 // pred_check_branch
      %199 = sbr.rel (0) target = $region37
    $region36: #{convnet_forward.7} parent=1 // pred_region
      %s201 = ssub.s32 128, 128
      %202 = vsyncadd [#allocation4], %s201
      %s204 = sshll.u32 [#allocation10], 4
      %s205 = int_to_ptr.vmem [resolvable:$true] %s204
      %207 = dma.vmem_to_hbm [thread:$0]  %s205, 128, %s4, [#allocation4]
    $region37: #{convnet_forward.7} parent=1 // pred_fallthru
      _
    // Predicated region
    $region38: #{convnet_forward.7} parent=1 // pred_check
      _
    $region39: #{convnet_forward.7} parent=1 // pred_check_branch
      %209 = sbr.rel (0) target = $region41
    $region40: #{convnet_forward.7} parent=1 // pred_region
      %210 = dma.done [#allocation4], 128
    $region41: #{convnet_forward.7} parent=1 // pred_fallthru
      _
    %211 = vsyncpa [#allocation3], 1
    %212 = vsyncpa [#allocation6], 1
    %213 = vsyncpa [#allocation9], 1
    %214 = vsyncpa [#allocation4], 1

// kernel: convnet_forward.4
$region0: #{convnet_forward.4}
  #allocation0 [shape = 'u32[]', space=smem, size = 0x4, offset = 0x4, fixed_abs, tag = 'smem constant byte address 0x4 - core index']
  #allocation1 [shape = 'u32[144,128]{1,0:T(1,128)}', space=vmem, size = 0x12000, scoped, tag = 'internal scratch']
  %s0 = inlined_call_operand.hbm [shape: bf16[2048,27], index: 0, kind: input, shape index: {}]
  %s1 = inlined_call_operand.hbm [shape: bf16[27,128], index: 1, kind: input, shape index: {}]
  %s2 = inlined_call_operand.hbm [shape: f32[1,128], index: 2, kind: input, shape index: {}]
  %s3 = inlined_call_operand.hbm [shape: bf16[128,128], index: 3, kind: input, shape index: {}]
  %s4 = inlined_call_operand.hbm [shape: f32[1,128], index: 4, kind: input, shape index: {}]
  %s5 = inlined_call_operand.hbm [shape: f32[8,128], index: 5, kind: output, shape index: {0}]
  %s6 = inlined_call_operand.hbm [shape: f32[8,128], index: 6, kind: output, shape index: {1}]
  %7 = xla_tuple %s5, %s6
  %s8 = sld [smem:[#allocation0]]
  $region58: #{convnet_forward.4} parent=0
    _
  %s10 = ssub.s32 1, %s8
  %s11 = scalar_select 0, %s10, %s8
  $region1: #{convnet_forward.4} parent=0
    #allocation2 [shape = 'u8[524288]{0}', space=vmem, size = 0x80000, scoped, tag = 'input window, operand 0, single buffered']
    #allocation3 [shape = 's32[1]{0}', space=sflag, size = 0x4, scoped, tag = 'scoped memory for convnet_forward.4']
    #allocation4 [shape = 's32[1]{0}', space=sflag, size = 0x4, scoped, tag = 'scoped memory for convnet_forward.4']
    #allocation5 [shape = 'u8[8192]{0}', space=vmem, size = 0x2000, scoped, tag = 'input window, operand 1, single buffered']
    #allocation6 [shape = 's32[1]{0}', space=sflag, size = 0x4, scoped, tag = 'scoped memory for convnet_forward.4']
    #allocation7 [shape = 'u8[512]{0}', space=vmem, size = 0x400, scoped, tag = 'input window, operand 2, single buffered']
    #allocation8 [shape = 'u8[32768]{0}', space=vmem, size = 0x8000, scoped, tag = 'input window, operand 3, single buffered']
    #allocation9 [shape = 's32[1]{0}', space=sflag, size = 0x4, scoped, tag = 'scoped memory for convnet_forward.4']
    #allocation10 [shape = 'u8[512]{0}', space=vmem, size = 0x400, scoped, tag = 'input window, operand 4, single buffered']
    #allocation11 [shape = 'u8[4096]{0}', space=vmem, size = 0x1000, scoped, tag = 'output window, operand 0, single buffered']
    #allocation12 [shape = 'u8[4096]{0}', space=vmem, size = 0x1000, scoped, tag = 'output window, operand 1, single buffered']
    #allocation13 [shape = 's32[1]{0}', space=sflag, size = 0x4, scoped, tag = 'scoped memory for convnet_forward.4']
    %12 = vsyncpa [#allocation3], 0
    %13 = vsyncpa [#allocation6], 0
    %14 = vsyncpa [#allocation9], 0
    %15 = vsyncpa [#allocation4], 0
    %16 = vsyncpa [#allocation13], 0
    // Predicated region
    $region2: #{convnet_forward.4} parent=1 // pred_check
      _
    $region3: #{convnet_forward.4} parent=1 // pred_check_branch
      %18 = sbr.rel (0) target = $region5
    $region4: #{convnet_forward.4} parent=1 // pred_region
      %s20 = ssub.s32 16384, 16384
      %21 = vsyncadd [#allocation3], %s20
      %s22 = sshll.u32 [#allocation2], 4
      %s23 = int_to_ptr.vmem [resolvable:$true] %s22
      %28 = dma.hbm_to_vmem [thread:$0]  %s0, 16384, %s23, [#allocation3], 64, 64, 4
    $region5: #{convnet_forward.4} parent=1 // pred_fallthru
      _
    // Predicated region
    $region6: #{convnet_forward.4} parent=1 // pred_check
      _
    $region7: #{convnet_forward.4} parent=1 // pred_check_branch
      %30 = sbr.rel (0) target = $region9
    $region8: #{convnet_forward.4} parent=1 // pred_region
      %s32 = ssub.s32 256, 256
      %33 = vsyncadd [#allocation6], %s32
      %s34 = sshll.u32 [#allocation5], 4
      %s35 = int_to_ptr.vmem [resolvable:$true] %s34
      %40 = dma.hbm_to_vmem [thread:$0]  %s1, 256, %s35, [#allocation6], 64, 64, 4
    $region9: #{convnet_forward.4} parent=1 // pred_fallthru
      _
    // Predicated region
    $region10: #{convnet_forward.4} parent=1 // pred_check
      _
    $region11: #{convnet_forward.4} parent=1 // pred_check_branch
      %42 = sbr.rel (0) target = $region13
    $region12: #{convnet_forward.4} parent=1 // pred_region
      %s44 = ssub.s32 16, 16
      %45 = vsyncadd [#allocation6], %s44
      %s47 = sshll.u32 [#allocation7], 4
      %s48 = int_to_ptr.vmem [resolvable:$true] %s47
      %50 = dma.hbm_to_vmem [thread:$0]  %s2, 16, %s48, [#allocation6]
    $region13: #{convnet_forward.4} parent=1 // pred_fallthru
      _
    // Predicated region
    $region14: #{convnet_forward.4} parent=1 // pred_check
      _
    $region15: #{convnet_forward.4} parent=1 // pred_check_branch
      %52 = sbr.rel (0) target = $region17
    $region16: #{convnet_forward.4} parent=1 // pred_region
      %s54 = ssub.s32 1024, 1024
      %55 = vsyncadd [#allocation9], %s54
      %s56 = sshll.u32 [#allocation8], 4
      %s57 = int_to_ptr.vmem [resolvable:$true] %s56
      %62 = dma.hbm_to_vmem [thread:$0]  %s3, 1024, %s57, [#allocation9], 64, 64, 4
    $region17: #{convnet_forward.4} parent=1 // pred_fallthru
      _
    // Predicated region
    $region18: #{convnet_forward.4} parent=1 // pred_check
      _
    $region19: #{convnet_forward.4} parent=1 // pred_check_branch
      %64 = sbr.rel (0) target = $region21
    $region20: #{convnet_forward.4} parent=1 // pred_region
      %s66 = ssub.s32 16, 16
      %67 = vsyncadd [#allocation9], %s66
      %s69 = sshll.u32 [#allocation10], 4
      %s70 = int_to_ptr.vmem [resolvable:$true] %s69
      %72 = dma.hbm_to_vmem [thread:$0]  %s4, 16, %s70, [#allocation9]
    $region21: #{convnet_forward.4} parent=1 // pred_fallthru
      _
    // Predicated region
    $region22: #{convnet_forward.4} parent=1 // pred_check
      _
    $region23: #{convnet_forward.4} parent=1 // pred_check_branch
      %74 = sbr.rel (0) target = $region25
    $region24: #{convnet_forward.4} parent=1 // pred_region
      %75 = dma.done [#allocation3], 16384
    $region25: #{convnet_forward.4} parent=1 // pred_fallthru
      _
    // Predicated region
    $region26: #{convnet_forward.4} parent=1 // pred_check
      _
    $region27: #{convnet_forward.4} parent=1 // pred_check_branch
      %77 = sbr.rel (0) target = $region29
    $region28: #{convnet_forward.4} parent=1 // pred_region
      %78 = dma.done [#allocation6], 256
    $region29: #{convnet_forward.4} parent=1 // pred_fallthru
      _
    // Predicated region
    $region30: #{convnet_forward.4} parent=1 // pred_check
      _
    $region31: #{convnet_forward.4} parent=1 // pred_check_branch
      %80 = sbr.rel (0) target = $region33
    $region32: #{convnet_forward.4} parent=1 // pred_region
      %81 = dma.done [#allocation6], 16
    $region33: #{convnet_forward.4} parent=1 // pred_fallthru
      _
    // Predicated region
    $region34: #{convnet_forward.4} parent=1 // pred_check
      _
    $region35: #{convnet_forward.4} parent=1 // pred_check_branch
      %83 = sbr.rel (0) target = $region37
    $region36: #{convnet_forward.4} parent=1 // pred_region
      %84 = dma.done [#allocation9], 1024
    $region37: #{convnet_forward.4} parent=1 // pred_fallthru
      _
    // Predicated region
    $region38: #{convnet_forward.4} parent=1 // pred_check
      _
    $region39: #{convnet_forward.4} parent=1 // pred_check_branch
      %86 = sbr.rel (0) target = $region41
    $region40: #{convnet_forward.4} parent=1 // pred_region
      %87 = dma.done [#allocation9], 16
    $region41: #{convnet_forward.4} parent=1 // pred_fallthru
      _
    %v89 = vld [vmem:[#allocation2] sm:$0xf]
    %v90 = vld [vmem:[#allocation2 + $0x4] sm:$0xf]
    %v91 = vld [vmem:[#allocation2 + $0x8] sm:$0xf]
    %v92 = vld [vmem:[#allocation2 + $0xc] sm:$0xf]
    %v93 = vld [vmem:[#allocation2 + $0x10] sm:$0xf]
    %v94 = vld [vmem:[#allocation2 + $0x14] sm:$0xf]
    %v95 = vld [vmem:[#allocation2 + $0x18] sm:$0xf]
    %v96 = vld [vmem:[#allocation2 + $0x1c] sm:$0xf]
    %v97 = vld [vmem:[#allocation2 + $0x20] sm:$0xf]
    %v98 = vld [vmem:[#allocation2 + $0x24] sm:$0xf]
    %v99 = vld [vmem:[#allocation2 + $0x28] sm:$0xf]
    %v100 = vld [vmem:[#allocation2 + $0x2c] sm:$0xf]
    %v101 = vld [vmem:[#allocation2 + $0x30] sm:$0xf]
    %v102 = vld [vmem:[#allocation2 + $0x34] sm:$0xf]
    %v103 = vld [vmem:[#allocation2 + $0x38] sm:$0xf]
    %v104 = vld [vmem:[#allocation2 + $0x3c] sm:$0xf]
    %v105 = vld [vmem:[#allocation2 + $0x40] sm:$0xf]
    %v106 = vld [vmem:[#allocation2 + $0x44] sm:$0xf]
    %v107 = vld [vmem:[#allocation2 + $0x48] sm:$0xf]
    %v108 = vld [vmem:[#allocation2 + $0x4c] sm:$0xf]
    %v109 = vld [vmem:[#allocation2 + $0x50] sm:$0xf]
    %v110 = vld [vmem:[#allocation2 + $0x54] sm:$0xf]
    %v111 = vld [vmem:[#allocation2 + $0x58] sm:$0xf]
    %v112 = vld [vmem:[#allocation2 + $0x5c] sm:$0xf]
    %v113 = vld [vmem:[#allocation2 + $0x60] sm:$0xf]
    %v114 = vld [vmem:[#allocation2 + $0x64] sm:$0xf]
    %v115 = vld [vmem:[#allocation2 + $0x68] sm:$0xf]
    %v116 = vld [vmem:[#allocation2 + $0x6c] sm:$0xf]
    %v117 = vld [vmem:[#allocation2 + $0x70] sm:$0xf]
    %v118 = vld [vmem:[#allocation2 + $0x74] sm:$0xf]
    %v119 = vld [vmem:[#allocation2 + $0x78] sm:$0xf]
    %v120 = vld [vmem:[#allocation2 + $0x7c] sm:$0xf]
    %v121 = vld [vmem:[#allocation2 + $0x80] sm:$0xf]
    %v122 = vld [vmem:[#allocation2 + $0x84] sm:$0xf]
    %v123 = vld [vmem:[#allocation2 + $0x88] sm:$0xf]
    %v124 = vld [vmem:[#allocation2 + $0x8c] sm:$0xf]
    %v125 = vld [vmem:[#allocation2 + $0x90] sm:$0xf]
    %v126 = vld [vmem:[#allocation2 + $0x94] sm:$0xf]
    %v127 = vld [vmem:[#allocation2 + $0x98] sm:$0xf]
    %v128 = vld [vmem:[#allocation2 + $0x9c] sm:$0xf]
    %v129 = vld [vmem:[#allocation2 + $0xa0] sm:$0xf]
    %v130 = vld [vmem:[#allocation2 + $0xa4] sm:$0xf]
    %v131 = vld [vmem:[#allocation2 + $0xa8] sm:$0xf]
    %v132 = vld [vmem:[#allocation2 + $0xac] sm:$0xf]
    %v133 = vld [vmem:[#allocation2 + $0xb0] sm:$0xf]
    %v134 = vld [vmem:[#allocation2 + $0xb4] sm:$0xf]
    %v135 = vld [vmem:[#allocation2 + $0xb8] sm:$0xf]
    %v136 = vld [vmem:[#allocation2 + $0xbc] sm:$0xf]
    %v137 = vld [vmem:[#allocation2 + $0xc0] sm:$0xf]
    %v138 = vld [vmem:[#allocation2 + $0xc4] sm:$0xf]
    %v139 = vld [vmem:[#allocation2 + $0xc8] sm:$0xf]
    %v140 = vld [vmem:[#allocation2 + $0xcc] sm:$0xf]
    %v141 = vld [vmem:[#allocation2 + $0xd0] sm:$0xf]
    %v142 = vld [vmem:[#allocation2 + $0xd4] sm:$0xf]
    %v143 = vld [vmem:[#allocation2 + $0xd8] sm:$0xf]
    %v144 = vld [vmem:[#allocation2 + $0xdc] sm:$0xf]
    %v145 = vld [vmem:[#allocation2 + $0xe0] sm:$0xf]
    %v146 = vld [vmem:[#allocation2 + $0xe4] sm:$0xf]
    %v147 = vld [vmem:[#allocation2 + $0xe8] sm:$0xf]
    %v148 = vld [vmem:[#allocation2 + $0xec] sm:$0xf]
    %v149 = vld [vmem:[#allocation2 + $0xf0] sm:$0xf]
    %v150 = vld [vmem:[#allocation2 + $0xf4] sm:$0xf]
    %v151 = vld [vmem:[#allocation2 + $0xf8] sm:$0xf]
    %v152 = vld [vmem:[#allocation2 + $0xfc] sm:$0xf]
    %v153 = vld [vmem:[#allocation2 + $0x100] sm:$0xf]
    %v154 = vld [vmem:[#allocation2 + $0x104] sm:$0xf]
    %v155 = vld [vmem:[#allocation2 + $0x108] sm:$0xf]
    %v156 = vld [vmem:[#allocation2 + $0x10c] sm:$0xf]
    %v157 = vld [vmem:[#allocation2 + $0x110] sm:$0xf]
    %v158 = vld [vmem:[#allocation2 + $0x114] sm:$0xf]
    %v159 = vld [vmem:[#allocation2 + $0x118] sm:$0xf]
    %v160 = vld [vmem:[#allocation2 + $0x11c] sm:$0xf]
    %v161 = vld [vmem:[#allocation2 + $0x120] sm:$0xf]
    %v162 = vld [vmem:[#allocation2 + $0x124] sm:$0xf]
    %v163 = vld [vmem:[#allocation2 + $0x128] sm:$0xf]
    %v164 = vld [vmem:[#allocation2 + $0x12c] sm:$0xf]
    %v165 = vld [vmem:[#allocation2 + $0x130] sm:$0xf]
    %v166 = vld [vmem:[#allocation2 + $0x134] sm:$0xf]
    %v167 = vld [vmem:[#allocation2 + $0x138] sm:$0xf]
    %v168 = vld [vmem:[#allocation2 + $0x13c] sm:$0xf]
    %v169 = vld [vmem:[#allocation2 + $0x140] sm:$0xf]
    %v170 = vld [vmem:[#allocation2 + $0x144] sm:$0xf]
    %v171 = vld [vmem:[#allocation2 + $0x148] sm:$0xf]
    %v172 = vld [vmem:[#allocation2 + $0x14c] sm:$0xf]
    %v173 = vld [vmem:[#allocation2 + $0x150] sm:$0xf]
    %v174 = vld [vmem:[#allocation2 + $0x154] sm:$0xf]
    %v175 = vld [vmem:[#allocation2 + $0x158] sm:$0xf]
    %v176 = vld [vmem:[#allocation2 + $0x15c] sm:$0xf]
    %v177 = vld [vmem:[#allocation2 + $0x160] sm:$0xf]
    %v178 = vld [vmem:[#allocation2 + $0x164] sm:$0xf]
    %v179 = vld [vmem:[#allocation2 + $0x168] sm:$0xf]
    %v180 = vld [vmem:[#allocation2 + $0x16c] sm:$0xf]
    %v181 = vld [vmem:[#allocation2 + $0x170] sm:$0xf]
    %v182 = vld [vmem:[#allocation2 + $0x174] sm:$0xf]
    %v183 = vld [vmem:[#allocation2 + $0x178] sm:$0xf]
    %v184 = vld [vmem:[#allocation2 + $0x17c] sm:$0xf]
    %v185 = vld [vmem:[#allocation2 + $0x180] sm:$0xf]
    %v186 = vld [vmem:[#allocation2 + $0x184] sm:$0xf]
    %v187 = vld [vmem:[#allocation2 + $0x188] sm:$0xf]
    %v188 = vld [vmem:[#allocation2 + $0x18c] sm:$0xf]
    %v189 = vld [vmem:[#allocation2 + $0x190] sm:$0xf]
    %v190 = vld [vmem:[#allocation2 + $0x194] sm:$0xf]
    %v191 = vld [vmem:[#allocation2 + $0x198] sm:$0xf]
    %v192 = vld [vmem:[#allocation2 + $0x19c] sm:$0xf]
    %v193 = vld [vmem:[#allocation2 + $0x1a0] sm:$0xf]
    %v194 = vld [vmem:[#allocation2 + $0x1a4] sm:$0xf]
    %v195 = vld [vmem:[#allocation2 + $0x1a8] sm:$0xf]
    %v196 = vld [vmem:[#allocation2 + $0x1ac] sm:$0xf]
    %v197 = vld [vmem:[#allocation2 + $0x1b0] sm:$0xf]
    %v198 = vld [vmem:[#allocation2 + $0x1b4] sm:$0xf]
    %v199 = vld [vmem:[#allocation2 + $0x1b8] sm:$0xf]
    %v200 = vld [vmem:[#allocation2 + $0x1bc] sm:$0xf]
    %v201 = vld [vmem:[#allocation2 + $0x1c0] sm:$0xf]
    %v202 = vld [vmem:[#allocation2 + $0x1c4] sm:$0xf]
    %v203 = vld [vmem:[#allocation2 + $0x1c8] sm:$0xf]
    %v204 = vld [vmem:[#allocation2 + $0x1cc] sm:$0xf]
    %v205 = vld [vmem:[#allocation2 + $0x1d0] sm:$0xf]
    %v206 = vld [vmem:[#allocation2 + $0x1d4] sm:$0xf]
    %v207 = vld [vmem:[#allocation2 + $0x1d8] sm:$0xf]
    %v208 = vld [vmem:[#allocation2 + $0x1dc] sm:$0xf]
    %v209 = vld [vmem:[#allocation2 + $0x1e0] sm:$0xf]
    %v210 = vld [vmem:[#allocation2 + $0x1e4] sm:$0xf]
    %v211 = vld [vmem:[#allocation2 + $0x1e8] sm:$0xf]
    %v212 = vld [vmem:[#allocation2 + $0x1ec] sm:$0xf]
    %v213 = vld [vmem:[#allocation2 + $0x1f0] sm:$0xf]
    %v214 = vld [vmem:[#allocation2 + $0x1f4] sm:$0xf]
    %v215 = vld [vmem:[#allocation2 + $0x1f8] sm:$0xf]
    %v216 = vld [vmem:[#allocation2 + $0x1fc] sm:$0xf]
    %v217 = vld [vmem:[#allocation2 + $0x200] sm:$0xf]
    %v218 = vld [vmem:[#allocation2 + $0x204] sm:$0xf]
    %v219 = vld [vmem:[#allocation2 + $0x208] sm:$0xf]
    %v220 = vld [vmem:[#allocation2 + $0x20c] sm:$0xf]
    %v221 = vld [vmem:[#allocation2 + $0x210] sm:$0xf]
    %v222 = vld [vmem:[#allocation2 + $0x214] sm:$0xf]
    %v223 = vld [vmem:[#allocation2 + $0x218] sm:$0xf]
    %v224 = vld [vmem:[#allocation2 + $0x21c] sm:$0xf]
    %v225 = vld [vmem:[#allocation2 + $0x220] sm:$0xf]
    %v226 = vld [vmem:[#allocation2 + $0x224] sm:$0xf]
    %v227 = vld [vmem:[#allocation2 + $0x228] sm:$0xf]
    %v228 = vld [vmem:[#allocation2 + $0x22c] sm:$0xf]
    %v229 = vld [vmem:[#allocation2 + $0x230] sm:$0xf]
    %v230 = vld [vmem:[#allocation2 + $0x234] sm:$0xf]
    %v231 = vld [vmem:[#allocation2 + $0x238] sm:$0xf]
    %v232 = vld [vmem:[#allocation2 + $0x23c] sm:$0xf]
    %v233 = vld [vmem:[#allocation2 + $0x240] sm:$0xf]
    %v234 = vld [vmem:[#allocation2 + $0x244] sm:$0xf]
    %v235 = vld [vmem:[#allocation2 + $0x248] sm:$0xf]
    %v236 = vld [vmem:[#allocation2 + $0x24c] sm:$0xf]
    %v237 = vld [vmem:[#allocation2 + $0x250] sm:$0xf]
    %v238 = vld [vmem:[#allocation2 + $0x254] sm:$0xf]
    %v239 = vld [vmem:[#allocation2 + $0x258] sm:$0xf]
    %v240 = vld [vmem:[#allocation2 + $0x25c] sm:$0xf]
    %v241 = vld [vmem:[#allocation2 + $0x260] sm:$0xf]
    %v242 = vld [vmem:[#allocation2 + $0x264] sm:$0xf]
    %v243 = vld [vmem:[#allocation2 + $0x268] sm:$0xf]
    %v244 = vld [vmem:[#allocation2 + $0x26c] sm:$0xf]
    %v245 = vld [vmem:[#allocation2 + $0x270] sm:$0xf]
    %v246 = vld [vmem:[#allocation2 + $0x274] sm:$0xf]
    %v247 = vld [vmem:[#allocation2 + $0x278] sm:$0xf]
    %v248 = vld [vmem:[#allocation2 + $0x27c] sm:$0xf]
    %v249 = vld [vmem:[#allocation2 + $0x280] sm:$0xf]
    %v250 = vld [vmem:[#allocation2 + $0x284] sm:$0xf]
    %v251 = vld [vmem:[#allocation2 + $0x288] sm:$0xf]
    %v252 = vld [vmem:[#allocation2 + $0x28c] sm:$0xf]
    %v253 = vld [vmem:[#allocation2 + $0x290] sm:$0xf]
    %v254 = vld [vmem:[#allocation2 + $0x294] sm:$0xf]
    %v255 = vld [vmem:[#allocation2 + $0x298] sm:$0xf]
    %v256 = vld [vmem:[#allocation2 + $0x29c] sm:$0xf]
    %v257 = vld [vmem:[#allocation2 + $0x2a0] sm:$0xf]
    %v258 = vld [vmem:[#allocation2 + $0x2a4] sm:$0xf]
    %v259 = vld [vmem:[#allocation2 + $0x2a8] sm:$0xf]
    %v260 = vld [vmem:[#allocation2 + $0x2ac] sm:$0xf]
    %v261 = vld [vmem:[#allocation2 + $0x2b0] sm:$0xf]
    %v262 = vld [vmem:[#allocation2 + $0x2b4] sm:$0xf]
    %v263 = vld [vmem:[#allocation2 + $0x2b8] sm:$0xf]
    %v264 = vld [vmem:[#allocation2 + $0x2bc] sm:$0xf]
    %v265 = vld [vmem:[#allocation2 + $0x2c0] sm:$0xf]
    %v266 = vld [vmem:[#allocation2 + $0x2c4] sm:$0xf]
    %v267 = vld [vmem:[#allocation2 + $0x2c8] sm:$0xf]
    %v268 = vld [vmem:[#allocation2 + $0x2cc] sm:$0xf]
    %v269 = vld [vmem:[#allocation2 + $0x2d0] sm:$0xf]
    %v270 = vld [vmem:[#allocation2 + $0x2d4] sm:$0xf]
    %v271 = vld [vmem:[#allocation2 + $0x2d8] sm:$0xf]
    %v272 = vld [vmem:[#allocation2 + $0x2dc] sm:$0xf]
    %v273 = vld [vmem:[#allocation2 + $0x2e0] sm:$0xf]
    %v274 = vld [vmem:[#allocation2 + $0x2e4] sm:$0xf]
    %v275 = vld [vmem:[#allocation2 + $0x2e8] sm:$0xf]
    %v276 = vld [vmem:[#allocation2 + $0x2ec] sm:$0xf]
    %v277 = vld [vmem:[#allocation2 + $0x2f0] sm:$0xf]
    %v278 = vld [vmem:[#allocation2 + $0x2f4] sm:$0xf]
    %v279 = vld [vmem:[#allocation2 + $0x2f8] sm:$0xf]
    %v280 = vld [vmem:[#allocation2 + $0x2fc] sm:$0xf]
    %v281 = vld [vmem:[#allocation2 + $0x300] sm:$0xf]
    %v282 = vld [vmem:[#allocation2 + $0x304] sm:$0xf]
    %v283 = vld [vmem:[#allocation2 + $0x308] sm:$0xf]
    %v284 = vld [vmem:[#allocation2 + $0x30c] sm:$0xf]
    %v285 = vld [vmem:[#allocation2 + $0x310] sm:$0xf]
    %v286 = vld [vmem:[#allocation2 + $0x314] sm:$0xf]
    %v287 = vld [vmem:[#allocation2 + $0x318] sm:$0xf]
    %v288 = vld [vmem:[#allocation2 + $0x31c] sm:$0xf]
    %v289 = vld [vmem:[#allocation2 + $0x320] sm:$0xf]
    %v290 = vld [vmem:[#allocation2 + $0x324] sm:$0xf]
    %v291 = vld [vmem:[#allocation2 + $0x328] sm:$0xf]
    %v292 = vld [vmem:[#allocation2 + $0x32c] sm:$0xf]
    %v293 = vld [vmem:[#allocation2 + $0x330] sm:$0xf]
    %v294 = vld [vmem:[#allocation2 + $0x334] sm:$0xf]
    %v295 = vld [vmem:[#allocation2 + $0x338] sm:$0xf]
    %v296 = vld [vmem:[#allocation2 + $0x33c] sm:$0xf]
    %v297 = vld [vmem:[#allocation2 + $0x340] sm:$0xf]
    %v298 = vld [vmem:[#allocation2 + $0x344] sm:$0xf]
    %v299 = vld [vmem:[#allocation2 + $0x348] sm:$0xf]
    %v300 = vld [vmem:[#allocation2 + $0x34c] sm:$0xf]
    %v301 = vld [vmem:[#allocation2 + $0x350] sm:$0xf]
    %v302 = vld [vmem:[#allocation2 + $0x354] sm:$0xf]
    %v303 = vld [vmem:[#allocation2 + $0x358] sm:$0xf]
    %v304 = vld [vmem:[#allocation2 + $0x35c] sm:$0xf]
    %v305 = vld [vmem:[#allocation2 + $0x360] sm:$0xf]
    %v306 = vld [vmem:[#allocation2 + $0x364] sm:$0xf]
    %v307 = vld [vmem:[#allocation2 + $0x368] sm:$0xf]
    %v308 = vld [vmem:[#allocation2 + $0x36c] sm:$0xf]
    %v309 = vld [vmem:[#allocation2 + $0x370] sm:$0xf]
    %v310 = vld [vmem:[#allocation2 + $0x374] sm:$0xf]
    %v311 = vld [vmem:[#allocation2 + $0x378] sm:$0xf]
    %v312 = vld [vmem:[#allocation2 + $0x37c] sm:$0xf]
    %v313 = vld [vmem:[#allocation2 + $0x380] sm:$0xf]
    %v314 = vld [vmem:[#allocation2 + $0x384] sm:$0xf]
    %v315 = vld [vmem:[#allocation2 + $0x388] sm:$0xf]
    %v316 = vld [vmem:[#allocation2 + $0x38c] sm:$0xf]
    %v317 = vld [vmem:[#allocation2 + $0x390] sm:$0xf]
    %v318 = vld [vmem:[#allocation2 + $0x394] sm:$0xf]
    %v319 = vld [vmem:[#allocation2 + $0x398] sm:$0xf]
    %v320 = vld [vmem:[#allocation2 + $0x39c] sm:$0xf]
    %v321 = vld [vmem:[#allocation2 + $0x3a0] sm:$0xf]
    %v322 = vld [vmem:[#allocation2 + $0x3a4] sm:$0xf]
    %v323 = vld [vmem:[#allocation2 + $0x3a8] sm:$0xf]
    %v324 = vld [vmem:[#allocation2 + $0x3ac] sm:$0xf]
    %v325 = vld [vmem:[#allocation2 + $0x3b0] sm:$0xf]
    %v326 = vld [vmem:[#allocation2 + $0x3b4] sm:$0xf]
    %v327 = vld [vmem:[#allocation2 + $0x3b8] sm:$0xf]
    %v328 = vld [vmem:[#allocation2 + $0x3bc] sm:$0xf]
    %v329 = vld [vmem:[#allocation2 + $0x3c0] sm:$0xf]
    %v330 = vld [vmem:[#allocation2 + $0x3c4] sm:$0xf]
    %v331 = vld [vmem:[#allocation2 + $0x3c8] sm:$0xf]
    %v332 = vld [vmem:[#allocation2 + $0x3cc] sm:$0xf]
    %v333 = vld [vmem:[#allocation2 + $0x3d0] sm:$0xf]
    %v334 = vld [vmem:[#allocation2 + $0x3d4] sm:$0xf]
    %v335 = vld [vmem:[#allocation2 + $0x3d8] sm:$0xf]
    %v336 = vld [vmem:[#allocation2 + $0x3dc] sm:$0xf]
    %v337 = vld [vmem:[#allocation2 + $0x3e0] sm:$0xf]
    %v338 = vld [vmem:[#allocation2 + $0x3e4] sm:$0xf]
    %v339 = vld [vmem:[#allocation2 + $0x3e8] sm:$0xf]
    %v340 = vld [vmem:[#allocation2 + $0x3ec] sm:$0xf]
    %v341 = vld [vmem:[#allocation2 + $0x3f0] sm:$0xf]
    %v342 = vld [vmem:[#allocation2 + $0x3f4] sm:$0xf]
    %v343 = vld [vmem:[#allocation2 + $0x3f8] sm:$0xf]
    %v344 = vld [vmem:[#allocation2 + $0x3fc] sm:$0xf]
    %v345 = vld [vmem:[#allocation5] sm:$0xf]
    %v346 = vld [vmem:[#allocation5 + $0x4] sm:$0xf]
    %v347 = vld [vmem:[#allocation5 + $0x8] sm:$0xf]
    %v348 = vld [vmem:[#allocation5 + $0xc] sm:$0x3]
    %v349 = vld [vmem:[#allocation7] sm:$0x1]
    %v351 = vlaneseq
    %v352 = vshrl.u32 %v351, 7
    %v353 = vsub.s32 0, %v352
    %v354 = vrot.slane %v349, %v353
    %v612 = vunpack.c.l.b16 %v89
    %v613 = vunpack.c.l.b16 %v90
    %v614 = vunpack.c.l.b16 %v91
    %v615 = vunpack.c.l.b16 %v92
    %v616 = vunpack.c.l.b16 %v93
    %v617 = vunpack.c.l.b16 %v94
    %v618 = vunpack.c.l.b16 %v95
    %v619 = vunpack.c.l.b16 %v96
    %v620 = vunpack.c.l.b16 %v97
    %v621 = vunpack.c.l.b16 %v98
    %v622 = vunpack.c.l.b16 %v99
    %v623 = vunpack.c.l.b16 %v100
    %v624 = vunpack.c.l.b16 %v101
    %v625 = vunpack.c.l.b16 %v102
    %v626 = vunpack.c.l.b16 %v103
    %v627 = vunpack.c.l.b16 %v104
    %v628 = vunpack.c.l.b16 %v105
    %v629 = vunpack.c.l.b16 %v106
    %v630 = vunpack.c.l.b16 %v107
    %v631 = vunpack.c.l.b16 %v108
    %v632 = vunpack.c.l.b16 %v109
    %v633 = vunpack.c.l.b16 %v110
    %v634 = vunpack.c.l.b16 %v111
    %v635 = vunpack.c.l.b16 %v112
    %v636 = vunpack.c.l.b16 %v113
    %v637 = vunpack.c.l.b16 %v114
    %v638 = vunpack.c.l.b16 %v115
    %v639 = vunpack.c.l.b16 %v116
    %v640 = vunpack.c.l.b16 %v117
    %v641 = vunpack.c.l.b16 %v118
    %v642 = vunpack.c.l.b16 %v119
    %v643 = vunpack.c.l.b16 %v120
    %v644 = vunpack.c.l.b16 %v121
    %v645 = vunpack.c.l.b16 %v122
    %v646 = vunpack.c.l.b16 %v123
    %v647 = vunpack.c.l.b16 %v124
    %v648 = vunpack.c.l.b16 %v125
    %v649 = vunpack.c.l.b16 %v126
    %v650 = vunpack.c.l.b16 %v127
    %v651 = vunpack.c.l.b16 %v128
    %v652 = vunpack.c.l.b16 %v129
    %v653 = vunpack.c.l.b16 %v130
    %v654 = vunpack.c.l.b16 %v131
    %v655 = vunpack.c.l.b16 %v132
    %v656 = vunpack.c.l.b16 %v133
    %v657 = vunpack.c.l.b16 %v134
    %v658 = vunpack.c.l.b16 %v135
    %v659 = vunpack.c.l.b16 %v136
    %v660 = vunpack.c.l.b16 %v137
    %v661 = vunpack.c.l.b16 %v138
    %v662 = vunpack.c.l.b16 %v139
    %v663 = vunpack.c.l.b16 %v140
    %v664 = vunpack.c.l.b16 %v141
    %v665 = vunpack.c.l.b16 %v142
    %v666 = vunpack.c.l.b16 %v143
    %v667 = vunpack.c.l.b16 %v144
    %v668 = vunpack.c.l.b16 %v145
    %v669 = vunpack.c.l.b16 %v146
    %v670 = vunpack.c.l.b16 %v147
    %v671 = vunpack.c.l.b16 %v148
    %v672 = vunpack.c.l.b16 %v149
    %v673 = vunpack.c.l.b16 %v150
    %v674 = vunpack.c.l.b16 %v151
    %v675 = vunpack.c.l.b16 %v152
    %v676 = vunpack.c.l.b16 %v153
    %v677 = vunpack.c.l.b16 %v154
    %v678 = vunpack.c.l.b16 %v155
    %v679 = vunpack.c.l.b16 %v156
    %v680 = vunpack.c.l.b16 %v157
    %v681 = vunpack.c.l.b16 %v158
    %v682 = vunpack.c.l.b16 %v159
    %v683 = vunpack.c.l.b16 %v160
    %v684 = vunpack.c.l.b16 %v161
    %v685 = vunpack.c.l.b16 %v162
    %v686 = vunpack.c.l.b16 %v163
    %v687 = vunpack.c.l.b16 %v164
    %v688 = vunpack.c.l.b16 %v165
    %v689 = vunpack.c.l.b16 %v166
    %v690 = vunpack.c.l.b16 %v167
    %v691 = vunpack.c.l.b16 %v168
    %v692 = vunpack.c.l.b16 %v169
    %v693 = vunpack.c.l.b16 %v170
    %v694 = vunpack.c.l.b16 %v171
    %v695 = vunpack.c.l.b16 %v172
    %v696 = vunpack.c.l.b16 %v173
    %v697 = vunpack.c.l.b16 %v174
    %v698 = vunpack.c.l.b16 %v175
    %v699 = vunpack.c.l.b16 %v176
    %v700 = vunpack.c.l.b16 %v177
    %v701 = vunpack.c.l.b16 %v178
    %v702 = vunpack.c.l.b16 %v179
    %v703 = vunpack.c.l.b16 %v180
    %v704 = vunpack.c.l.b16 %v181
    %v705 = vunpack.c.l.b16 %v182
    %v706 = vunpack.c.l.b16 %v183
    %v707 = vunpack.c.l.b16 %v184
    %v708 = vunpack.c.l.b16 %v185
    %v709 = vunpack.c.l.b16 %v186
    %v710 = vunpack.c.l.b16 %v187
    %v711 = vunpack.c.l.b16 %v188
    %v712 = vunpack.c.l.b16 %v189
    %v713 = vunpack.c.l.b16 %v190
    %v714 = vunpack.c.l.b16 %v191
    %v715 = vunpack.c.l.b16 %v192
    %v716 = vunpack.c.l.b16 %v193
    %v717 = vunpack.c.l.b16 %v194
    %v718 = vunpack.c.l.b16 %v195
    %v719 = vunpack.c.l.b16 %v196
    %v720 = vunpack.c.l.b16 %v197
    %v721 = vunpack.c.l.b16 %v198
    %v722 = vunpack.c.l.b16 %v199
    %v723 = vunpack.c.l.b16 %v200
    %v724 = vunpack.c.l.b16 %v201
    %v725 = vunpack.c.l.b16 %v202
    %v726 = vunpack.c.l.b16 %v203
    %v727 = vunpack.c.l.b16 %v204
    %v728 = vunpack.c.l.b16 %v205
    %v729 = vunpack.c.l.b16 %v206
    %v730 = vunpack.c.l.b16 %v207
    %v731 = vunpack.c.l.b16 %v208
    %v732 = vunpack.c.l.b16 %v209
    %v733 = vunpack.c.l.b16 %v210
    %v734 = vunpack.c.l.b16 %v211
    %v735 = vunpack.c.l.b16 %v212
    %v736 = vunpack.c.l.b16 %v213
    %v737 = vunpack.c.l.b16 %v214
    %v738 = vunpack.c.l.b16 %v215
    %v739 = vunpack.c.l.b16 %v216
    %v740 = vunpack.c.l.b16 %v217
    %v741 = vunpack.c.l.b16 %v218
    %v742 = vunpack.c.l.b16 %v219
    %v743 = vunpack.c.l.b16 %v220
    %v744 = vunpack.c.l.b16 %v221
    %v745 = vunpack.c.l.b16 %v222
    %v746 = vunpack.c.l.b16 %v223
    %v747 = vunpack.c.l.b16 %v224
    %v748 = vunpack.c.l.b16 %v225
    %v749 = vunpack.c.l.b16 %v226
    %v750 = vunpack.c.l.b16 %v227
    %v751 = vunpack.c.l.b16 %v228
    %v752 = vunpack.c.l.b16 %v229
    %v753 = vunpack.c.l.b16 %v230
    %v754 = vunpack.c.l.b16 %v231
    %v755 = vunpack.c.l.b16 %v232
    %v756 = vunpack.c.l.b16 %v233
    %v757 = vunpack.c.l.b16 %v234
    %v758 = vunpack.c.l.b16 %v235
    %v759 = vunpack.c.l.b16 %v236
    %v760 = vunpack.c.l.b16 %v237
    %v761 = vunpack.c.l.b16 %v238
    %v762 = vunpack.c.l.b16 %v239
    %v763 = vunpack.c.l.b16 %v240
    %v764 = vunpack.c.l.b16 %v241
    %v765 = vunpack.c.l.b16 %v242
    %v766 = vunpack.c.l.b16 %v243
    %v767 = vunpack.c.l.b16 %v244
    %v768 = vunpack.c.l.b16 %v245
    %v769 = vunpack.c.l.b16 %v246
    %v770 = vunpack.c.l.b16 %v247
    %v771 = vunpack.c.l.b16 %v248
    %v772 = vunpack.c.l.b16 %v249
    %v773 = vunpack.c.l.b16 %v250
    %v774 = vunpack.c.l.b16 %v251
    %v775 = vunpack.c.l.b16 %v252
    %v776 = vunpack.c.l.b16 %v253
    %v777 = vunpack.c.l.b16 %v254
    %v778 = vunpack.c.l.b16 %v255
    %v779 = vunpack.c.l.b16 %v256
    %v780 = vunpack.c.l.b16 %v257
    %v781 = vunpack.c.l.b16 %v258
    %v782 = vunpack.c.l.b16 %v259
    %v783 = vunpack.c.l.b16 %v260
    %v784 = vunpack.c.l.b16 %v261
    %v785 = vunpack.c.l.b16 %v262
    %v786 = vunpack.c.l.b16 %v263
    %v787 = vunpack.c.l.b16 %v264
    %v788 = vunpack.c.l.b16 %v265
    %v789 = vunpack.c.l.b16 %v266
    %v790 = vunpack.c.l.b16 %v267
    %v791 = vunpack.c.l.b16 %v268
    %v792 = vunpack.c.l.b16 %v269
    %v793 = vunpack.c.l.b16 %v270
    %v794 = vunpack.c.l.b16 %v271
    %v795 = vunpack.c.l.b16 %v272
    %v796 = vunpack.c.l.b16 %v273
    %v797 = vunpack.c.l.b16 %v274
    %v798 = vunpack.c.l.b16 %v275
    %v799 = vunpack.c.l.b16 %v276
    %v800 = vunpack.c.l.b16 %v277
    %v801 = vunpack.c.l.b16 %v278
    %v802 = vunpack.c.l.b16 %v279
    %v803 = vunpack.c.l.b16 %v280
    %v804 = vunpack.c.l.b16 %v281
    %v805 = vunpack.c.l.b16 %v282
    %v806 = vunpack.c.l.b16 %v283
    %v807 = vunpack.c.l.b16 %v284
    %v808 = vunpack.c.l.b16 %v285
    %v809 = vunpack.c.l.b16 %v286
    %v810 = vunpack.c.l.b16 %v287
    %v811 = vunpack.c.l.b16 %v288
    %v812 = vunpack.c.l.b16 %v289
    %v813 = vunpack.c.l.b16 %v290
    %v814 = vunpack.c.l.b16 %v291
    %v815 = vunpack.c.l.b16 %v292
    %v816 = vunpack.c.l.b16 %v293
    %v817 = vunpack.c.l.b16 %v294
    %v818 = vunpack.c.l.b16 %v295
    %v819 = vunpack.c.l.b16 %v296
    %v820 = vunpack.c.l.b16 %v297
    %v821 = vunpack.c.l.b16 %v298
    %v822 = vunpack.c.l.b16 %v299
    %v823 = vunpack.c.l.b16 %v300
    %v824 = vunpack.c.l.b16 %v301
    %v825 = vunpack.c.l.b16 %v302
    %v826 = vunpack.c.l.b16 %v303
    %v827 = vunpack.c.l.b16 %v304
    %v828 = vunpack.c.l.b16 %v305
    %v829 = vunpack.c.l.b16 %v306
    %v830 = vunpack.c.l.b16 %v307
    %v831 = vunpack.c.l.b16 %v308
    %v832 = vunpack.c.l.b16 %v309
    %v833 = vunpack.c.l.b16 %v310
    %v834 = vunpack.c.l.b16 %v311
    %v835 = vunpack.c.l.b16 %v312
    %v836 = vunpack.c.l.b16 %v313
    %v837 = vunpack.c.l.b16 %v314
    %v838 = vunpack.c.l.b16 %v315
    %v839 = vunpack.c.l.b16 %v316
    %v840 = vunpack.c.l.b16 %v317
    %v841 = vunpack.c.l.b16 %v318
    %v842 = vunpack.c.l.b16 %v319
    %v843 = vunpack.c.l.b16 %v320
    %v844 = vunpack.c.l.b16 %v321
    %v845 = vunpack.c.l.b16 %v322
    %v846 = vunpack.c.l.b16 %v323
    %v847 = vunpack.c.l.b16 %v324
    %v848 = vunpack.c.l.b16 %v325
    %v849 = vunpack.c.l.b16 %v326
    %v850 = vunpack.c.l.b16 %v327
    %v851 = vunpack.c.l.b16 %v328
    %v852 = vunpack.c.l.b16 %v329
    %v853 = vunpack.c.l.b16 %v330
    %v854 = vunpack.c.l.b16 %v331
    %v855 = vunpack.c.l.b16 %v332
    %v856 = vunpack.c.l.b16 %v333
    %v857 = vunpack.c.l.b16 %v334
    %v858 = vunpack.c.l.b16 %v335
    %v859 = vunpack.c.l.b16 %v336
    %v860 = vunpack.c.l.b16 %v337
    %v861 = vunpack.c.l.b16 %v338
    %v862 = vunpack.c.l.b16 %v339
    %v863 = vunpack.c.l.b16 %v340
    %v864 = vunpack.c.l.b16 %v341
    %v865 = vunpack.c.l.b16 %v342
    %v866 = vunpack.c.l.b16 %v343
    %v867 = vunpack.c.l.b16 %v344
    %v868 = vpack.c.b16 %v613, %v612
    %v869 = vpack.c.b16 %v615, %v614
    %v870 = vpack.c.b16 %v617, %v616
    %v871 = vpack.c.b16 %v619, %v618
    %v872 = vpack.c.b16 %v621, %v620
    %v873 = vpack.c.b16 %v623, %v622
    %v874 = vpack.c.b16 %v625, %v624
    %v875 = vpack.c.b16 %v627, %v626
    %v876 = vpack.c.b16 %v629, %v628
    %v877 = vpack.c.b16 %v631, %v630
    %v878 = vpack.c.b16 %v633, %v632
    %v879 = vpack.c.b16 %v635, %v634
    %v880 = vpack.c.b16 %v637, %v636
    %v881 = vpack.c.b16 %v639, %v638
    %v882 = vpack.c.b16 %v641, %v640
    %v883 = vpack.c.b16 %v643, %v642
    %v884 = vpack.c.b16 %v645, %v644
    %v885 = vpack.c.b16 %v647, %v646
    %v886 = vpack.c.b16 %v649, %v648
    %v887 = vpack.c.b16 %v651, %v650
    %v888 = vpack.c.b16 %v653, %v652
    %v889 = vpack.c.b16 %v655, %v654
    %v890 = vpack.c.b16 %v657, %v656
    %v891 = vpack.c.b16 %v659, %v658
    %v892 = vpack.c.b16 %v661, %v660
    %v893 = vpack.c.b16 %v663, %v662
    %v894 = vpack.c.b16 %v665, %v664
    %v895 = vpack.c.b16 %v667, %v666
    %v896 = vpack.c.b16 %v669, %v668
    %v897 = vpack.c.b16 %v671, %v670
    %v898 = vpack.c.b16 %v673, %v672
    %v899 = vpack.c.b16 %v675, %v674
    %v900 = vpack.c.b16 %v677, %v676
    %v901 = vpack.c.b16 %v679, %v678
    %v902 = vpack.c.b16 %v681, %v680
    %v903 = vpack.c.b16 %v683, %v682
    %v904 = vpack.c.b16 %v685, %v684
    %v905 = vpack.c.b16 %v687, %v686
    %v906 = vpack.c.b16 %v689, %v688
    %v907 = vpack.c.b16 %v691, %v690
    %v908 = vpack.c.b16 %v693, %v692
    %v909 = vpack.c.b16 %v695, %v694
    %v910 = vpack.c.b16 %v697, %v696
    %v911 = vpack.c.b16 %v699, %v698
    %v912 = vpack.c.b16 %v701, %v700
    %v913 = vpack.c.b16 %v703, %v702
    %v914 = vpack.c.b16 %v705, %v704
    %v915 = vpack.c.b16 %v707, %v706
    %v916 = vpack.c.b16 %v709, %v708
    %v917 = vpack.c.b16 %v711, %v710
    %v918 = vpack.c.b16 %v713, %v712
    %v919 = vpack.c.b16 %v715, %v714
    %v920 = vpack.c.b16 %v717, %v716
    %v921 = vpack.c.b16 %v719, %v718
    %v922 = vpack.c.b16 %v721, %v720
    %v923 = vpack.c.b16 %v723, %v722
    %v924 = vpack.c.b16 %v725, %v724
    %v925 = vpack.c.b16 %v727, %v726
    %v926 = vpack.c.b16 %v729, %v728
    %v927 = vpack.c.b16 %v731, %v730
    %v928 = vpack.c.b16 %v733, %v732
    %v929 = vpack.c.b16 %v735, %v734
    %v930 = vpack.c.b16 %v737, %v736
    %v931 = vpack.c.b16 %v739, %v738
    %v932 = vpack.c.b16 %v741, %v740
    %v933 = vpack.c.b16 %v743, %v742
    %v934 = vpack.c.b16 %v745, %v744
    %v935 = vpack.c.b16 %v747, %v746
    %v936 = vpack.c.b16 %v749, %v748
    %v937 = vpack.c.b16 %v751, %v750
    %v938 = vpack.c.b16 %v753, %v752
    %v939 = vpack.c.b16 %v755, %v754
    %v940 = vpack.c.b16 %v757, %v756
    %v941 = vpack.c.b16 %v759, %v758
    %v942 = vpack.c.b16 %v761, %v760
    %v943 = vpack.c.b16 %v763, %v762
    %v944 = vpack.c.b16 %v765, %v764
    %v945 = vpack.c.b16 %v767, %v766
    %v946 = vpack.c.b16 %v769, %v768
    %v947 = vpack.c.b16 %v771, %v770
    %v948 = vpack.c.b16 %v773, %v772
    %v949 = vpack.c.b16 %v775, %v774
    %v950 = vpack.c.b16 %v777, %v776
    %v951 = vpack.c.b16 %v779, %v778
    %v952 = vpack.c.b16 %v781, %v780
    %v953 = vpack.c.b16 %v783, %v782
    %v954 = vpack.c.b16 %v785, %v784
    %v955 = vpack.c.b16 %v787, %v786
    %v956 = vpack.c.b16 %v789, %v788
    %v957 = vpack.c.b16 %v791, %v790
    %v958 = vpack.c.b16 %v793, %v792
    %v959 = vpack.c.b16 %v795, %v794
    %v960 = vpack.c.b16 %v797, %v796
    %v961 = vpack.c.b16 %v799, %v798
    %v962 = vpack.c.b16 %v801, %v800
    %v963 = vpack.c.b16 %v803, %v802
    %v964 = vpack.c.b16 %v805, %v804
    %v965 = vpack.c.b16 %v807, %v806
    %v966 = vpack.c.b16 %v809, %v808
    %v967 = vpack.c.b16 %v811, %v810
    %v968 = vpack.c.b16 %v813, %v812
    %v969 = vpack.c.b16 %v815, %v814
    %v970 = vpack.c.b16 %v817, %v816
    %v971 = vpack.c.b16 %v819, %v818
    %v972 = vpack.c.b16 %v821, %v820
    %v973 = vpack.c.b16 %v823, %v822
    %v974 = vpack.c.b16 %v825, %v824
    %v975 = vpack.c.b16 %v827, %v826
    %v976 = vpack.c.b16 %v829, %v828
    %v977 = vpack.c.b16 %v831, %v830
    %v978 = vpack.c.b16 %v833, %v832
    %v979 = vpack.c.b16 %v835, %v834
    %v980 = vpack.c.b16 %v837, %v836
    %v981 = vpack.c.b16 %v839, %v838
    %v982 = vpack.c.b16 %v841, %v840
    %v983 = vpack.c.b16 %v843, %v842
    %v984 = vpack.c.b16 %v845, %v844
    %v985 = vpack.c.b16 %v847, %v846
    %v986 = vpack.c.b16 %v849, %v848
    %v987 = vpack.c.b16 %v851, %v850
    %v988 = vpack.c.b16 %v853, %v852
    %v989 = vpack.c.b16 %v855, %v854
    %v990 = vpack.c.b16 %v857, %v856
    %v991 = vpack.c.b16 %v859, %v858
    %v992 = vpack.c.b16 %v861, %v860
    %v993 = vpack.c.b16 %v863, %v862
    %v994 = vpack.c.b16 %v865, %v864
    %v995 = vpack.c.b16 %v867, %v866
    %v1000 = vunpack.c.l.b16 %v345
    %v1001 = vunpack.c.l.b16 %v346
    %v1002 = vunpack.c.l.b16 %v347
    %v1003 = vunpack.c.l.b16 %v348
    %v1004 = vpack.c.b16 %v1001, %v1000
    %v1005 = vpack.c.b16 %v1003, %v1002
    %vm1007 = vcmask 220160
    %v1009 = vsel %vm1007, %v868, 0
    %v1012 = vsel %vm1007, %v869, 0
    %v1015 = vsel %vm1007, %v870, 0
    %v1018 = vsel %vm1007, %v871, 0
    %v1021 = vsel %vm1007, %v872, 0
    %v1024 = vsel %vm1007, %v873, 0
    %v1027 = vsel %vm1007, %v874, 0
    %v1030 = vsel %vm1007, %v875, 0
    %v1033 = vsel %vm1007, %v876, 0
    %v1036 = vsel %vm1007, %v877, 0
    %v1039 = vsel %vm1007, %v878, 0
    %v1042 = vsel %vm1007, %v879, 0
    %v1045 = vsel %vm1007, %v880, 0
    %v1048 = vsel %vm1007, %v881, 0
    %v1051 = vsel %vm1007, %v882, 0
    %v1054 = vsel %vm1007, %v883, 0
    %v1057 = vsel %vm1007, %v884, 0
    %v1060 = vsel %vm1007, %v885, 0
    %v1063 = vsel %vm1007, %v886, 0
    %v1066 = vsel %vm1007, %v887, 0
    %v1069 = vsel %vm1007, %v888, 0
    %v1072 = vsel %vm1007, %v889, 0
    %v1075 = vsel %vm1007, %v890, 0
    %v1078 = vsel %vm1007, %v891, 0
    %v1081 = vsel %vm1007, %v892, 0
    %v1084 = vsel %vm1007, %v893, 0
    %v1087 = vsel %vm1007, %v894, 0
    %v1090 = vsel %vm1007, %v895, 0
    %v1093 = vsel %vm1007, %v896, 0
    %v1096 = vsel %vm1007, %v897, 0
    %v1099 = vsel %vm1007, %v898, 0
    %v1102 = vsel %vm1007, %v899, 0
    %v1105 = vsel %vm1007, %v900, 0
    %v1108 = vsel %vm1007, %v901, 0
    %v1111 = vsel %vm1007, %v902, 0
    %v1114 = vsel %vm1007, %v903, 0
    %v1117 = vsel %vm1007, %v904, 0
    %v1120 = vsel %vm1007, %v905, 0
    %v1123 = vsel %vm1007, %v906, 0
    %v1126 = vsel %vm1007, %v907, 0
    %v1129 = vsel %vm1007, %v908, 0
    %v1132 = vsel %vm1007, %v909, 0
    %v1135 = vsel %vm1007, %v910, 0
    %v1138 = vsel %vm1007, %v911, 0
    %v1141 = vsel %vm1007, %v912, 0
    %v1144 = vsel %vm1007, %v913, 0
    %v1147 = vsel %vm1007, %v914, 0
    %v1150 = vsel %vm1007, %v915, 0
    %v1153 = vsel %vm1007, %v916, 0
    %v1156 = vsel %vm1007, %v917, 0
    %v1159 = vsel %vm1007, %v918, 0
    %v1162 = vsel %vm1007, %v919, 0
    %v1165 = vsel %vm1007, %v920, 0
    %v1168 = vsel %vm1007, %v921, 0
    %v1171 = vsel %vm1007, %v922, 0
    %v1174 = vsel %vm1007, %v923, 0
    %v1177 = vsel %vm1007, %v924, 0
    %v1180 = vsel %vm1007, %v925, 0
    %v1183 = vsel %vm1007, %v926, 0
    %v1186 = vsel %vm1007, %v927, 0
    %v1189 = vsel %vm1007, %v928, 0
    %v1192 = vsel %vm1007, %v929, 0
    %v1195 = vsel %vm1007, %v930, 0
    %v1198 = vsel %vm1007, %v931, 0
    %v1201 = vsel %vm1007, %v932, 0
    %v1204 = vsel %vm1007, %v933, 0
    %v1207 = vsel %vm1007, %v934, 0
    %v1210 = vsel %vm1007, %v935, 0
    %v1213 = vsel %vm1007, %v936, 0
    %v1216 = vsel %vm1007, %v937, 0
    %v1219 = vsel %vm1007, %v938, 0
    %v1222 = vsel %vm1007, %v939, 0
    %v1225 = vsel %vm1007, %v940, 0
    %v1228 = vsel %vm1007, %v941, 0
    %v1231 = vsel %vm1007, %v942, 0
    %v1234 = vsel %vm1007, %v943, 0
    %v1237 = vsel %vm1007, %v944, 0
    %v1240 = vsel %vm1007, %v945, 0
    %v1243 = vsel %vm1007, %v946, 0
    %v1246 = vsel %vm1007, %v947, 0
    %v1249 = vsel %vm1007, %v948, 0
    %v1252 = vsel %vm1007, %v949, 0
    %v1255 = vsel %vm1007, %v950, 0
    %v1258 = vsel %vm1007, %v951, 0
    %v1261 = vsel %vm1007, %v952, 0
    %v1264 = vsel %vm1007, %v953, 0
    %v1267 = vsel %vm1007, %v954, 0
    %v1270 = vsel %vm1007, %v955, 0
    %v1273 = vsel %vm1007, %v956, 0
    %v1276 = vsel %vm1007, %v957, 0
    %v1279 = vsel %vm1007, %v958, 0
    %v1282 = vsel %vm1007, %v959, 0
    %v1285 = vsel %vm1007, %v960, 0
    %v1288 = vsel %vm1007, %v961, 0
    %v1291 = vsel %vm1007, %v962, 0
    %v1294 = vsel %vm1007, %v963, 0
    %v1297 = vsel %vm1007, %v964, 0
    %v1300 = vsel %vm1007, %v965, 0
    %v1303 = vsel %vm1007, %v966, 0
    %v1306 = vsel %vm1007, %v967, 0
    %v1309 = vsel %vm1007, %v968, 0
    %v1312 = vsel %vm1007, %v969, 0
    %v1315 = vsel %vm1007, %v970, 0
    %v1318 = vsel %vm1007, %v971, 0
    %v1321 = vsel %vm1007, %v972, 0
    %v1324 = vsel %vm1007, %v973, 0
    %v1327 = vsel %vm1007, %v974, 0
    %v1330 = vsel %vm1007, %v975, 0
    %v1333 = vsel %vm1007, %v976, 0
    %v1336 = vsel %vm1007, %v977, 0
    %v1339 = vsel %vm1007, %v978, 0
    %v1342 = vsel %vm1007, %v979, 0
    %v1345 = vsel %vm1007, %v980, 0
    %v1348 = vsel %vm1007, %v981, 0
    %v1351 = vsel %vm1007, %v982, 0
    %v1354 = vsel %vm1007, %v983, 0
    %v1357 = vsel %vm1007, %v984, 0
    %v1360 = vsel %vm1007, %v985, 0
    %v1363 = vsel %vm1007, %v986, 0
    %v1366 = vsel %vm1007, %v987, 0
    %v1369 = vsel %vm1007, %v988, 0
    %v1372 = vsel %vm1007, %v989, 0
    %v1375 = vsel %vm1007, %v990, 0
    %v1378 = vsel %vm1007, %v991, 0
    %v1381 = vsel %vm1007, %v992, 0
    %v1384 = vsel %vm1007, %v993, 0
    %v1387 = vsel %vm1007, %v994, 0
    %v1390 = vsel %vm1007, %v995, 0
    %vm1392 = vcmask 1044480
    %vm1393 = vcmask 1045504
    %v1394 = vsel %vm1392, 4294967295, 65535
    %v1395 = vsel %vm1393, %v1394, 0
    %v1397 = vand.u32 %v1005, %v1395
    %1399 = vmatprep.subr.bf16.mxu0 0
    %1400 = vmatpush1.bf16.msra.mxu0 %v1004
    %1401 = vmatprep.subr.bf16.mxu0 0
    %1402 = vmatpush1.bf16.msra.mxu0 %v1397
    %1403 = vmatprep.subr.bf16.mxu0 0
    %1404 = vmatpush1.bf16.msra.mxu0 0
    %1405 = vmatprep.subr.bf16.mxu0 0
    %1406 = vmatpush1.bf16.msra.mxu0 0
    %1407 = vmatprep.subr.bf16.mxu0 0
    %1408 = vmatpush1.bf16.msra.mxu0 0
    %1409 = vmatprep.subr.bf16.mxu0 0
    %1410 = vmatpush1.bf16.msra.mxu0 0
    %1411 = vmatprep.subr.bf16.mxu0 0
    %1412 = vmatpush1.bf16.msra.mxu0 0
    %1413 = vmatprep.subr.bf16.mxu0 0
    %1414 = vmatpush1.bf16.msra.mxu0 0
    %1415 = vmatprep.subr.bf16.mxu0 0
    %1416 = vmatpush1.bf16.msra.mxu0 0
    %1417 = vmatprep.subr.bf16.mxu0 0
    %1418 = vmatpush1.bf16.msra.mxu0 0
    %1419 = vmatprep.subr.bf16.mxu0 0
    %1420 = vmatpush1.bf16.msra.mxu0 0
    %1421 = vmatprep.subr.bf16.mxu0 0
    %1422 = vmatpush1.bf16.msra.mxu0 0
    %1423 = vmatprep.subr.bf16.mxu0 0
    %1424 = vmatpush1.bf16.msra.mxu0 0
    %1425 = vmatprep.subr.bf16.mxu0 0
    %1426 = vmatpush1.bf16.msra.mxu0 0
    %1427 = vmatprep.subr.bf16.mxu0 0
    %1428 = vmatpush1.bf16.msra.mxu0 0
    %1429 = vmatprep.subr.bf16.mxu0 0
    %1430 = vmatpush1.bf16.msra.mxu0 0
    %1431 = vmatprep.mubr.bf16.mxu0 0
    %1432 = vmatmul.mubr.bf16.gmra.mrb[0].mxu0 %v1009
    %v1433 = vpop.f32.mrb[0].mxu0
    %v1434 = vadd.f32 %v354, %v1433
    %v1435 = vpop.f32.mrb[0].mxu0
    %v1436 = vpop.f32.mrb[0].mxu0
    %v1437 = vadd.f32 %v354, %v1436
    %v1438 = vpop.f32.mrb[0].mxu0
    %1439 = vmatprep.mubr.bf16.mxu0 0
    %1440 = vmatmul.mubr.bf16.gmra.mrb[0].mxu0 %v1012
    %v1441 = vpop.f32.mrb[0].mxu0
    %v1442 = vadd.f32 %v354, %v1441
    %v1443 = vpop.f32.mrb[0].mxu0
    %v1444 = vpop.f32.mrb[0].mxu0
    %v1445 = vadd.f32 %v354, %v1444
    %v1446 = vpop.f32.mrb[0].mxu0
    %1447 = vmatprep.mubr.bf16.mxu0 0
    %1448 = vmatmul.mubr.bf16.gmra.mrb[0].mxu0 %v1015
    %v1449 = vpop.f32.mrb[0].mxu0
    %v1450 = vadd.f32 %v354, %v1449
    %v1451 = vpop.f32.mrb[0].mxu0
    %v1452 = vpop.f32.mrb[0].mxu0
    %v1453 = vadd.f32 %v354, %v1452
    %v1454 = vpop.f32.mrb[0].mxu0
    %1455 = vmatprep.mubr.bf16.mxu0 0
    %1456 = vmatmul.mubr.bf16.gmra.mrb[0].mxu0 %v1018
    %v1457 = vpop.f32.mrb[0].mxu0
    %v1458 = vadd.f32 %v354, %v1457
    %v1459 = vpop.f32.mrb[0].mxu0
    %v1460 = vpop.f32.mrb[0].mxu0
    %v1461 = vadd.f32 %v354, %v1460
    %v1462 = vpop.f32.mrb[0].mxu0
    %1463 = vmatprep.mubr.bf16.mxu0 0
    %1464 = vmatmul.mubr.bf16.gmra.mrb[0].mxu0 %v1021
    %v1465 = vpop.f32.mrb[0].mxu0
    %v1466 = vadd.f32 %v354, %v1465
    %v1467 = vpop.f32.mrb[0].mxu0
    %v1468 = vpop.f32.mrb[0].mxu0
    %v1469 = vadd.f32 %v354, %v1468
    %v1470 = vpop.f32.mrb[0].mxu0
    %1471 = vmatprep.mubr.bf16.mxu0 0
    %1472 = vmatmul.mubr.bf16.gmra.mrb[0].mxu0 %v1024
    %v1473 = vpop.f32.mrb[0].mxu0
    %v1474 = vadd.f32 %v354, %v1473
    %v1475 = vpop.f32.mrb[0].mxu0
    %v1476 = vpop.f32.mrb[0].mxu0
    %v1477 = vadd.f32 %v354, %v1476
    %v1478 = vpop.f32.mrb[0].mxu0
    %1479 = vmatprep.mubr.bf16.mxu0 0
    %1480 = vmatmul.mubr.bf16.gmra.mrb[0].mxu0 %v1027
    %v1481 = vpop.f32.mrb[0].mxu0
    %v1482 = vadd.f32 %v354, %v1481
    %v1483 = vpop.f32.mrb[0].mxu0
    %v1484 = vpop.f32.mrb[0].mxu0
    %v1485 = vadd.f32 %v354, %v1484
    %v1486 = vpop.f32.mrb[0].mxu0
    %1487 = vmatprep.mubr.bf16.mxu0 0
    %1488 = vmatmul.mubr.bf16.gmra.mrb[0].mxu0 %v1030
    %v1489 = vpop.f32.mrb[0].mxu0
    %v1490 = vadd.f32 %v354, %v1489
    %v1491 = vpop.f32.mrb[0].mxu0
    %v1492 = vpop.f32.mrb[0].mxu0
    %v1493 = vadd.f32 %v354, %v1492
    %v1494 = vpop.f32.mrb[0].mxu0
    %1495 = vmatprep.mubr.bf16.mxu0 0
    %1496 = vmatmul.mubr.bf16.gmra.mrb[0].mxu0 %v1033
    %v1497 = vpop.f32.mrb[0].mxu0
    %v1498 = vadd.f32 %v354, %v1497
    %v1499 = vpop.f32.mrb[0].mxu0
    %v1500 = vpop.f32.mrb[0].mxu0
    %v1501 = vadd.f32 %v354, %v1500
    %v1502 = vpop.f32.mrb[0].mxu0
    %1503 = vmatprep.mubr.bf16.mxu0 0
    %1504 = vmatmul.mubr.bf16.gmra.mrb[0].mxu0 %v1036
    %v1505 = vpop.f32.mrb[0].mxu0
    %v1506 = vadd.f32 %v354, %v1505
    %v1507 = vpop.f32.mrb[0].mxu0
    %v1508 = vpop.f32.mrb[0].mxu0
    %v1509 = vadd.f32 %v354, %v1508
    %v1510 = vpop.f32.mrb[0].mxu0
    %1511 = vmatprep.mubr.bf16.mxu0 0
    %1512 = vmatmul.mubr.bf16.gmra.mrb[0].mxu0 %v1039
    %v1513 = vpop.f32.mrb[0].mxu0
    %v1514 = vadd.f32 %v354, %v1513
    %v1515 = vpop.f32.mrb[0].mxu0
    %v1516 = vpop.f32.mrb[0].mxu0
    %v1517 = vadd.f32 %v354, %v1516
    %v1518 = vpop.f32.mrb[0].mxu0
    %1519 = vmatprep.mubr.bf16.mxu0 0
    %1520 = vmatmul.mubr.bf16.gmra.mrb[0].mxu0 %v1042
    %v1521 = vpop.f32.mrb[0].mxu0
    %v1522 = vadd.f32 %v354, %v1521
    %v1523 = vpop.f32.mrb[0].mxu0
    %v1524 = vpop.f32.mrb[0].mxu0
    %v1525 = vadd.f32 %v354, %v1524
    %v1526 = vpop.f32.mrb[0].mxu0
    %1527 = vmatprep.mubr.bf16.mxu0 0
    %1528 = vmatmul.mubr.bf16.gmra.mrb[0].mxu0 %v1045
    %v1529 = vpop.f32.mrb[0].mxu0
    %v1530 = vadd.f32 %v354, %v1529
    %v1531 = vpop.f32.mrb[0].mxu0
    %v1532 = vpop.f32.mrb[0].mxu0
    %v1533 = vadd.f32 %v354, %v1532
    %v1534 = vpop.f32.mrb[0].mxu0
    %1535 = vmatprep.mubr.bf16.mxu0 0
    %1536 = vmatmul.mubr.bf16.gmra.mrb[0].mxu0 %v1048
    %v1537 = vpop.f32.mrb[0].mxu0
    %v1538 = vadd.f32 %v354, %v1537
    %v1539 = vpop.f32.mrb[0].mxu0
    %v1540 = vpop.f32.mrb[0].mxu0
    %v1541 = vadd.f32 %v354, %v1540
    %v1542 = vpop.f32.mrb[0].mxu0
    %1543 = vmatprep.mubr.bf16.mxu0 0
    %1544 = vmatmul.mubr.bf16.gmra.mrb[0].mxu0 %v1051
    %v1545 = vpop.f32.mrb[0].mxu0
    %v1546 = vadd.f32 %v354, %v1545
    %v1547 = vpop.f32.mrb[0].mxu0
    %v1548 = vpop.f32.mrb[0].mxu0
    %v1549 = vadd.f32 %v354, %v1548
    %v1550 = vpop.f32.mrb[0].mxu0
    %1551 = vmatprep.mubr.bf16.mxu0 0
    %1552 = vmatmul.mubr.bf16.gmra.mrb[0].mxu0 %v1054
    %v1553 = vpop.f32.mrb[0].mxu0
    %v1554 = vadd.f32 %v354, %v1553
    %v1555 = vpop.f32.mrb[0].mxu0
    %v1556 = vpop.f32.mrb[0].mxu0
    %v1557 = vadd.f32 %v354, %v1556
    %v1558 = vpop.f32.mrb[0].mxu0
    %1559 = vmatprep.mubr.bf16.mxu0 0
    %1560 = vmatmul.mubr.bf16.gmra.mrb[0].mxu0 %v1057
    %v1561 = vpop.f32.mrb[0].mxu0
    %v1562 = vadd.f32 %v354, %v1561
    %v1563 = vpop.f32.mrb[0].mxu0
    %v1564 = vpop.f32.mrb[0].mxu0
    %v1565 = vadd.f32 %v354, %v1564
    %v1566 = vpop.f32.mrb[0].mxu0
    %1567 = vmatprep.mubr.bf16.mxu0 0
    %1568 = vmatmul.mubr.bf16.gmra.mrb[0].mxu0 %v1060
    %v1569 = vpop.f32.mrb[0].mxu0
    %v1570 = vadd.f32 %v354, %v1569
    %v1571 = vpop.f32.mrb[0].mxu0
    %v1572 = vpop.f32.mrb[0].mxu0
    %v1573 = vadd.f32 %v354, %v1572
    %v1574 = vpop.f32.mrb[0].mxu0
    %1575 = vmatprep.mubr.bf16.mxu0 0
    %1576 = vmatmul.mubr.bf16.gmra.mrb[0].mxu0 %v1063
    %v1577 = vpop.f32.mrb[0].mxu0
    %v1578 = vadd.f32 %v354, %v1577
    %v1579 = vpop.f32.mrb[0].mxu0
    %v1580 = vpop.f32.mrb[0].mxu0
    %v1581 = vadd.f32 %v354, %v1580
    %v1582 = vpop.f32.mrb[0].mxu0
    %1583 = vmatprep.mubr.bf16.mxu0 0
    %1584 = vmatmul.mubr.bf16.gmra.mrb[0].mxu0 %v1066
    %v1585 = vpop.f32.mrb[0].mxu0
    %v1586 = vadd.f32 %v354, %v1585
    %v1587 = vpop.f32.mrb[0].mxu0
    %v1588 = vpop.f32.mrb[0].mxu0
    %v1589 = vadd.f32 %v354, %v1588
    %v1590 = vpop.f32.mrb[0].mxu0
    %1591 = vmatprep.mubr.bf16.mxu0 0
    %1592 = vmatmul.mubr.bf16.gmra.mrb[0].mxu0 %v1069
    %v1593 = vpop.f32.mrb[0].mxu0
    %v1594 = vadd.f32 %v354, %v1593
    %v1595 = vpop.f32.mrb[0].mxu0
    %v1596 = vpop.f32.mrb[0].mxu0
    %v1597 = vadd.f32 %v354, %v1596
    %v1598 = vpop.f32.mrb[0].mxu0
    %1599 = vmatprep.mubr.bf16.mxu0 0
    %1600 = vmatmul.mubr.bf16.gmra.mrb[0].mxu0 %v1072
    %v1601 = vpop.f32.mrb[0].mxu0
    %v1602 = vadd.f32 %v354, %v1601
    %v1603 = vpop.f32.mrb[0].mxu0
    %v1604 = vpop.f32.mrb[0].mxu0
    %v1605 = vadd.f32 %v354, %v1604
    %v1606 = vpop.f32.mrb[0].mxu0
    %1607 = vmatprep.mubr.bf16.mxu0 0
    %1608 = vmatmul.mubr.bf16.gmra.mrb[0].mxu0 %v1075
    %v1609 = vpop.f32.mrb[0].mxu0
    %v1610 = vadd.f32 %v354, %v1609
    %v1611 = vpop.f32.mrb[0].mxu0
    %v1612 = vpop.f32.mrb[0].mxu0
    %v1613 = vadd.f32 %v354, %v1612
    %v1614 = vpop.f32.mrb[0].mxu0
    %1615 = vmatprep.mubr.bf16.mxu0 0
    %1616 = vmatmul.mubr.bf16.gmra.mrb[0].mxu0 %v1078
    %v1617 = vpop.f32.mrb[0].mxu0
    %v1618 = vadd.f32 %v354, %v1617
    %v1619 = vpop.f32.mrb[0].mxu0
    %v1620 = vpop.f32.mrb[0].mxu0
    %v1621 = vadd.f32 %v354, %v1620
    %v1622 = vpop.f32.mrb[0].mxu0
    %1623 = vmatprep.mubr.bf16.mxu0 0
    %1624 = vmatmul.mubr.bf16.gmra.mrb[0].mxu0 %v1081
    %v1625 = vpop.f32.mrb[0].mxu0
    %v1626 = vadd.f32 %v354, %v1625
    %v1627 = vpop.f32.mrb[0].mxu0
    %v1628 = vpop.f32.mrb[0].mxu0
    %v1629 = vadd.f32 %v354, %v1628
    %v1630 = vpop.f32.mrb[0].mxu0
    %1631 = vmatprep.mubr.bf16.mxu0 0
    %1632 = vmatmul.mubr.bf16.gmra.mrb[0].mxu0 %v1084
    %v1633 = vpop.f32.mrb[0].mxu0
    %v1634 = vadd.f32 %v354, %v1633
    %v1635 = vpop.f32.mrb[0].mxu0
    %v1636 = vpop.f32.mrb[0].mxu0
    %v1637 = vadd.f32 %v354, %v1636
    %v1638 = vpop.f32.mrb[0].mxu0
    %1639 = vmatprep.mubr.bf16.mxu0 0
    %1640 = vmatmul.mubr.bf16.gmra.mrb[0].mxu0 %v1087
    %v1641 = vpop.f32.mrb[0].mxu0
    %v1642 = vadd.f32 %v354, %v1641
    %v1643 = vpop.f32.mrb[0].mxu0
    %v1644 = vpop.f32.mrb[0].mxu0
    %v1645 = vadd.f32 %v354, %v1644
    %v1646 = vpop.f32.mrb[0].mxu0
    %1647 = vmatprep.mubr.bf16.mxu0 0
    %1648 = vmatmul.mubr.bf16.gmra.mrb[0].mxu0 %v1090
    %v1649 = vpop.f32.mrb[0].mxu0
    %v1650 = vadd.f32 %v354, %v1649
    %v1651 = vpop.f32.mrb[0].mxu0
    %v1652 = vpop.f32.mrb[0].mxu0
    %v1653 = vadd.f32 %v354, %v1652
    %v1654 = vpop.f32.mrb[0].mxu0
    %1655 = vmatprep.mubr.bf16.mxu0 0
    %1656 = vmatmul.mubr.bf16.gmra.mrb[0].mxu0 %v1093
    %v1657 = vpop.f32.mrb[0].mxu0
    %v1658 = vadd.f32 %v354, %v1657
    %v1659 = vpop.f32.mrb[0].mxu0
    %v1660 = vpop.f32.mrb[0].mxu0
    %v1661 = vadd.f32 %v354, %v1660
    %v1662 = vpop.f32.mrb[0].mxu0
    %1663 = vmatprep.mubr.bf16.mxu0 0
    %1664 = vmatmul.mubr.bf16.gmra.mrb[0].mxu0 %v1096
    %v1665 = vpop.f32.mrb[0].mxu0
    %v1666 = vadd.f32 %v354, %v1665
    %v1667 = vpop.f32.mrb[0].mxu0
    %v1668 = vpop.f32.mrb[0].mxu0
    %v1669 = vadd.f32 %v354, %v1668
    %v1670 = vpop.f32.mrb[0].mxu0
    %1671 = vmatprep.mubr.bf16.mxu0 0
    %1672 = vmatmul.mubr.bf16.gmra.mrb[0].mxu0 %v1099
    %v1673 = vpop.f32.mrb[0].mxu0
    %v1674 = vadd.f32 %v354, %v1673
    %v1675 = vpop.f32.mrb[0].mxu0
    %v1676 = vpop.f32.mrb[0].mxu0
    %v1677 = vadd.f32 %v354, %v1676
    %v1678 = vpop.f32.mrb[0].mxu0
    %1679 = vmatprep.mubr.bf16.mxu0 0
    %1680 = vmatmul.mubr.bf16.gmra.mrb[0].mxu0 %v1102
    %v1681 = vpop.f32.mrb[0].mxu0
    %v1682 = vadd.f32 %v354, %v1681
    %v1683 = vpop.f32.mrb[0].mxu0
    %v1684 = vpop.f32.mrb[0].mxu0
    %v1685 = vadd.f32 %v354, %v1684
    %v1686 = vpop.f32.mrb[0].mxu0
    %1687 = vmatprep.mubr.bf16.mxu0 0
    %1688 = vmatmul.mubr.bf16.gmra.mrb[0].mxu0 %v1105
    %v1689 = vpop.f32.mrb[0].mxu0
    %v1690 = vadd.f32 %v354, %v1689
    %v1691 = vpop.f32.mrb[0].mxu0
    %v1692 = vpop.f32.mrb[0].mxu0
    %v1693 = vadd.f32 %v354, %v1692
    %v1694 = vpop.f32.mrb[0].mxu0
    %1695 = vmatprep.mubr.bf16.mxu0 0
    %1696 = vmatmul.mubr.bf16.gmra.mrb[0].mxu0 %v1108
    %v1697 = vpop.f32.mrb[0].mxu0
    %v1698 = vadd.f32 %v354, %v1697
    %v1699 = vpop.f32.mrb[0].mxu0
    %v1700 = vpop.f32.mrb[0].mxu0
    %v1701 = vadd.f32 %v354, %v1700
    %v1702 = vpop.f32.mrb[0].mxu0
    %1703 = vmatprep.mubr.bf16.mxu0 0
    %1704 = vmatmul.mubr.bf16.gmra.mrb[0].mxu0 %v1111
    %v1705 = vpop.f32.mrb[0].mxu0
    %v1706 = vadd.f32 %v354, %v1705
    %v1707 = vpop.f32.mrb[0].mxu0
    %v1708 = vpop.f32.mrb[0].mxu0
    %v1709 = vadd.f32 %v354, %v1708
    %v1710 = vpop.f32.mrb[0].mxu0
    %1711 = vmatprep.mubr.bf16.mxu0 0
    %1712 = vmatmul.mubr.bf16.gmra.mrb[0].mxu0 %v1114
    %v1713 = vpop.f32.mrb[0].mxu0
    %v1714 = vadd.f32 %v354, %v1713
    %v1715 = vpop.f32.mrb[0].mxu0
    %v1716 = vpop.f32.mrb[0].mxu0
    %v1717 = vadd.f32 %v354, %v1716
    %v1718 = vpop.f32.mrb[0].mxu0
    %1719 = vmatprep.mubr.bf16.mxu0 0
    %1720 = vmatmul.mubr.bf16.gmra.mrb[0].mxu0 %v1117
    %v1721 = vpop.f32.mrb[0].mxu0
    %v1722 = vadd.f32 %v354, %v1721
    %v1723 = vpop.f32.mrb[0].mxu0
    %v1724 = vpop.f32.mrb[0].mxu0
    %v1725 = vadd.f32 %v354, %v1724
    %v1726 = vpop.f32.mrb[0].mxu0
    %1727 = vmatprep.mubr.bf16.mxu0 0
    %1728 = vmatmul.mubr.bf16.gmra.mrb[0].mxu0 %v1120
    %v1729 = vpop.f32.mrb[0].mxu0
    %v1730 = vadd.f32 %v354, %v1729
    %v1731 = vpop.f32.mrb[0].mxu0
    %v1732 = vpop.f32.mrb[0].mxu0
    %v1733 = vadd.f32 %v354, %v1732
    %v1734 = vpop.f32.mrb[0].mxu0
    %1735 = vmatprep.mubr.bf16.mxu0 0
    %1736 = vmatmul.mubr.bf16.gmra.mrb[0].mxu0 %v1123
    %v1737 = vpop.f32.mrb[0].mxu0
    %v1738 = vadd.f32 %v354, %v1737
    %v1739 = vpop.f32.mrb[0].mxu0
    %v1740 = vpop.f32.mrb[0].mxu0
    %v1741 = vadd.f32 %v354, %v1740
    %v1742 = vpop.f32.mrb[0].mxu0
    %1743 = vmatprep.mubr.bf16.mxu0 0
    %1744 = vmatmul.mubr.bf16.gmra.mrb[0].mxu0 %v1126
    %v1745 = vpop.f32.mrb[0].mxu0
    %v1746 = vadd.f32 %v354, %v1745
    %v1747 = vpop.f32.mrb[0].mxu0
    %v1748 = vpop.f32.mrb[0].mxu0
    %v1749 = vadd.f32 %v354, %v1748
    %v1750 = vpop.f32.mrb[0].mxu0
    %1751 = vmatprep.mubr.bf16.mxu0 0
    %1752 = vmatmul.mubr.bf16.gmra.mrb[0].mxu0 %v1129
    %v1753 = vpop.f32.mrb[0].mxu0
    %v1754 = vadd.f32 %v354, %v1753
    %v1755 = vpop.f32.mrb[0].mxu0
    %v1756 = vpop.f32.mrb[0].mxu0
    %v1757 = vadd.f32 %v354, %v1756
    %v1758 = vpop.f32.mrb[0].mxu0
    %1759 = vmatprep.mubr.bf16.mxu0 0
    %1760 = vmatmul.mubr.bf16.gmra.mrb[0].mxu0 %v1132
    %v1761 = vpop.f32.mrb[0].mxu0
    %v1762 = vadd.f32 %v354, %v1761
    %v1763 = vpop.f32.mrb[0].mxu0
    %v1764 = vpop.f32.mrb[0].mxu0
    %v1765 = vadd.f32 %v354, %v1764
    %v1766 = vpop.f32.mrb[0].mxu0
    %1767 = vmatprep.mubr.bf16.mxu0 0
    %1768 = vmatmul.mubr.bf16.gmra.mrb[0].mxu0 %v1135
    %v1769 = vpop.f32.mrb[0].mxu0
    %v1770 = vadd.f32 %v354, %v1769
    %v1771 = vpop.f32.mrb[0].mxu0
    %v1772 = vpop.f32.mrb[0].mxu0
    %v1773 = vadd.f32 %v354, %v1772
    %v1774 = vpop.f32.mrb[0].mxu0
    %1775 = vmatprep.mubr.bf16.mxu0 0
    %1776 = vmatmul.mubr.bf16.gmra.mrb[0].mxu0 %v1138
    %v1777 = vpop.f32.mrb[0].mxu0
    %v1778 = vadd.f32 %v354, %v1777
    %v1779 = vpop.f32.mrb[0].mxu0
    %v1780 = vpop.f32.mrb[0].mxu0
    %v1781 = vadd.f32 %v354, %v1780
    %v1782 = vpop.f32.mrb[0].mxu0
    %1783 = vmatprep.mubr.bf16.mxu0 0
    %1784 = vmatmul.mubr.bf16.gmra.mrb[0].mxu0 %v1141
    %v1785 = vpop.f32.mrb[0].mxu0
    %v1786 = vadd.f32 %v354, %v1785
    %v1787 = vpop.f32.mrb[0].mxu0
    %v1788 = vpop.f32.mrb[0].mxu0
    %v1789 = vadd.f32 %v354, %v1788
    %v1790 = vpop.f32.mrb[0].mxu0
    %1791 = vmatprep.mubr.bf16.mxu0 0
    %1792 = vmatmul.mubr.bf16.gmra.mrb[0].mxu0 %v1144
    %v1793 = vpop.f32.mrb[0].mxu0
    %v1794 = vadd.f32 %v354, %v1793
    %v1795 = vpop.f32.mrb[0].mxu0
    %v1796 = vpop.f32.mrb[0].mxu0
    %v1797 = vadd.f32 %v354, %v1796
    %v1798 = vpop.f32.mrb[0].mxu0
    %1799 = vmatprep.mubr.bf16.mxu0 0
    %1800 = vmatmul.mubr.bf16.gmra.mrb[0].mxu0 %v1147
    %v1801 = vpop.f32.mrb[0].mxu0
    %v1802 = vadd.f32 %v354, %v1801
    %v1803 = vpop.f32.mrb[0].mxu0
    %v1804 = vpop.f32.mrb[0].mxu0
    %v1805 = vadd.f32 %v354, %v1804
    %v1806 = vpop.f32.mrb[0].mxu0
    %1807 = vmatprep.mubr.bf16.mxu0 0
    %1808 = vmatmul.mubr.bf16.gmra.mrb[0].mxu0 %v1150
    %v1809 = vpop.f32.mrb[0].mxu0
    %v1810 = vadd.f32 %v354, %v1809
    %v1811 = vpop.f32.mrb[0].mxu0
    %v1812 = vpop.f32.mrb[0].mxu0
    %v1813 = vadd.f32 %v354, %v1812
    %v1814 = vpop.f32.mrb[0].mxu0
    %1815 = vmatprep.mubr.bf16.mxu0 0
    %1816 = vmatmul.mubr.bf16.gmra.mrb[0].mxu0 %v1153
    %v1817 = vpop.f32.mrb[0].mxu0
    %v1818 = vadd.f32 %v354, %v1817
    %v1819 = vpop.f32.mrb[0].mxu0
    %v1820 = vpop.f32.mrb[0].mxu0
    %v1821 = vadd.f32 %v354, %v1820
    %v1822 = vpop.f32.mrb[0].mxu0
    %1823 = vmatprep.mubr.bf16.mxu0 0
    %1824 = vmatmul.mubr.bf16.gmra.mrb[0].mxu0 %v1156
    %v1825 = vpop.f32.mrb[0].mxu0
    %v1826 = vadd.f32 %v354, %v1825
    %v1827 = vpop.f32.mrb[0].mxu0
    %v1828 = vpop.f32.mrb[0].mxu0
    %v1829 = vadd.f32 %v354, %v1828
    %v1830 = vpop.f32.mrb[0].mxu0
    %1831 = vmatprep.mubr.bf16.mxu0 0
    %1832 = vmatmul.mubr.bf16.gmra.mrb[0].mxu0 %v1159
    %v1833 = vpop.f32.mrb[0].mxu0
    %v1834 = vadd.f32 %v354, %v1833
    %v1835 = vpop.f32.mrb[0].mxu0
    %v1836 = vpop.f32.mrb[0].mxu0
    %v1837 = vadd.f32 %v354, %v1836
    %v1838 = vpop.f32.mrb[0].mxu0
    %1839 = vmatprep.mubr.bf16.mxu0 0
    %1840 = vmatmul.mubr.bf16.gmra.mrb[0].mxu0 %v1162
    %v1841 = vpop.f32.mrb[0].mxu0
    %v1842 = vadd.f32 %v354, %v1841
    %v1843 = vpop.f32.mrb[0].mxu0
    %v1844 = vpop.f32.mrb[0].mxu0
    %v1845 = vadd.f32 %v354, %v1844
    %v1846 = vpop.f32.mrb[0].mxu0
    %1847 = vmatprep.mubr.bf16.mxu0 0
    %1848 = vmatmul.mubr.bf16.gmra.mrb[0].mxu0 %v1165
    %v1849 = vpop.f32.mrb[0].mxu0
    %v1850 = vadd.f32 %v354, %v1849
    %v1851 = vpop.f32.mrb[0].mxu0
    %v1852 = vpop.f32.mrb[0].mxu0
    %v1853 = vadd.f32 %v354, %v1852
    %v1854 = vpop.f32.mrb[0].mxu0
    %1855 = vmatprep.mubr.bf16.mxu0 0
    %1856 = vmatmul.mubr.bf16.gmra.mrb[0].mxu0 %v1168
    %v1857 = vpop.f32.mrb[0].mxu0
    %v1858 = vadd.f32 %v354, %v1857
    %v1859 = vpop.f32.mrb[0].mxu0
    %v1860 = vpop.f32.mrb[0].mxu0
    %v1861 = vadd.f32 %v354, %v1860
    %v1862 = vpop.f32.mrb[0].mxu0
    %1863 = vmatprep.mubr.bf16.mxu0 0
    %1864 = vmatmul.mubr.bf16.gmra.mrb[0].mxu0 %v1171
    %v1865 = vpop.f32.mrb[0].mxu0
    %v1866 = vadd.f32 %v354, %v1865
    %v1867 = vpop.f32.mrb[0].mxu0
    %v1868 = vpop.f32.mrb[0].mxu0
    %v1869 = vadd.f32 %v354, %v1868
    %v1870 = vpop.f32.mrb[0].mxu0
    %1871 = vmatprep.mubr.bf16.mxu0 0
    %1872 = vmatmul.mubr.bf16.gmra.mrb[0].mxu0 %v1174
    %v1873 = vpop.f32.mrb[0].mxu0
    %v1874 = vadd.f32 %v354, %v1873
    %v1875 = vpop.f32.mrb[0].mxu0
    %v1876 = vpop.f32.mrb[0].mxu0
    %v1877 = vadd.f32 %v354, %v1876
    %v1878 = vpop.f32.mrb[0].mxu0
    %1879 = vmatprep.mubr.bf16.mxu0 0
    %1880 = vmatmul.mubr.bf16.gmra.mrb[0].mxu0 %v1177
    %v1881 = vpop.f32.mrb[0].mxu0
    %v1882 = vadd.f32 %v354, %v1881
    %v1883 = vpop.f32.mrb[0].mxu0
    %v1884 = vpop.f32.mrb[0].mxu0
    %v1885 = vadd.f32 %v354, %v1884
    %v1886 = vpop.f32.mrb[0].mxu0
    %1887 = vmatprep.mubr.bf16.mxu0 0
    %1888 = vmatmul.mubr.bf16.gmra.mrb[0].mxu0 %v1180
    %v1889 = vpop.f32.mrb[0].mxu0
    %v1890 = vadd.f32 %v354, %v1889
    %v1891 = vpop.f32.mrb[0].mxu0
    %v1892 = vpop.f32.mrb[0].mxu0
    %v1893 = vadd.f32 %v354, %v1892
    %v1894 = vpop.f32.mrb[0].mxu0
    %1895 = vmatprep.mubr.bf16.mxu0 0
    %1896 = vmatmul.mubr.bf16.gmra.mrb[0].mxu0 %v1183
    %v1897 = vpop.f32.mrb[0].mxu0
    %v1898 = vadd.f32 %v354, %v1897
    %v1899 = vpop.f32.mrb[0].mxu0
    %v1900 = vpop.f32.mrb[0].mxu0
    %v1901 = vadd.f32 %v354, %v1900
    %v1902 = vpop.f32.mrb[0].mxu0
    %1903 = vmatprep.mubr.bf16.mxu0 0
    %1904 = vmatmul.mubr.bf16.gmra.mrb[0].mxu0 %v1186
    %v1905 = vpop.f32.mrb[0].mxu0
    %v1906 = vadd.f32 %v354, %v1905
    %v1907 = vpop.f32.mrb[0].mxu0
    %v1908 = vpop.f32.mrb[0].mxu0
    %v1909 = vadd.f32 %v354, %v1908
    %v1910 = vpop.f32.mrb[0].mxu0
    %1911 = vmatprep.mubr.bf16.mxu0 0
    %1912 = vmatmul.mubr.bf16.gmra.mrb[0].mxu0 %v1189
    %v1913 = vpop.f32.mrb[0].mxu0
    %v1914 = vadd.f32 %v354, %v1913
    %v1915 = vpop.f32.mrb[0].mxu0
    %v1916 = vpop.f32.mrb[0].mxu0
    %v1917 = vadd.f32 %v354, %v1916
    %v1918 = vpop.f32.mrb[0].mxu0
    %1919 = vmatprep.mubr.bf16.mxu0 0
    %1920 = vmatmul.mubr.bf16.gmra.mrb[0].mxu0 %v1192
    %v1921 = vpop.f32.mrb[0].mxu0
    %v1922 = vadd.f32 %v354, %v1921
    %v1923 = vpop.f32.mrb[0].mxu0
    %v1924 = vpop.f32.mrb[0].mxu0
    %v1925 = vadd.f32 %v354, %v1924
    %v1926 = vpop.f32.mrb[0].mxu0
    %1927 = vmatprep.mubr.bf16.mxu0 0
    %1928 = vmatmul.mubr.bf16.gmra.mrb[0].mxu0 %v1195
    %v1929 = vpop.f32.mrb[0].mxu0
    %v1930 = vadd.f32 %v354, %v1929
    %v1931 = vpop.f32.mrb[0].mxu0
    %v1932 = vpop.f32.mrb[0].mxu0
    %v1933 = vadd.f32 %v354, %v1932
    %v1934 = vpop.f32.mrb[0].mxu0
    %1935 = vmatprep.mubr.bf16.mxu0 0
    %1936 = vmatmul.mubr.bf16.gmra.mrb[0].mxu0 %v1198
    %v1937 = vpop.f32.mrb[0].mxu0
    %v1938 = vadd.f32 %v354, %v1937
    %v1939 = vpop.f32.mrb[0].mxu0
    %v1940 = vpop.f32.mrb[0].mxu0
    %v1941 = vadd.f32 %v354, %v1940
    %v1942 = vpop.f32.mrb[0].mxu0
    %1943 = vmatprep.mubr.bf16.mxu0 0
    %1944 = vmatmul.mubr.bf16.gmra.mrb[0].mxu0 %v1201
    %v1945 = vpop.f32.mrb[0].mxu0
    %v1946 = vadd.f32 %v354, %v1945
    %v1947 = vpop.f32.mrb[0].mxu0
    %v1948 = vpop.f32.mrb[0].mxu0
    %v1949 = vadd.f32 %v354, %v1948
    %v1950 = vpop.f32.mrb[0].mxu0
    %1951 = vmatprep.mubr.bf16.mxu0 0
    %1952 = vmatmul.mubr.bf16.gmra.mrb[0].mxu0 %v1204
    %v1953 = vpop.f32.mrb[0].mxu0
    %v1954 = vadd.f32 %v354, %v1953
    %v1955 = vpop.f32.mrb[0].mxu0
    %v1956 = vpop.f32.mrb[0].mxu0
    %v1957 = vadd.f32 %v354, %v1956
    %v1958 = vpop.f32.mrb[0].mxu0
    %1959 = vmatprep.mubr.bf16.mxu0 0
    %1960 = vmatmul.mubr.bf16.gmra.mrb[0].mxu0 %v1207
    %v1961 = vpop.f32.mrb[0].mxu0
    %v1962 = vadd.f32 %v354, %v1961
    %v1963 = vpop.f32.mrb[0].mxu0
    %v1964 = vpop.f32.mrb[0].mxu0
    %v1965 = vadd.f32 %v354, %v1964
    %v1966 = vpop.f32.mrb[0].mxu0
    %1967 = vmatprep.mubr.bf16.mxu0 0
    %1968 = vmatmul.mubr.bf16.gmra.mrb[0].mxu0 %v1210
    %v1969 = vpop.f32.mrb[0].mxu0
    %v1970 = vadd.f32 %v354, %v1969
    %v1971 = vpop.f32.mrb[0].mxu0
    %v1972 = vpop.f32.mrb[0].mxu0
    %v1973 = vadd.f32 %v354, %v1972
    %v1974 = vpop.f32.mrb[0].mxu0
    %1975 = vmatprep.mubr.bf16.mxu0 0
    %1976 = vmatmul.mubr.bf16.gmra.mrb[0].mxu0 %v1213
    %v1977 = vpop.f32.mrb[0].mxu0
    %v1978 = vadd.f32 %v354, %v1977
    %v1979 = vpop.f32.mrb[0].mxu0
    %v1980 = vpop.f32.mrb[0].mxu0
    %v1981 = vadd.f32 %v354, %v1980
    %v1982 = vpop.f32.mrb[0].mxu0
    %1983 = vmatprep.mubr.bf16.mxu0 0
    %1984 = vmatmul.mubr.bf16.gmra.mrb[0].mxu0 %v1216
    %v1985 = vpop.f32.mrb[0].mxu0
    %v1986 = vadd.f32 %v354, %v1985
    %v1987 = vpop.f32.mrb[0].mxu0
    %v1988 = vpop.f32.mrb[0].mxu0
    %v1989 = vadd.f32 %v354, %v1988
    %v1990 = vpop.f32.mrb[0].mxu0
    %1991 = vmatprep.mubr.bf16.mxu0 0
    %1992 = vmatmul.mubr.bf16.gmra.mrb[0].mxu0 %v1219
    %v1993 = vpop.f32.mrb[0].mxu0
    %v1994 = vadd.f32 %v354, %v1993
    %v1995 = vpop.f32.mrb[0].mxu0
    %v1996 = vpop.f32.mrb[0].mxu0
    %v1997 = vadd.f32 %v354, %v1996
    %v1998 = vpop.f32.mrb[0].mxu0
    %1999 = vmatprep.mubr.bf16.mxu0 0
    %2000 = vmatmul.mubr.bf16.gmra.mrb[0].mxu0 %v1222
    %v2001 = vpop.f32.mrb[0].mxu0
    %v2002 = vadd.f32 %v354, %v2001
    %v2003 = vpop.f32.mrb[0].mxu0
    %v2004 = vpop.f32.mrb[0].mxu0
    %v2005 = vadd.f32 %v354, %v2004
    %v2006 = vpop.f32.mrb[0].mxu0
    %2007 = vmatprep.mubr.bf16.mxu0 0
    %2008 = vmatmul.mubr.bf16.gmra.mrb[0].mxu0 %v1225
    %v2009 = vpop.f32.mrb[0].mxu0
    %v2010 = vadd.f32 %v354, %v2009
    %v2011 = vpop.f32.mrb[0].mxu0
    %v2012 = vpop.f32.mrb[0].mxu0
    %v2013 = vadd.f32 %v354, %v2012
    %v2014 = vpop.f32.mrb[0].mxu0
    %2015 = vmatprep.mubr.bf16.mxu0 0
    %2016 = vmatmul.mubr.bf16.gmra.mrb[0].mxu0 %v1228
    %v2017 = vpop.f32.mrb[0].mxu0
    %v2018 = vadd.f32 %v354, %v2017
    %v2019 = vpop.f32.mrb[0].mxu0
    %v2020 = vpop.f32.mrb[0].mxu0
    %v2021 = vadd.f32 %v354, %v2020
    %v2022 = vpop.f32.mrb[0].mxu0
    %2023 = vmatprep.mubr.bf16.mxu0 0
    %2024 = vmatmul.mubr.bf16.gmra.mrb[0].mxu0 %v1231
    %v2025 = vpop.f32.mrb[0].mxu0
    %v2026 = vadd.f32 %v354, %v2025
    %v2027 = vpop.f32.mrb[0].mxu0
    %v2028 = vpop.f32.mrb[0].mxu0
    %v2029 = vadd.f32 %v354, %v2028
    %v2030 = vpop.f32.mrb[0].mxu0
    %2031 = vmatprep.mubr.bf16.mxu0 0
    %2032 = vmatmul.mubr.bf16.gmra.mrb[0].mxu0 %v1234
    %v2033 = vpop.f32.mrb[0].mxu0
    %v2034 = vadd.f32 %v354, %v2033
    %v2035 = vpop.f32.mrb[0].mxu0
    %v2036 = vpop.f32.mrb[0].mxu0
    %v2037 = vadd.f32 %v354, %v2036
    %v2038 = vpop.f32.mrb[0].mxu0
    %2039 = vmatprep.mubr.bf16.mxu0 0
    %2040 = vmatmul.mubr.bf16.gmra.mrb[0].mxu0 %v1237
    %v2041 = vpop.f32.mrb[0].mxu0
    %v2042 = vadd.f32 %v354, %v2041
    %v2043 = vpop.f32.mrb[0].mxu0
    %v2044 = vpop.f32.mrb[0].mxu0
    %v2045 = vadd.f32 %v354, %v2044
    %v2046 = vpop.f32.mrb[0].mxu0
    %2047 = vmatprep.mubr.bf16.mxu0 0
    %2048 = vmatmul.mubr.bf16.gmra.mrb[0].mxu0 %v1240
    %v2049 = vpop.f32.mrb[0].mxu0
    %v2050 = vadd.f32 %v354, %v2049
    %v2051 = vpop.f32.mrb[0].mxu0
    %v2052 = vpop.f32.mrb[0].mxu0
    %v2053 = vadd.f32 %v354, %v2052
    %v2054 = vpop.f32.mrb[0].mxu0
    %2055 = vmatprep.mubr.bf16.mxu0 0
    %2056 = vmatmul.mubr.bf16.gmra.mrb[0].mxu0 %v1243
    %v2057 = vpop.f32.mrb[0].mxu0
    %v2058 = vadd.f32 %v354, %v2057
    %v2059 = vpop.f32.mrb[0].mxu0
    %v2060 = vpop.f32.mrb[0].mxu0
    %v2061 = vadd.f32 %v354, %v2060
    %v2062 = vpop.f32.mrb[0].mxu0
    %2063 = vmatprep.mubr.bf16.mxu0 0
    %2064 = vmatmul.mubr.bf16.gmra.mrb[0].mxu0 %v1246
    %v2065 = vpop.f32.mrb[0].mxu0
    %v2066 = vadd.f32 %v354, %v2065
    %v2067 = vpop.f32.mrb[0].mxu0
    %v2068 = vpop.f32.mrb[0].mxu0
    %v2069 = vadd.f32 %v354, %v2068
    %v2070 = vpop.f32.mrb[0].mxu0
    %2071 = vmatprep.mubr.bf16.mxu0 0
    %2072 = vmatmul.mubr.bf16.gmra.mrb[0].mxu0 %v1249
    %v2073 = vpop.f32.mrb[0].mxu0
    %v2074 = vadd.f32 %v354, %v2073
    %v2075 = vpop.f32.mrb[0].mxu0
    %v2076 = vpop.f32.mrb[0].mxu0
    %v2077 = vadd.f32 %v354, %v2076
    %v2078 = vpop.f32.mrb[0].mxu0
    %2079 = vmatprep.mubr.bf16.mxu0 0
    %2080 = vmatmul.mubr.bf16.gmra.mrb[0].mxu0 %v1252
    %v2081 = vpop.f32.mrb[0].mxu0
    %v2082 = vadd.f32 %v354, %v2081
    %v2083 = vpop.f32.mrb[0].mxu0
    %v2084 = vpop.f32.mrb[0].mxu0
    %v2085 = vadd.f32 %v354, %v2084
    %v2086 = vpop.f32.mrb[0].mxu0
    %2087 = vmatprep.mubr.bf16.mxu0 0
    %2088 = vmatmul.mubr.bf16.gmra.mrb[0].mxu0 %v1255
    %v2089 = vpop.f32.mrb[0].mxu0
    %v2090 = vadd.f32 %v354, %v2089
    %v2091 = vpop.f32.mrb[0].mxu0
    %v2092 = vpop.f32.mrb[0].mxu0
    %v2093 = vadd.f32 %v354, %v2092
    %v2094 = vpop.f32.mrb[0].mxu0
    %2095 = vmatprep.mubr.bf16.mxu0 0
    %2096 = vmatmul.mubr.bf16.gmra.mrb[0].mxu0 %v1258
    %v2097 = vpop.f32.mrb[0].mxu0
    %v2098 = vadd.f32 %v354, %v2097
    %v2099 = vpop.f32.mrb[0].mxu0
    %v2100 = vpop.f32.mrb[0].mxu0
    %v2101 = vadd.f32 %v354, %v2100
    %v2102 = vpop.f32.mrb[0].mxu0
    %2103 = vmatprep.mubr.bf16.mxu0 0
    %2104 = vmatmul.mubr.bf16.gmra.mrb[0].mxu0 %v1261
    %v2105 = vpop.f32.mrb[0].mxu0
    %v2106 = vadd.f32 %v354, %v2105
    %v2107 = vpop.f32.mrb[0].mxu0
    %v2108 = vpop.f32.mrb[0].mxu0
    %v2109 = vadd.f32 %v354, %v2108
    %v2110 = vpop.f32.mrb[0].mxu0
    %2111 = vmatprep.mubr.bf16.mxu0 0
    %2112 = vmatmul.mubr.bf16.gmra.mrb[0].mxu0 %v1264
    %v2113 = vpop.f32.mrb[0].mxu0
    %v2114 = vadd.f32 %v354, %v2113
    %v2115 = vpop.f32.mrb[0].mxu0
    %v2116 = vpop.f32.mrb[0].mxu0
    %v2117 = vadd.f32 %v354, %v2116
    %v2118 = vpop.f32.mrb[0].mxu0
    %2119 = vmatprep.mubr.bf16.mxu0 0
    %2120 = vmatmul.mubr.bf16.gmra.mrb[0].mxu0 %v1267
    %v2121 = vpop.f32.mrb[0].mxu0
    %v2122 = vadd.f32 %v354, %v2121
    %v2123 = vpop.f32.mrb[0].mxu0
    %v2124 = vpop.f32.mrb[0].mxu0
    %v2125 = vadd.f32 %v354, %v2124
    %v2126 = vpop.f32.mrb[0].mxu0
    %2127 = vmatprep.mubr.bf16.mxu0 0
    %2128 = vmatmul.mubr.bf16.gmra.mrb[0].mxu0 %v1270
    %v2129 = vpop.f32.mrb[0].mxu0
    %v2130 = vadd.f32 %v354, %v2129
    %v2131 = vpop.f32.mrb[0].mxu0
    %v2132 = vpop.f32.mrb[0].mxu0
    %v2133 = vadd.f32 %v354, %v2132
    %v2134 = vpop.f32.mrb[0].mxu0
    %2135 = vmatprep.mubr.bf16.mxu0 0
    %2136 = vmatmul.mubr.bf16.gmra.mrb[0].mxu0 %v1273
    %v2137 = vpop.f32.mrb[0].mxu0
    %v2138 = vadd.f32 %v354, %v2137
    %v2139 = vpop.f32.mrb[0].mxu0
    %v2140 = vpop.f32.mrb[0].mxu0
    %v2141 = vadd.f32 %v354, %v2140
    %v2142 = vpop.f32.mrb[0].mxu0
    %2143 = vmatprep.mubr.bf16.mxu0 0
    %2144 = vmatmul.mubr.bf16.gmra.mrb[0].mxu0 %v1276
    %v2145 = vpop.f32.mrb[0].mxu0
    %v2146 = vadd.f32 %v354, %v2145
    %v2147 = vpop.f32.mrb[0].mxu0
    %v2148 = vpop.f32.mrb[0].mxu0
    %v2149 = vadd.f32 %v354, %v2148
    %v2150 = vpop.f32.mrb[0].mxu0
    %2151 = vmatprep.mubr.bf16.mxu0 0
    %2152 = vmatmul.mubr.bf16.gmra.mrb[0].mxu0 %v1279
    %v2153 = vpop.f32.mrb[0].mxu0
    %v2154 = vadd.f32 %v354, %v2153
    %v2155 = vpop.f32.mrb[0].mxu0
    %v2156 = vpop.f32.mrb[0].mxu0
    %v2157 = vadd.f32 %v354, %v2156
    %v2158 = vpop.f32.mrb[0].mxu0
    %2159 = vmatprep.mubr.bf16.mxu0 0
    %2160 = vmatmul.mubr.bf16.gmra.mrb[0].mxu0 %v1282
    %v2161 = vpop.f32.mrb[0].mxu0
    %v2162 = vadd.f32 %v354, %v2161
    %v2163 = vpop.f32.mrb[0].mxu0
    %v2164 = vpop.f32.mrb[0].mxu0
    %v2165 = vadd.f32 %v354, %v2164
    %v2166 = vpop.f32.mrb[0].mxu0
    %2167 = vmatprep.mubr.bf16.mxu0 0
    %2168 = vmatmul.mubr.bf16.gmra.mrb[0].mxu0 %v1285
    %v2169 = vpop.f32.mrb[0].mxu0
    %v2170 = vadd.f32 %v354, %v2169
    %v2171 = vpop.f32.mrb[0].mxu0
    %v2172 = vpop.f32.mrb[0].mxu0
    %v2173 = vadd.f32 %v354, %v2172
    %v2174 = vpop.f32.mrb[0].mxu0
    %2175 = vmatprep.mubr.bf16.mxu0 0
    %2176 = vmatmul.mubr.bf16.gmra.mrb[0].mxu0 %v1288
    %v2177 = vpop.f32.mrb[0].mxu0
    %v2178 = vadd.f32 %v354, %v2177
    %v2179 = vpop.f32.mrb[0].mxu0
    %v2180 = vpop.f32.mrb[0].mxu0
    %v2181 = vadd.f32 %v354, %v2180
    %v2182 = vpop.f32.mrb[0].mxu0
    %2183 = vmatprep.mubr.bf16.mxu0 0
    %2184 = vmatmul.mubr.bf16.gmra.mrb[0].mxu0 %v1291
    %v2185 = vpop.f32.mrb[0].mxu0
    %v2186 = vadd.f32 %v354, %v2185
    %v2187 = vpop.f32.mrb[0].mxu0
    %v2188 = vpop.f32.mrb[0].mxu0
    %v2189 = vadd.f32 %v354, %v2188
    %v2190 = vpop.f32.mrb[0].mxu0
    %2191 = vmatprep.mubr.bf16.mxu0 0
    %2192 = vmatmul.mubr.bf16.gmra.mrb[0].mxu0 %v1294
    %v2193 = vpop.f32.mrb[0].mxu0
    %v2194 = vadd.f32 %v354, %v2193
    %v2195 = vpop.f32.mrb[0].mxu0
    %v2196 = vpop.f32.mrb[0].mxu0
    %v2197 = vadd.f32 %v354, %v2196
    %v2198 = vpop.f32.mrb[0].mxu0
    %2199 = vmatprep.mubr.bf16.mxu0 0
    %2200 = vmatmul.mubr.bf16.gmra.mrb[0].mxu0 %v1297
    %v2201 = vpop.f32.mrb[0].mxu0
    %v2202 = vadd.f32 %v354, %v2201
    %v2203 = vpop.f32.mrb[0].mxu0
    %v2204 = vpop.f32.mrb[0].mxu0
    %v2205 = vadd.f32 %v354, %v2204
    %v2206 = vpop.f32.mrb[0].mxu0
    %2207 = vmatprep.mubr.bf16.mxu0 0
    %2208 = vmatmul.mubr.bf16.gmra.mrb[0].mxu0 %v1300
    %v2209 = vpop.f32.mrb[0].mxu0
    %v2210 = vadd.f32 %v354, %v2209
    %v2211 = vpop.f32.mrb[0].mxu0
    %v2212 = vpop.f32.mrb[0].mxu0
    %v2213 = vadd.f32 %v354, %v2212
    %v2214 = vpop.f32.mrb[0].mxu0
    %2215 = vmatprep.mubr.bf16.mxu0 0
    %2216 = vmatmul.mubr.bf16.gmra.mrb[0].mxu0 %v1303
    %v2217 = vpop.f32.mrb[0].mxu0
    %v2218 = vadd.f32 %v354, %v2217
    %v2219 = vpop.f32.mrb[0].mxu0
    %v2220 = vpop.f32.mrb[0].mxu0
    %v2221 = vadd.f32 %v354, %v2220
    %v2222 = vpop.f32.mrb[0].mxu0
    %2223 = vmatprep.mubr.bf16.mxu0 0
    %2224 = vmatmul.mubr.bf16.gmra.mrb[0].mxu0 %v1306
    %v2225 = vpop.f32.mrb[0].mxu0
    %v2226 = vadd.f32 %v354, %v2225
    %v2227 = vpop.f32.mrb[0].mxu0
    %v2228 = vpop.f32.mrb[0].mxu0
    %v2229 = vadd.f32 %v354, %v2228
    %v2230 = vpop.f32.mrb[0].mxu0
    %2231 = vmatprep.mubr.bf16.mxu0 0
    %2232 = vmatmul.mubr.bf16.gmra.mrb[0].mxu0 %v1309
    %v2233 = vpop.f32.mrb[0].mxu0
    %v2234 = vadd.f32 %v354, %v2233
    %v2235 = vpop.f32.mrb[0].mxu0
    %v2236 = vpop.f32.mrb[0].mxu0
    %v2237 = vadd.f32 %v354, %v2236
    %v2238 = vpop.f32.mrb[0].mxu0
    %2239 = vmatprep.mubr.bf16.mxu0 0
    %2240 = vmatmul.mubr.bf16.gmra.mrb[0].mxu0 %v1312
    %v2241 = vpop.f32.mrb[0].mxu0
    %v2242 = vadd.f32 %v354, %v2241
    %v2243 = vpop.f32.mrb[0].mxu0
    %v2244 = vpop.f32.mrb[0].mxu0
    %v2245 = vadd.f32 %v354, %v2244
    %v2246 = vpop.f32.mrb[0].mxu0
    %2247 = vmatprep.mubr.bf16.mxu0 0
    %2248 = vmatmul.mubr.bf16.gmra.mrb[0].mxu0 %v1315
    %v2249 = vpop.f32.mrb[0].mxu0
    %v2250 = vadd.f32 %v354, %v2249
    %v2251 = vpop.f32.mrb[0].mxu0
    %v2252 = vpop.f32.mrb[0].mxu0
    %v2253 = vadd.f32 %v354, %v2252
    %v2254 = vpop.f32.mrb[0].mxu0
    %2255 = vmatprep.mubr.bf16.mxu0 0
    %2256 = vmatmul.mubr.bf16.gmra.mrb[0].mxu0 %v1318
    %v2257 = vpop.f32.mrb[0].mxu0
    %v2258 = vadd.f32 %v354, %v2257
    %v2259 = vpop.f32.mrb[0].mxu0
    %v2260 = vpop.f32.mrb[0].mxu0
    %v2261 = vadd.f32 %v354, %v2260
    %v2262 = vpop.f32.mrb[0].mxu0
    %2263 = vmatprep.mubr.bf16.mxu0 0
    %2264 = vmatmul.mubr.bf16.gmra.mrb[0].mxu0 %v1321
    %v2265 = vpop.f32.mrb[0].mxu0
    %v2266 = vadd.f32 %v354, %v2265
    %v2267 = vpop.f32.mrb[0].mxu0
    %v2268 = vpop.f32.mrb[0].mxu0
    %v2269 = vadd.f32 %v354, %v2268
    %v2270 = vpop.f32.mrb[0].mxu0
    %2271 = vmatprep.mubr.bf16.mxu0 0
    %2272 = vmatmul.mubr.bf16.gmra.mrb[0].mxu0 %v1324
    %v2273 = vpop.f32.mrb[0].mxu0
    %v2274 = vadd.f32 %v354, %v2273
    %v2275 = vpop.f32.mrb[0].mxu0
    %v2276 = vpop.f32.mrb[0].mxu0
    %v2277 = vadd.f32 %v354, %v2276
    %v2278 = vpop.f32.mrb[0].mxu0
    %2279 = vmatprep.mubr.bf16.mxu0 0
    %2280 = vmatmul.mubr.bf16.gmra.mrb[0].mxu0 %v1327
    %v2281 = vpop.f32.mrb[0].mxu0
    %v2282 = vadd.f32 %v354, %v2281
    %v2283 = vpop.f32.mrb[0].mxu0
    %v2284 = vpop.f32.mrb[0].mxu0
    %v2285 = vadd.f32 %v354, %v2284
    %v2286 = vpop.f32.mrb[0].mxu0
    %2287 = vmatprep.mubr.bf16.mxu0 0
    %2288 = vmatmul.mubr.bf16.gmra.mrb[0].mxu0 %v1330
    %v2289 = vpop.f32.mrb[0].mxu0
    %v2290 = vadd.f32 %v354, %v2289
    %v2291 = vpop.f32.mrb[0].mxu0
    %v2292 = vpop.f32.mrb[0].mxu0
    %v2293 = vadd.f32 %v354, %v2292
    %v2294 = vpop.f32.mrb[0].mxu0
    %2295 = vmatprep.mubr.bf16.mxu0 0
    %2296 = vmatmul.mubr.bf16.gmra.mrb[0].mxu0 %v1333
    %v2297 = vpop.f32.mrb[0].mxu0
    %v2298 = vadd.f32 %v354, %v2297
    %v2299 = vpop.f32.mrb[0].mxu0
    %v2300 = vpop.f32.mrb[0].mxu0
    %v2301 = vadd.f32 %v354, %v2300
    %v2302 = vpop.f32.mrb[0].mxu0
    %2303 = vmatprep.mubr.bf16.mxu0 0
    %2304 = vmatmul.mubr.bf16.gmra.mrb[0].mxu0 %v1336
    %v2305 = vpop.f32.mrb[0].mxu0
    %v2306 = vadd.f32 %v354, %v2305
    %v2307 = vpop.f32.mrb[0].mxu0
    %v2308 = vpop.f32.mrb[0].mxu0
    %v2309 = vadd.f32 %v354, %v2308
    %v2310 = vpop.f32.mrb[0].mxu0
    %2311 = vmatprep.mubr.bf16.mxu0 0
    %2312 = vmatmul.mubr.bf16.gmra.mrb[0].mxu0 %v1339
    %v2313 = vpop.f32.mrb[0].mxu0
    %v2314 = vadd.f32 %v354, %v2313
    %v2315 = vpop.f32.mrb[0].mxu0
    %v2316 = vpop.f32.mrb[0].mxu0
    %v2317 = vadd.f32 %v354, %v2316
    %v2318 = vpop.f32.mrb[0].mxu0
    %2319 = vmatprep.mubr.bf16.mxu0 0
    %2320 = vmatmul.mubr.bf16.gmra.mrb[0].mxu0 %v1342
    %v2321 = vpop.f32.mrb[0].mxu0
    %v2322 = vadd.f32 %v354, %v2321
    %v2323 = vpop.f32.mrb[0].mxu0
    %v2324 = vpop.f32.mrb[0].mxu0
    %v2325 = vadd.f32 %v354, %v2324
    %v2326 = vpop.f32.mrb[0].mxu0
    %2327 = vmatprep.mubr.bf16.mxu0 0
    %2328 = vmatmul.mubr.bf16.gmra.mrb[0].mxu0 %v1345
    %v2329 = vpop.f32.mrb[0].mxu0
    %v2330 = vadd.f32 %v354, %v2329
    %v2331 = vpop.f32.mrb[0].mxu0
    %v2332 = vpop.f32.mrb[0].mxu0
    %v2333 = vadd.f32 %v354, %v2332
    %v2334 = vpop.f32.mrb[0].mxu0
    %2335 = vmatprep.mubr.bf16.mxu0 0
    %2336 = vmatmul.mubr.bf16.gmra.mrb[0].mxu0 %v1348
    %v2337 = vpop.f32.mrb[0].mxu0
    %v2338 = vadd.f32 %v354, %v2337
    %v2339 = vpop.f32.mrb[0].mxu0
    %v2340 = vpop.f32.mrb[0].mxu0
    %v2341 = vadd.f32 %v354, %v2340
    %v2342 = vpop.f32.mrb[0].mxu0
    %2343 = vmatprep.mubr.bf16.mxu0 0
    %2344 = vmatmul.mubr.bf16.gmra.mrb[0].mxu0 %v1351
    %v2345 = vpop.f32.mrb[0].mxu0
    %v2346 = vadd.f32 %v354, %v2345
    %v2347 = vpop.f32.mrb[0].mxu0
    %v2348 = vpop.f32.mrb[0].mxu0
    %v2349 = vadd.f32 %v354, %v2348
    %v2350 = vpop.f32.mrb[0].mxu0
    %2351 = vmatprep.mubr.bf16.mxu0 0
    %2352 = vmatmul.mubr.bf16.gmra.mrb[0].mxu0 %v1354
    %v2353 = vpop.f32.mrb[0].mxu0
    %v2354 = vadd.f32 %v354, %v2353
    %v2355 = vpop.f32.mrb[0].mxu0
    %v2356 = vpop.f32.mrb[0].mxu0
    %v2357 = vadd.f32 %v354, %v2356
    %v2358 = vpop.f32.mrb[0].mxu0
    %2359 = vmatprep.mubr.bf16.mxu0 0
    %2360 = vmatmul.mubr.bf16.gmra.mrb[0].mxu0 %v1357
    %v2361 = vpop.f32.mrb[0].mxu0
    %v2362 = vadd.f32 %v354, %v2361
    %v2363 = vpop.f32.mrb[0].mxu0
    %v2364 = vpop.f32.mrb[0].mxu0
    %v2365 = vadd.f32 %v354, %v2364
    %v2366 = vpop.f32.mrb[0].mxu0
    %2367 = vmatprep.mubr.bf16.mxu0 0
    %2368 = vmatmul.mubr.bf16.gmra.mrb[0].mxu0 %v1360
    %v2369 = vpop.f32.mrb[0].mxu0
    %v2370 = vadd.f32 %v354, %v2369
    %v2371 = vpop.f32.mrb[0].mxu0
    %v2372 = vpop.f32.mrb[0].mxu0
    %v2373 = vadd.f32 %v354, %v2372
    %v2374 = vpop.f32.mrb[0].mxu0
    %2375 = vmatprep.mubr.bf16.mxu0 0
    %2376 = vmatmul.mubr.bf16.gmra.mrb[0].mxu0 %v1363
    %v2377 = vpop.f32.mrb[0].mxu0
    %v2378 = vadd.f32 %v354, %v2377
    %v2379 = vpop.f32.mrb[0].mxu0
    %v2380 = vpop.f32.mrb[0].mxu0
    %v2381 = vadd.f32 %v354, %v2380
    %v2382 = vpop.f32.mrb[0].mxu0
    %2383 = vmatprep.mubr.bf16.mxu0 0
    %2384 = vmatmul.mubr.bf16.gmra.mrb[0].mxu0 %v1366
    %v2385 = vpop.f32.mrb[0].mxu0
    %v2386 = vadd.f32 %v354, %v2385
    %v2387 = vpop.f32.mrb[0].mxu0
    %v2388 = vpop.f32.mrb[0].mxu0
    %v2389 = vadd.f32 %v354, %v2388
    %v2390 = vpop.f32.mrb[0].mxu0
    %2391 = vmatprep.mubr.bf16.mxu0 0
    %2392 = vmatmul.mubr.bf16.gmra.mrb[0].mxu0 %v1369
    %v2393 = vpop.f32.mrb[0].mxu0
    %v2394 = vadd.f32 %v354, %v2393
    %v2395 = vpop.f32.mrb[0].mxu0
    %v2396 = vpop.f32.mrb[0].mxu0
    %v2397 = vadd.f32 %v354, %v2396
    %v2398 = vpop.f32.mrb[0].mxu0
    %2399 = vmatprep.mubr.bf16.mxu0 0
    %2400 = vmatmul.mubr.bf16.gmra.mrb[0].mxu0 %v1372
    %v2401 = vpop.f32.mrb[0].mxu0
    %v2402 = vadd.f32 %v354, %v2401
    %v2403 = vpop.f32.mrb[0].mxu0
    %v2404 = vpop.f32.mrb[0].mxu0
    %v2405 = vadd.f32 %v354, %v2404
    %v2406 = vpop.f32.mrb[0].mxu0
    %2407 = vmatprep.mubr.bf16.mxu0 0
    %2408 = vmatmul.mubr.bf16.gmra.mrb[0].mxu0 %v1375
    %v2409 = vpop.f32.mrb[0].mxu0
    %v2410 = vadd.f32 %v354, %v2409
    %v2411 = vpop.f32.mrb[0].mxu0
    %v2412 = vpop.f32.mrb[0].mxu0
    %v2413 = vadd.f32 %v354, %v2412
    %v2414 = vpop.f32.mrb[0].mxu0
    %2415 = vmatprep.mubr.bf16.mxu0 0
    %2416 = vmatmul.mubr.bf16.gmra.mrb[0].mxu0 %v1378
    %v2417 = vpop.f32.mrb[0].mxu0
    %v2418 = vadd.f32 %v354, %v2417
    %v2419 = vpop.f32.mrb[0].mxu0
    %v2420 = vpop.f32.mrb[0].mxu0
    %v2421 = vadd.f32 %v354, %v2420
    %v2422 = vpop.f32.mrb[0].mxu0
    %2423 = vmatprep.mubr.bf16.mxu0 0
    %2424 = vmatmul.mubr.bf16.gmra.mrb[0].mxu0 %v1381
    %v2425 = vpop.f32.mrb[0].mxu0
    %v2426 = vadd.f32 %v354, %v2425
    %v2427 = vpop.f32.mrb[0].mxu0
    %v2428 = vpop.f32.mrb[0].mxu0
    %v2429 = vadd.f32 %v354, %v2428
    %v2430 = vpop.f32.mrb[0].mxu0
    %2431 = vmatprep.mubr.bf16.mxu0 0
    %2432 = vmatmul.mubr.bf16.gmra.mrb[0].mxu0 %v1384
    %v2433 = vpop.f32.mrb[0].mxu0
    %v2434 = vadd.f32 %v354, %v2433
    %v2435 = vpop.f32.mrb[0].mxu0
    %v2436 = vpop.f32.mrb[0].mxu0
    %v2437 = vadd.f32 %v354, %v2436
    %v2438 = vpop.f32.mrb[0].mxu0
    %2439 = vmatprep.mubr.bf16.mxu0 0
    %2440 = vmatmul.mubr.bf16.gmra.mrb[0].mxu0 %v1387
    %v2441 = vpop.f32.mrb[0].mxu0
    %v2442 = vadd.f32 %v354, %v2441
    %v2443 = vpop.f32.mrb[0].mxu0
    %v2444 = vpop.f32.mrb[0].mxu0
    %v2445 = vadd.f32 %v354, %v2444
    %v2446 = vpop.f32.mrb[0].mxu0
    %2447 = vmatprep.mubr.bf16.mxu0 0
    %2448 = vmatmul.mubr.bf16.gmra.mrb[0].mxu0 %v1390
    %v2449 = vpop.f32.mrb[0].mxu0
    %v2450 = vadd.f32 %v354, %v2449
    %v2451 = vpop.f32.mrb[0].mxu0
    %v2452 = vpop.f32.mrb[0].mxu0
    %v2453 = vadd.f32 %v354, %v2452
    %v2454 = vpop.f32.mrb[0].mxu0
    %2455 = vdwg.mxu0
    %v2456 = vmax.f32 %v1434, 0.0
    %v2457 = vmax.f32 %v1437, 0.0
    %v2458 = vmax.f32 %v1442, 0.0
    %v2459 = vmax.f32 %v1445, 0.0
    %v2460 = vmax.f32 %v1450, 0.0
    %v2461 = vmax.f32 %v1453, 0.0
    %v2462 = vmax.f32 %v1458, 0.0
    %v2463 = vmax.f32 %v1461, 0.0
    %v2464 = vmax.f32 %v1466, 0.0
    %v2465 = vmax.f32 %v1469, 0.0
    %v2466 = vmax.f32 %v1474, 0.0
    %v2467 = vmax.f32 %v1477, 0.0
    %v2468 = vmax.f32 %v1482, 0.0
    %v2469 = vmax.f32 %v1485, 0.0
    %v2470 = vmax.f32 %v1490, 0.0
    %v2471 = vmax.f32 %v1493, 0.0
    %v2472 = vmax.f32 %v1498, 0.0
    %v2473 = vmax.f32 %v1501, 0.0
    %v2474 = vmax.f32 %v1506, 0.0
    %v2475 = vmax.f32 %v1509, 0.0
    %v2476 = vmax.f32 %v1514, 0.0
    %v2477 = vmax.f32 %v1517, 0.0
    %v2478 = vmax.f32 %v1522, 0.0
    %v2479 = vmax.f32 %v1525, 0.0
    %v2480 = vmax.f32 %v1530, 0.0
    %v2481 = vmax.f32 %v1533, 0.0
    %v2482 = vmax.f32 %v1538, 0.0
    %v2483 = vmax.f32 %v1541, 0.0
    %v2484 = vmax.f32 %v1546, 0.0
    %v2485 = vmax.f32 %v1549, 0.0
    %v2486 = vmax.f32 %v1554, 0.0
    %v2487 = vmax.f32 %v1557, 0.0
    %v2488 = vmax.f32 %v1562, 0.0
    %v2489 = vmax.f32 %v1565, 0.0
    %v2490 = vmax.f32 %v1570, 0.0
    %v2491 = vmax.f32 %v1573, 0.0
    %v2492 = vmax.f32 %v1578, 0.0
    %v2493 = vmax.f32 %v1581, 0.0
    %v2494 = vmax.f32 %v1586, 0.0
    %v2495 = vmax.f32 %v1589, 0.0
    %v2496 = vmax.f32 %v1594, 0.0
    %v2497 = vmax.f32 %v1597, 0.0
    %v2498 = vmax.f32 %v1602, 0.0
    %v2499 = vmax.f32 %v1605, 0.0
    %v2500 = vmax.f32 %v1610, 0.0
    %v2501 = vmax.f32 %v1613, 0.0
    %v2502 = vmax.f32 %v1618, 0.0
    %v2503 = vmax.f32 %v1621, 0.0
    %v2504 = vmax.f32 %v1626, 0.0
    %v2505 = vmax.f32 %v1629, 0.0
    %v2506 = vmax.f32 %v1634, 0.0
    %v2507 = vmax.f32 %v1637, 0.0
    %v2508 = vmax.f32 %v1642, 0.0
    %v2509 = vmax.f32 %v1645, 0.0
    %v2510 = vmax.f32 %v1650, 0.0
    %v2511 = vmax.f32 %v1653, 0.0
    %v2512 = vmax.f32 %v1658, 0.0
    %v2513 = vmax.f32 %v1661, 0.0
    %v2514 = vmax.f32 %v1666, 0.0
    %v2515 = vmax.f32 %v1669, 0.0
    %v2516 = vmax.f32 %v1674, 0.0
    %v2517 = vmax.f32 %v1677, 0.0
    %v2518 = vmax.f32 %v1682, 0.0
    %v2519 = vmax.f32 %v1685, 0.0
    %v2520 = vmax.f32 %v1690, 0.0
    %v2521 = vmax.f32 %v1693, 0.0
    %v2522 = vmax.f32 %v1698, 0.0
    %v2523 = vmax.f32 %v1701, 0.0
    %v2524 = vmax.f32 %v1706, 0.0
    %v2525 = vmax.f32 %v1709, 0.0
    %v2526 = vmax.f32 %v1714, 0.0
    %v2527 = vmax.f32 %v1717, 0.0
    %v2528 = vmax.f32 %v1722, 0.0
    %v2529 = vmax.f32 %v1725, 0.0
    %v2530 = vmax.f32 %v1730, 0.0
    %v2531 = vmax.f32 %v1733, 0.0
    %v2532 = vmax.f32 %v1738, 0.0
    %v2533 = vmax.f32 %v1741, 0.0
    %v2534 = vmax.f32 %v1746, 0.0
    %v2535 = vmax.f32 %v1749, 0.0
    %v2536 = vmax.f32 %v1754, 0.0
    %v2537 = vmax.f32 %v1757, 0.0
    %v2538 = vmax.f32 %v1762, 0.0
    %v2539 = vmax.f32 %v1765, 0.0
    %v2540 = vmax.f32 %v1770, 0.0
    %v2541 = vmax.f32 %v1773, 0.0
    %v2542 = vmax.f32 %v1778, 0.0
    %v2543 = vmax.f32 %v1781, 0.0
    %v2544 = vmax.f32 %v1786, 0.0
    %v2545 = vmax.f32 %v1789, 0.0
    %v2546 = vmax.f32 %v1794, 0.0
    %v2547 = vmax.f32 %v1797, 0.0
    %v2548 = vmax.f32 %v1802, 0.0
    %v2549 = vmax.f32 %v1805, 0.0
    %v2550 = vmax.f32 %v1810, 0.0
    %v2551 = vmax.f32 %v1813, 0.0
    %v2552 = vmax.f32 %v1818, 0.0
    %v2553 = vmax.f32 %v1821, 0.0
    %v2554 = vmax.f32 %v1826, 0.0
    %v2555 = vmax.f32 %v1829, 0.0
    %v2556 = vmax.f32 %v1834, 0.0
    %v2557 = vmax.f32 %v1837, 0.0
    %v2558 = vmax.f32 %v1842, 0.0
    %v2559 = vmax.f32 %v1845, 0.0
    %v2560 = vmax.f32 %v1850, 0.0
    %v2561 = vmax.f32 %v1853, 0.0
    %v2562 = vmax.f32 %v1858, 0.0
    %v2563 = vmax.f32 %v1861, 0.0
    %v2564 = vmax.f32 %v1866, 0.0
    %v2565 = vmax.f32 %v1869, 0.0
    %v2566 = vmax.f32 %v1874, 0.0
    %v2567 = vmax.f32 %v1877, 0.0
    %v2568 = vmax.f32 %v1882, 0.0
    %v2569 = vmax.f32 %v1885, 0.0
    %v2570 = vmax.f32 %v1890, 0.0
    %v2571 = vmax.f32 %v1893, 0.0
    %v2572 = vmax.f32 %v1898, 0.0
    %v2573 = vmax.f32 %v1901, 0.0
    %v2574 = vmax.f32 %v1906, 0.0
    %v2575 = vmax.f32 %v1909, 0.0
    %v2576 = vmax.f32 %v1914, 0.0
    %v2577 = vmax.f32 %v1917, 0.0
    %v2578 = vmax.f32 %v1922, 0.0
    %v2579 = vmax.f32 %v1925, 0.0
    %v2580 = vmax.f32 %v1930, 0.0
    %v2581 = vmax.f32 %v1933, 0.0
    %v2582 = vmax.f32 %v1938, 0.0
    %v2583 = vmax.f32 %v1941, 0.0
    %v2584 = vmax.f32 %v1946, 0.0
    %v2585 = vmax.f32 %v1949, 0.0
    %v2586 = vmax.f32 %v1954, 0.0
    %v2587 = vmax.f32 %v1957, 0.0
    %v2588 = vmax.f32 %v1962, 0.0
    %v2589 = vmax.f32 %v1965, 0.0
    %v2590 = vmax.f32 %v1970, 0.0
    %v2591 = vmax.f32 %v1973, 0.0
    %v2592 = vmax.f32 %v1978, 0.0
    %v2593 = vmax.f32 %v1981, 0.0
    %v2594 = vmax.f32 %v1986, 0.0
    %v2595 = vmax.f32 %v1989, 0.0
    %v2596 = vmax.f32 %v1994, 0.0
    %v2597 = vmax.f32 %v1997, 0.0
    %v2598 = vmax.f32 %v2002, 0.0
    %v2599 = vmax.f32 %v2005, 0.0
    %v2600 = vmax.f32 %v2010, 0.0
    %v2601 = vmax.f32 %v2013, 0.0
    %v2602 = vmax.f32 %v2018, 0.0
    %v2603 = vmax.f32 %v2021, 0.0
    %v2604 = vmax.f32 %v2026, 0.0
    %v2605 = vmax.f32 %v2029, 0.0
    %v2606 = vmax.f32 %v2034, 0.0
    %v2607 = vmax.f32 %v2037, 0.0
    %v2608 = vmax.f32 %v2042, 0.0
    %v2609 = vmax.f32 %v2045, 0.0
    %v2610 = vmax.f32 %v2050, 0.0
    %v2611 = vmax.f32 %v2053, 0.0
    %v2612 = vmax.f32 %v2058, 0.0
    %v2613 = vmax.f32 %v2061, 0.0
    %v2614 = vmax.f32 %v2066, 0.0
    %v2615 = vmax.f32 %v2069, 0.0
    %v2616 = vmax.f32 %v2074, 0.0
    %v2617 = vmax.f32 %v2077, 0.0
    %v2618 = vmax.f32 %v2082, 0.0
    %v2619 = vmax.f32 %v2085, 0.0
    %v2620 = vmax.f32 %v2090, 0.0
    %v2621 = vmax.f32 %v2093, 0.0
    %v2622 = vmax.f32 %v2098, 0.0
    %v2623 = vmax.f32 %v2101, 0.0
    %v2624 = vmax.f32 %v2106, 0.0
    %v2625 = vmax.f32 %v2109, 0.0
    %v2626 = vmax.f32 %v2114, 0.0
    %v2627 = vmax.f32 %v2117, 0.0
    %v2628 = vmax.f32 %v2122, 0.0
    %v2629 = vmax.f32 %v2125, 0.0
    %v2630 = vmax.f32 %v2130, 0.0
    %v2631 = vmax.f32 %v2133, 0.0
    %v2632 = vmax.f32 %v2138, 0.0
    %v2633 = vmax.f32 %v2141, 0.0
    %v2634 = vmax.f32 %v2146, 0.0
    %v2635 = vmax.f32 %v2149, 0.0
    %v2636 = vmax.f32 %v2154, 0.0
    %v2637 = vmax.f32 %v2157, 0.0
    %v2638 = vmax.f32 %v2162, 0.0
    %v2639 = vmax.f32 %v2165, 0.0
    %v2640 = vmax.f32 %v2170, 0.0
    %v2641 = vmax.f32 %v2173, 0.0
    %v2642 = vmax.f32 %v2178, 0.0
    %v2643 = vmax.f32 %v2181, 0.0
    %v2644 = vmax.f32 %v2186, 0.0
    %v2645 = vmax.f32 %v2189, 0.0
    %v2646 = vmax.f32 %v2194, 0.0
    %v2647 = vmax.f32 %v2197, 0.0
    %v2648 = vmax.f32 %v2202, 0.0
    %v2649 = vmax.f32 %v2205, 0.0
    %v2650 = vmax.f32 %v2210, 0.0
    %v2651 = vmax.f32 %v2213, 0.0
    %v2652 = vmax.f32 %v2218, 0.0
    %v2653 = vmax.f32 %v2221, 0.0
    %v2654 = vmax.f32 %v2226, 0.0
    %v2655 = vmax.f32 %v2229, 0.0
    %v2656 = vmax.f32 %v2234, 0.0
    %v2657 = vmax.f32 %v2237, 0.0
    %v2658 = vmax.f32 %v2242, 0.0
    %v2659 = vmax.f32 %v2245, 0.0
    %v2660 = vmax.f32 %v2250, 0.0
    %v2661 = vmax.f32 %v2253, 0.0
    %v2662 = vmax.f32 %v2258, 0.0
    %v2663 = vmax.f32 %v2261, 0.0
    %v2664 = vmax.f32 %v2266, 0.0
    %v2665 = vmax.f32 %v2269, 0.0
    %v2666 = vmax.f32 %v2274, 0.0
    %v2667 = vmax.f32 %v2277, 0.0
    %v2668 = vmax.f32 %v2282, 0.0
    %v2669 = vmax.f32 %v2285, 0.0
    %v2670 = vmax.f32 %v2290, 0.0
    %v2671 = vmax.f32 %v2293, 0.0
    %v2672 = vmax.f32 %v2298, 0.0
    %v2673 = vmax.f32 %v2301, 0.0
    %v2674 = vmax.f32 %v2306, 0.0
    %v2675 = vmax.f32 %v2309, 0.0
    %v2676 = vmax.f32 %v2314, 0.0
    %v2677 = vmax.f32 %v2317, 0.0
    %v2678 = vmax.f32 %v2322, 0.0
    %v2679 = vmax.f32 %v2325, 0.0
    %v2680 = vmax.f32 %v2330, 0.0
    %v2681 = vmax.f32 %v2333, 0.0
    %v2682 = vmax.f32 %v2338, 0.0
    %v2683 = vmax.f32 %v2341, 0.0
    %v2684 = vmax.f32 %v2346, 0.0
    %v2685 = vmax.f32 %v2349, 0.0
    %v2686 = vmax.f32 %v2354, 0.0
    %v2687 = vmax.f32 %v2357, 0.0
    %v2688 = vmax.f32 %v2362, 0.0
    %v2689 = vmax.f32 %v2365, 0.0
    %v2690 = vmax.f32 %v2370, 0.0
    %v2691 = vmax.f32 %v2373, 0.0
    %v2692 = vmax.f32 %v2378, 0.0
    %v2693 = vmax.f32 %v2381, 0.0
    %v2694 = vmax.f32 %v2386, 0.0
    %v2695 = vmax.f32 %v2389, 0.0
    %v2696 = vmax.f32 %v2394, 0.0
    %v2697 = vmax.f32 %v2397, 0.0
    %v2698 = vmax.f32 %v2402, 0.0
    %v2699 = vmax.f32 %v2405, 0.0
    %v2700 = vmax.f32 %v2410, 0.0
    %v2701 = vmax.f32 %v2413, 0.0
    %v2702 = vmax.f32 %v2418, 0.0
    %v2703 = vmax.f32 %v2421, 0.0
    %v2704 = vmax.f32 %v2426, 0.0
    %v2705 = vmax.f32 %v2429, 0.0
    %v2706 = vmax.f32 %v2434, 0.0
    %v2707 = vmax.f32 %v2437, 0.0
    %v2708 = vmax.f32 %v2442, 0.0
    %v2709 = vmax.f32 %v2445, 0.0
    %v2710 = vmax.f32 %v2450, 0.0
    %v2711 = vmax.f32 %v2453, 0.0
    %v2712 = vadd.f32 %v2456, %v2457
    %v2713 = vadd.f32 %v2712, %v2458
    %v2714 = vadd.f32 %v2713, %v2459
    %v2715 = vadd.f32 %v2714, %v2460
    %v2716 = vadd.f32 %v2715, %v2461
    %v2717 = vadd.f32 %v2716, %v2462
    %v2718 = vadd.f32 %v2717, %v2463
    %v2719 = vadd.f32 %v2718, %v2464
    %v2720 = vadd.f32 %v2719, %v2465
    %v2721 = vadd.f32 %v2720, %v2466
    %v2722 = vadd.f32 %v2721, %v2467
    %v2723 = vadd.f32 %v2722, %v2468
    %v2724 = vadd.f32 %v2723, %v2469
    %v2725 = vadd.f32 %v2724, %v2470
    %v2726 = vadd.f32 %v2725, %v2471
    %v2727 = vadd.f32 %v2726, %v2472
    %v2728 = vadd.f32 %v2727, %v2473
    %v2729 = vadd.f32 %v2728, %v2474
    %v2730 = vadd.f32 %v2729, %v2475
    %v2731 = vadd.f32 %v2730, %v2476
    %v2732 = vadd.f32 %v2731, %v2477
    %v2733 = vadd.f32 %v2732, %v2478
    %v2734 = vadd.f32 %v2733, %v2479
    %v2735 = vadd.f32 %v2734, %v2480
    %v2736 = vadd.f32 %v2735, %v2481
    %v2737 = vadd.f32 %v2736, %v2482
    %v2738 = vadd.f32 %v2737, %v2483
    %v2739 = vadd.f32 %v2738, %v2484
    %v2740 = vadd.f32 %v2739, %v2485
    %v2741 = vadd.f32 %v2740, %v2486
    %v2742 = vadd.f32 %v2741, %v2487
    %v2743 = vrot.slane %v2742, 4
    %v2744 = vadd.f32 %v2742, %v2743
    %v2745 = vrot.slane %v2744, 2
    %v2746 = vadd.f32 %v2744, %v2745
    %v2747 = vrot.slane %v2746, 1
    %v2748 = vadd.f32 %v2746, %v2747
    %v2749 = vadd.f32 %v2488, %v2489
    %v2750 = vadd.f32 %v2749, %v2490
    %v2751 = vadd.f32 %v2750, %v2491
    %v2752 = vadd.f32 %v2751, %v2492
    %v2753 = vadd.f32 %v2752, %v2493
    %v2754 = vadd.f32 %v2753, %v2494
    %v2755 = vadd.f32 %v2754, %v2495
    %v2756 = vadd.f32 %v2755, %v2496
    %v2757 = vadd.f32 %v2756, %v2497
    %v2758 = vadd.f32 %v2757, %v2498
    %v2759 = vadd.f32 %v2758, %v2499
    %v2760 = vadd.f32 %v2759, %v2500
    %v2761 = vadd.f32 %v2760, %v2501
    %v2762 = vadd.f32 %v2761, %v2502
    %v2763 = vadd.f32 %v2762, %v2503
    %v2764 = vadd.f32 %v2763, %v2504
    %v2765 = vadd.f32 %v2764, %v2505
    %v2766 = vadd.f32 %v2765, %v2506
    %v2767 = vadd.f32 %v2766, %v2507
    %v2768 = vadd.f32 %v2767, %v2508
    %v2769 = vadd.f32 %v2768, %v2509
    %v2770 = vadd.f32 %v2769, %v2510
    %v2771 = vadd.f32 %v2770, %v2511
    %v2772 = vadd.f32 %v2771, %v2512
    %v2773 = vadd.f32 %v2772, %v2513
    %v2774 = vadd.f32 %v2773, %v2514
    %v2775 = vadd.f32 %v2774, %v2515
    %v2776 = vadd.f32 %v2775, %v2516
    %v2777 = vadd.f32 %v2776, %v2517
    %v2778 = vadd.f32 %v2777, %v2518
    %v2779 = vadd.f32 %v2778, %v2519
    %v2780 = vrot.slane %v2779, 4
    %v2781 = vadd.f32 %v2779, %v2780
    %v2782 = vrot.slane %v2781, 2
    %v2783 = vadd.f32 %v2781, %v2782
    %v2784 = vrot.slane %v2783, 1
    %v2785 = vadd.f32 %v2783, %v2784
    %v2786 = vadd.f32 %v2520, %v2521
    %v2787 = vadd.f32 %v2786, %v2522
    %v2788 = vadd.f32 %v2787, %v2523
    %v2789 = vadd.f32 %v2788, %v2524
    %v2790 = vadd.f32 %v2789, %v2525
    %v2791 = vadd.f32 %v2790, %v2526
    %v2792 = vadd.f32 %v2791, %v2527
    %v2793 = vadd.f32 %v2792, %v2528
    %v2794 = vadd.f32 %v2793, %v2529
    %v2795 = vadd.f32 %v2794, %v2530
    %v2796 = vadd.f32 %v2795, %v2531
    %v2797 = vadd.f32 %v2796, %v2532
    %v2798 = vadd.f32 %v2797, %v2533
    %v2799 = vadd.f32 %v2798, %v2534
    %v2800 = vadd.f32 %v2799, %v2535
    %v2801 = vadd.f32 %v2800, %v2536
    %v2802 = vadd.f32 %v2801, %v2537
    %v2803 = vadd.f32 %v2802, %v2538
    %v2804 = vadd.f32 %v2803, %v2539
    %v2805 = vadd.f32 %v2804, %v2540
    %v2806 = vadd.f32 %v2805, %v2541
    %v2807 = vadd.f32 %v2806, %v2542
    %v2808 = vadd.f32 %v2807, %v2543
    %v2809 = vadd.f32 %v2808, %v2544
    %v2810 = vadd.f32 %v2809, %v2545
    %v2811 = vadd.f32 %v2810, %v2546
    %v2812 = vadd.f32 %v2811, %v2547
    %v2813 = vadd.f32 %v2812, %v2548
    %v2814 = vadd.f32 %v2813, %v2549
    %v2815 = vadd.f32 %v2814, %v2550
    %v2816 = vadd.f32 %v2815, %v2551
    %v2817 = vrot.slane %v2816, 4
    %v2818 = vadd.f32 %v2816, %v2817
    %v2819 = vrot.slane %v2818, 2
    %v2820 = vadd.f32 %v2818, %v2819
    %v2821 = vrot.slane %v2820, 1
    %v2822 = vadd.f32 %v2820, %v2821
    %v2823 = vadd.f32 %v2552, %v2553
    %v2824 = vadd.f32 %v2823, %v2554
    %v2825 = vadd.f32 %v2824, %v2555
    %v2826 = vadd.f32 %v2825, %v2556
    %v2827 = vadd.f32 %v2826, %v2557
    %v2828 = vadd.f32 %v2827, %v2558
    %v2829 = vadd.f32 %v2828, %v2559
    %v2830 = vadd.f32 %v2829, %v2560
    %v2831 = vadd.f32 %v2830, %v2561
    %v2832 = vadd.f32 %v2831, %v2562
    %v2833 = vadd.f32 %v2832, %v2563
    %v2834 = vadd.f32 %v2833, %v2564
    %v2835 = vadd.f32 %v2834, %v2565
    %v2836 = vadd.f32 %v2835, %v2566
    %v2837 = vadd.f32 %v2836, %v2567
    %v2838 = vadd.f32 %v2837, %v2568
    %v2839 = vadd.f32 %v2838, %v2569
    %v2840 = vadd.f32 %v2839, %v2570
    %v2841 = vadd.f32 %v2840, %v2571
    %v2842 = vadd.f32 %v2841, %v2572
    %v2843 = vadd.f32 %v2842, %v2573
    %v2844 = vadd.f32 %v2843, %v2574
    %v2845 = vadd.f32 %v2844, %v2575
    %v2846 = vadd.f32 %v2845, %v2576
    %v2847 = vadd.f32 %v2846, %v2577
    %v2848 = vadd.f32 %v2847, %v2578
    %v2849 = vadd.f32 %v2848, %v2579
    %v2850 = vadd.f32 %v2849, %v2580
    %v2851 = vadd.f32 %v2850, %v2581
    %v2852 = vadd.f32 %v2851, %v2582
    %v2853 = vadd.f32 %v2852, %v2583
    %v2854 = vrot.slane %v2853, 4
    %v2855 = vadd.f32 %v2853, %v2854
    %v2856 = vrot.slane %v2855, 2
    %v2857 = vadd.f32 %v2855, %v2856
    %v2858 = vrot.slane %v2857, 1
    %v2859 = vadd.f32 %v2857, %v2858
    %v2860 = vadd.f32 %v2584, %v2585
    %v2861 = vadd.f32 %v2860, %v2586
    %v2862 = vadd.f32 %v2861, %v2587
    %v2863 = vadd.f32 %v2862, %v2588
    %v2864 = vadd.f32 %v2863, %v2589
    %v2865 = vadd.f32 %v2864, %v2590
    %v2866 = vadd.f32 %v2865, %v2591
    %v2867 = vadd.f32 %v2866, %v2592
    %v2868 = vadd.f32 %v2867, %v2593
    %v2869 = vadd.f32 %v2868, %v2594
    %v2870 = vadd.f32 %v2869, %v2595
    %v2871 = vadd.f32 %v2870, %v2596
    %v2872 = vadd.f32 %v2871, %v2597
    %v2873 = vadd.f32 %v2872, %v2598
    %v2874 = vadd.f32 %v2873, %v2599
    %v2875 = vadd.f32 %v2874, %v2600
    %v2876 = vadd.f32 %v2875, %v2601
    %v2877 = vadd.f32 %v2876, %v2602
    %v2878 = vadd.f32 %v2877, %v2603
    %v2879 = vadd.f32 %v2878, %v2604
    %v2880 = vadd.f32 %v2879, %v2605
    %v2881 = vadd.f32 %v2880, %v2606
    %v2882 = vadd.f32 %v2881, %v2607
    %v2883 = vadd.f32 %v2882, %v2608
    %v2884 = vadd.f32 %v2883, %v2609
    %v2885 = vadd.f32 %v2884, %v2610
    %v2886 = vadd.f32 %v2885, %v2611
    %v2887 = vadd.f32 %v2886, %v2612
    %v2888 = vadd.f32 %v2887, %v2613
    %v2889 = vadd.f32 %v2888, %v2614
    %v2890 = vadd.f32 %v2889, %v2615
    %v2891 = vrot.slane %v2890, 4
    %v2892 = vadd.f32 %v2890, %v2891
    %v2893 = vrot.slane %v2892, 2
    %v2894 = vadd.f32 %v2892, %v2893
    %v2895 = vrot.slane %v2894, 1
    %v2896 = vadd.f32 %v2894, %v2895
    %v2897 = vadd.f32 %v2616, %v2617
    %v2898 = vadd.f32 %v2897, %v2618
    %v2899 = vadd.f32 %v2898, %v2619
    %v2900 = vadd.f32 %v2899, %v2620
    %v2901 = vadd.f32 %v2900, %v2621
    %v2902 = vadd.f32 %v2901, %v2622
    %v2903 = vadd.f32 %v2902, %v2623
    %v2904 = vadd.f32 %v2903, %v2624
    %v2905 = vadd.f32 %v2904, %v2625
    %v2906 = vadd.f32 %v2905, %v2626
    %v2907 = vadd.f32 %v2906, %v2627
    %v2908 = vadd.f32 %v2907, %v2628
    %v2909 = vadd.f32 %v2908, %v2629
    %v2910 = vadd.f32 %v2909, %v2630
    %v2911 = vadd.f32 %v2910, %v2631
    %v2912 = vadd.f32 %v2911, %v2632
    %v2913 = vadd.f32 %v2912, %v2633
    %v2914 = vadd.f32 %v2913, %v2634
    %v2915 = vadd.f32 %v2914, %v2635
    %v2916 = vadd.f32 %v2915, %v2636
    %v2917 = vadd.f32 %v2916, %v2637
    %v2918 = vadd.f32 %v2917, %v2638
    %v2919 = vadd.f32 %v2918, %v2639
    %v2920 = vadd.f32 %v2919, %v2640
    %v2921 = vadd.f32 %v2920, %v2641
    %v2922 = vadd.f32 %v2921, %v2642
    %v2923 = vadd.f32 %v2922, %v2643
    %v2924 = vadd.f32 %v2923, %v2644
    %v2925 = vadd.f32 %v2924, %v2645
    %v2926 = vadd.f32 %v2925, %v2646
    %v2927 = vadd.f32 %v2926, %v2647
    %v2928 = vrot.slane %v2927, 4
    %v2929 = vadd.f32 %v2927, %v2928
    %v2930 = vrot.slane %v2929, 2
    %v2931 = vadd.f32 %v2929, %v2930
    %v2932 = vrot.slane %v2931, 1
    %v2933 = vadd.f32 %v2931, %v2932
    %v2934 = vadd.f32 %v2648, %v2649
    %v2935 = vadd.f32 %v2934, %v2650
    %v2936 = vadd.f32 %v2935, %v2651
    %v2937 = vadd.f32 %v2936, %v2652
    %v2938 = vadd.f32 %v2937, %v2653
    %v2939 = vadd.f32 %v2938, %v2654
    %v2940 = vadd.f32 %v2939, %v2655
    %v2941 = vadd.f32 %v2940, %v2656
    %v2942 = vadd.f32 %v2941, %v2657
    %v2943 = vadd.f32 %v2942, %v2658
    %v2944 = vadd.f32 %v2943, %v2659
    %v2945 = vadd.f32 %v2944, %v2660
    %v2946 = vadd.f32 %v2945, %v2661
    %v2947 = vadd.f32 %v2946, %v2662
    %v2948 = vadd.f32 %v2947, %v2663
    %v2949 = vadd.f32 %v2948, %v2664
    %v2950 = vadd.f32 %v2949, %v2665
    %v2951 = vadd.f32 %v2950, %v2666
    %v2952 = vadd.f32 %v2951, %v2667
    %v2953 = vadd.f32 %v2952, %v2668
    %v2954 = vadd.f32 %v2953, %v2669
    %v2955 = vadd.f32 %v2954, %v2670
    %v2956 = vadd.f32 %v2955, %v2671
    %v2957 = vadd.f32 %v2956, %v2672
    %v2958 = vadd.f32 %v2957, %v2673
    %v2959 = vadd.f32 %v2958, %v2674
    %v2960 = vadd.f32 %v2959, %v2675
    %v2961 = vadd.f32 %v2960, %v2676
    %v2962 = vadd.f32 %v2961, %v2677
    %v2963 = vadd.f32 %v2962, %v2678
    %v2964 = vadd.f32 %v2963, %v2679
    %v2965 = vrot.slane %v2964, 4
    %v2966 = vadd.f32 %v2964, %v2965
    %v2967 = vrot.slane %v2966, 2
    %v2968 = vadd.f32 %v2966, %v2967
    %v2969 = vrot.slane %v2968, 1
    %v2970 = vadd.f32 %v2968, %v2969
    %v2971 = vadd.f32 %v2680, %v2681
    %v2972 = vadd.f32 %v2971, %v2682
    %v2973 = vadd.f32 %v2972, %v2683
    %v2974 = vadd.f32 %v2973, %v2684
    %v2975 = vadd.f32 %v2974, %v2685
    %v2976 = vadd.f32 %v2975, %v2686
    %v2977 = vadd.f32 %v2976, %v2687
    %v2978 = vadd.f32 %v2977, %v2688
    %v2979 = vadd.f32 %v2978, %v2689
    %v2980 = vadd.f32 %v2979, %v2690
    %v2981 = vadd.f32 %v2980, %v2691
    %v2982 = vadd.f32 %v2981, %v2692
    %v2983 = vadd.f32 %v2982, %v2693
    %v2984 = vadd.f32 %v2983, %v2694
    %v2985 = vadd.f32 %v2984, %v2695
    %v2986 = vadd.f32 %v2985, %v2696
    %v2987 = vadd.f32 %v2986, %v2697
    %v2988 = vadd.f32 %v2987, %v2698
    %v2989 = vadd.f32 %v2988, %v2699
    %v2990 = vadd.f32 %v2989, %v2700
    %v2991 = vadd.f32 %v2990, %v2701
    %v2992 = vadd.f32 %v2991, %v2702
    %v2993 = vadd.f32 %v2992, %v2703
    %v2994 = vadd.f32 %v2993, %v2704
    %v2995 = vadd.f32 %v2994, %v2705
    %v2996 = vadd.f32 %v2995, %v2706
    %v2997 = vadd.f32 %v2996, %v2707
    %v2998 = vadd.f32 %v2997, %v2708
    %v2999 = vadd.f32 %v2998, %v2709
    %v3000 = vadd.f32 %v2999, %v2710
    %v3001 = vadd.f32 %v3000, %v2711
    %v3002 = vrot.slane %v3001, 4
    %v3003 = vadd.f32 %v3001, %v3002
    %v3004 = vrot.slane %v3003, 2
    %v3005 = vadd.f32 %v3003, %v3004
    %v3006 = vrot.slane %v3005, 1
    %v3007 = vadd.f32 %v3005, %v3006
    %v3008 = vmul.f32 %v2748, 0.00390625
    %v3009 = vmul.f32 %v2785, 0.00390625
    %v3010 = vmul.f32 %v2822, 0.00390625
    %v3011 = vmul.f32 %v2859, 0.00390625
    %v3012 = vmul.f32 %v2896, 0.00390625
    %v3013 = vmul.f32 %v2933, 0.00390625
    %v3014 = vmul.f32 %v2970, 0.00390625
    %v3015 = vmul.f32 %v3007, 0.00390625
    %v3016 = vpack.c.bf16 %v3008, %v3008
    %v3017 = vpack.c.bf16 %v3009, %v3009
    %v3018 = vpack.c.bf16 %v3010, %v3010
    %v3019 = vpack.c.bf16 %v3011, %v3011
    %v3020 = vpack.c.bf16 %v3012, %v3012
    %v3021 = vpack.c.bf16 %v3013, %v3013
    %v3022 = vpack.c.bf16 %v3014, %v3014
    %v3023 = vpack.c.bf16 %v3015, %v3015
    %v3024 = vld [vmem:[#allocation8] sm:$0xf]
    %v3025 = vld [vmem:[#allocation8 + $0x4] sm:$0xf]
    %v3026 = vld [vmem:[#allocation8 + $0x8] sm:$0xf]
    %v3027 = vld [vmem:[#allocation8 + $0xc] sm:$0xf]
    %v3028 = vld [vmem:[#allocation8 + $0x10] sm:$0xf]
    %v3029 = vld [vmem:[#allocation8 + $0x14] sm:$0xf]
    %v3030 = vld [vmem:[#allocation8 + $0x18] sm:$0xf]
    %v3031 = vld [vmem:[#allocation8 + $0x1c] sm:$0xf]
    %v3032 = vld [vmem:[#allocation8 + $0x20] sm:$0xf]
    %v3033 = vld [vmem:[#allocation8 + $0x24] sm:$0xf]
    %v3034 = vld [vmem:[#allocation8 + $0x28] sm:$0xf]
    %v3035 = vld [vmem:[#allocation8 + $0x2c] sm:$0xf]
    %v3036 = vld [vmem:[#allocation8 + $0x30] sm:$0xf]
    %v3037 = vld [vmem:[#allocation8 + $0x34] sm:$0xf]
    %v3038 = vld [vmem:[#allocation8 + $0x38] sm:$0xf]
    %v3039 = vld [vmem:[#allocation8 + $0x3c] sm:$0xf]
    %v3040 = vld [vmem:[#allocation10] sm:$0x1]
    %v3042 = vlaneseq
    %v3043 = vshrl.u32 %v3042, 7
    %v3044 = vsub.s32 0, %v3043
    %v3045 = vrot.slane %v3040, %v3044
    %v3055 = vunpack.c.l.b16 %v3016
    %v3056 = vunpack.c.l.b16 %v3017
    %v3057 = vunpack.c.l.b16 %v3018
    %v3058 = vunpack.c.l.b16 %v3019
    %v3059 = vunpack.c.l.b16 %v3020
    %v3060 = vunpack.c.l.b16 %v3021
    %v3061 = vunpack.c.l.b16 %v3022
    %v3062 = vunpack.c.l.b16 %v3023
    %vm3063 = vcmask 1041409
    %v3064 = vsel %vm3063, %v3056, %v3055
    %vm3065 = vcmask 1042434
    %v3066 = vsel %vm3065, %v3057, %v3064
    %vm3067 = vcmask 1043459
    %v3068 = vsel %vm3067, %v3058, %v3066
    %vm3069 = vcmask 1044484
    %v3070 = vsel %vm3069, %v3059, %v3068
    %vm3071 = vcmask 1045509
    %v3072 = vsel %vm3071, %v3060, %v3070
    %vm3073 = vcmask 1046534
    %v3074 = vsel %vm3073, %v3061, %v3072
    %vm3075 = vcmask 1047559
    %v3076 = vsel %vm3075, %v3062, %v3074
    %v3077 = vpack.c.b16 %v3076, %v3076
    %v3095 = vunpack.c.l.b16 %v3024
    %v3096 = vunpack.c.l.b16 %v3025
    %v3097 = vunpack.c.l.b16 %v3026
    %v3098 = vunpack.c.l.b16 %v3027
    %v3099 = vunpack.c.l.b16 %v3028
    %v3100 = vunpack.c.l.b16 %v3029
    %v3101 = vunpack.c.l.b16 %v3030
    %v3102 = vunpack.c.l.b16 %v3031
    %v3103 = vunpack.c.l.b16 %v3032
    %v3104 = vunpack.c.l.b16 %v3033
    %v3105 = vunpack.c.l.b16 %v3034
    %v3106 = vunpack.c.l.b16 %v3035
    %v3107 = vunpack.c.l.b16 %v3036
    %v3108 = vunpack.c.l.b16 %v3037
    %v3109 = vunpack.c.l.b16 %v3038
    %v3110 = vunpack.c.l.b16 %v3039
    %v3111 = vpack.c.b16 %v3096, %v3095
    %v3112 = vpack.c.b16 %v3098, %v3097
    %v3113 = vpack.c.b16 %v3100, %v3099
    %v3114 = vpack.c.b16 %v3102, %v3101
    %v3115 = vpack.c.b16 %v3104, %v3103
    %v3116 = vpack.c.b16 %v3106, %v3105
    %v3117 = vpack.c.b16 %v3108, %v3107
    %v3118 = vpack.c.b16 %v3110, %v3109
    %3127 = vmatprep.subr.bf16.mxu0 0
    %3128 = vmatpush1.bf16.msra.mxu0 %v3111
    %3129 = vmatprep.subr.bf16.mxu0 0
    %3130 = vmatpush1.bf16.msra.mxu0 %v3112
    %3131 = vmatprep.subr.bf16.mxu0 0
    %3132 = vmatpush1.bf16.msra.mxu0 %v3113
    %3133 = vmatprep.subr.bf16.mxu0 0
    %3134 = vmatpush1.bf16.msra.mxu0 %v3114
    %3135 = vmatprep.subr.bf16.mxu0 0
    %3136 = vmatpush1.bf16.msra.mxu0 %v3115
    %3137 = vmatprep.subr.bf16.mxu0 0
    %3138 = vmatpush1.bf16.msra.mxu0 %v3116
    %3139 = vmatprep.subr.bf16.mxu0 0
    %3140 = vmatpush1.bf16.msra.mxu0 %v3117
    %3141 = vmatprep.subr.bf16.mxu0 0
    %3142 = vmatpush1.bf16.msra.mxu0 %v3118
    %3143 = vmatprep.subr.bf16.mxu0 0
    %3144 = vmatpush1.bf16.msra.mxu0 0
    %3145 = vmatprep.subr.bf16.mxu0 0
    %3146 = vmatpush1.bf16.msra.mxu0 0
    %3147 = vmatprep.subr.bf16.mxu0 0
    %3148 = vmatpush1.bf16.msra.mxu0 0
    %3149 = vmatprep.subr.bf16.mxu0 0
    %3150 = vmatpush1.bf16.msra.mxu0 0
    %3151 = vmatprep.subr.bf16.mxu0 0
    %3152 = vmatpush1.bf16.msra.mxu0 0
    %3153 = vmatprep.subr.bf16.mxu0 0
    %3154 = vmatpush1.bf16.msra.mxu0 0
    %3155 = vmatprep.subr.bf16.mxu0 0
    %3156 = vmatpush1.bf16.msra.mxu0 0
    %3157 = vmatprep.subr.bf16.mxu0 0
    %3158 = vmatpush1.bf16.msra.mxu0 0
    %3159 = vmatprep.mubr.bf16.mxu0 0
    %3160 = vmatmul.mubr.bf16.gmra.mrb[0].mxu0 %v3077
    %v3161 = vpop.f32.mrb[0].mxu0
    %v3162 = vadd.f32 %v3045, %v3161
    %v3163 = vpop.f32.mrb[0].mxu0
    %v3164 = vpop.f32.mrb[0].mxu0
    %v3165 = vpop.f32.mrb[0].mxu0
    %3166 = vdwg.mxu0
    %3167 = vst [vmem:[#allocation11] sm:$0xff] %v3162
    %v3176 = vsel %vm3063, %v3009, %v3008
    %v3177 = vsel %vm3065, %v3010, %v3176
    %v3178 = vsel %vm3067, %v3011, %v3177
    %v3179 = vsel %vm3069, %v3012, %v3178
    %v3180 = vsel %vm3071, %v3013, %v3179
    %v3181 = vsel %vm3073, %v3014, %v3180
    %v3182 = vsel %vm3075, %v3015, %v3181
    %3184 = vst [vmem:[#allocation12] sm:$0xff] %v3182
    // Predicated region
    $region42: #{convnet_forward.4} parent=1 // pred_check
      _
    $region43: #{convnet_forward.4} parent=1 // pred_check_branch
      %3186 = sbr.rel (0) target = $region45
    $region44: #{convnet_forward.4} parent=1 // pred_region
      %s3188 = ssub.s32 128, 128
      %3189 = vsyncadd [#allocation4], %s3188
      %s3191 = sshll.u32 [#allocation11], 4
      %s3192 = int_to_ptr.vmem [resolvable:$true] %s3191
      %3194 = dma.vmem_to_hbm [thread:$0]  %s3192, 128, %s5, [#allocation4]
    $region45: #{convnet_forward.4} parent=1 // pred_fallthru
      _
    // Predicated region
    $region46: #{convnet_forward.4} parent=1 // pred_check
      _
    $region47: #{convnet_forward.4} parent=1 // pred_check_branch
      %3196 = sbr.rel (0) target = $region49
    $region48: #{convnet_forward.4} parent=1 // pred_region
      %s3198 = ssub.s32 128, 128
      %3199 = vsyncadd [#allocation13], %s3198
      %s3201 = sshll.u32 [#allocation12], 4
      %s3202 = int_to_ptr.vmem [resolvable:$true] %s3201
      %3204 = dma.vmem_to_hbm [thread:$0]  %s3202, 128, %s6, [#allocation13]
    $region49: #{convnet_forward.4} parent=1 // pred_fallthru
      _
    // Predicated region
    $region50: #{convnet_forward.4} parent=1 // pred_check
      _
    $region51: #{convnet_forward.4} parent=1 // pred_check_branch
      %3206 = sbr.rel (0) target = $region53
    $region52: #{convnet_forward.4} parent=1 // pred_region
      %3207 = dma.done [#allocation4], 128
    $region53: #{convnet_forward.4} parent=1 // pred_fallthru
      _
    // Predicated region
    $region54: #{convnet_forward.4} parent=1 // pred_check
      _
    $region55: #{convnet_forward.4} parent=1 // pred_check_branch
      %3209 = sbr.rel (0) target = $region57
    $region56: #{convnet_forward.4} parent=1 // pred_region
      %3210 = dma.done [#allocation13], 128
    $region57: #{convnet_forward.4} parent=1 // pred_fallthru
      _
    %3211 = vsyncpa [#allocation3], 1
    %3212 = vsyncpa [#allocation6], 1
    %3213 = vsyncpa [#allocation9], 1
    %3214 = vsyncpa [#allocation4], 1
    %3215 = vsyncpa [#allocation13], 1

</llo_original>
